<compile_context>
chip_gen: v7x
topology: tpu7x:2x2x1
jax: 0.10.0
libtpu: 0.0.40
codegen_flags: <defaults>
</compile_context>

<pallas_src>
import math
from functools import partial

import jax
import jax.numpy as jnp
from jax.experimental import pallas as pl
from jax.experimental.pallas import tpu as pltpu

LANES = 128
_VMEM_LIMIT = 48 * 1024 * 1024   # safe on v7x (64 MiB physical); can be raised on v5e/v6e


def _compiler_params(semantics):
    return pltpu.CompilerParams(dimension_semantics=semantics,
                                vmem_limit_bytes=_VMEM_LIMIT)


# ---------------------------------------------------------------------------
# small helpers
# ---------------------------------------------------------------------------
def _round_up(x, m):
    return ((x + m - 1) // m) * m


def _pick_tile(n, tile_m):
    # Never emit tiny-M matmul tiles: pad up to >=128 rows; cap at tile_m.
    return int(min(tile_m, max(128, _round_up(max(n, 1), 128))))


def _pad_rows(x, n_rows):
    pad = n_rows - x.shape[0]
    return x if pad == 0 else jnp.pad(x, ((0, pad), (0, 0)))


def _layernorm(h, g, b, eps, inv_n):
    # single lane-reduce + scalar-constant scale (no jnp.mean divisions)
    mu = jnp.sum(h, axis=-1, keepdims=True) * inv_n
    c = h - mu
    var = jnp.sum(c * c, axis=-1, keepdims=True) * inv_n
    return c * jax.lax.rsqrt(var + eps) * g + b


def positional_encoding(seq_len, d_model):
    position = jnp.arange(seq_len, dtype=jnp.float32)[:, None]
    div_term = jnp.exp(jnp.arange(0, d_model, 2, dtype=jnp.float32)
                       * (-math.log(10000.0) / d_model))
    pe = jnp.zeros((seq_len, d_model), jnp.float32)
    pe = pe.at[:, 0::2].set(jnp.sin(position * div_term))
    pe = pe.at[:, 1::2].set(jnp.cos(position * div_term))
    return pe


# ---------------------------------------------------------------------------
# Kernel 1: fused prep = video+PE | audio_linear+PE, written directly into the
# padded concatenated (video-tiles || audio-tiles) bf16 buffer.
# ---------------------------------------------------------------------------
def _prep_kernel(v_ref, a_ref, w_ref, b_ref, pe_ref, o_ref, *, n_v_tiles):
    i = pl.program_id(0)
    pe = pe_ref[...].astype(jnp.float32)

    @pl.when(i < n_v_tiles)                      # video tiles: x + PE
    def _():
        o_ref[...] = (v_ref[...] + pe).astype(o_ref.dtype)

    @pl.when(i >= n_v_tiles)                     # audio tiles: x @ W + b + PE
    def _():
        y = jnp.dot(a_ref[...].astype(jnp.bfloat16), w_ref[...],
                    preferred_element_type=jnp.float32)
        o_ref[...] = (y + b_ref[...] + pe).astype(o_ref.dtype)


def fused_prep(video, audio, w, b, tile_m):
    s_v, emb = video.shape
    s_a, a_dim = audio.shape
    n_v_pad, n_a_pad = _round_up(s_v, tile_m), _round_up(s_a, tile_m)
    n_v_tiles, n_a_tiles = n_v_pad // tile_m, n_a_pad // tile_m
    # PE depends only on the local (per-stream) position -> one shared bf16 table.
    pe_table = positional_encoding(max(n_v_pad, n_a_pad), emb).astype(jnp.bfloat16)

    out = pl.pallas_call(
        partial(_prep_kernel, n_v_tiles=n_v_tiles),
        out_shape=jax.ShapeDtypeStruct((n_v_pad + n_a_pad, emb), jnp.bfloat16),
        grid=(n_v_tiles + n_a_tiles,),
        in_specs=[
            # clamped maps: the unused stream keeps a constant block index, so it
            # is fetched once and never re-fetched.
            pl.BlockSpec((tile_m, emb),
                         lambda i: (jnp.minimum(i, n_v_tiles - 1), 0)),
            pl.BlockSpec((tile_m, a_dim),
                         lambda i: (jnp.maximum(i - n_v_tiles, 0), 0)),
            pl.BlockSpec((a_dim, emb), lambda i: (0, 0)),      # audio_linear W (resident)
            pl.BlockSpec((1, emb), lambda i: (0, 0)),          # audio_linear b
            pl.BlockSpec((tile_m, emb),                        # PE rows, local position
                         lambda i: (jnp.where(i < n_v_tiles, i, i - n_v_tiles), 0)),
        ],
        out_specs=pl.BlockSpec((tile_m, emb), lambda i: (i, 0)),
        compiler_params=_compiler_params(("parallel",)),
    )(_pad_rows(video, n_v_pad), _pad_rows(audio, n_a_pad), w, b, pe_table)
    return out, n_v_pad, n_a_pad


# ---------------------------------------------------------------------------
# Kernel 2: full transformer encoder stack in ONE pallas_call.
# grid = (token_tiles, n_layers); layer innermost; activations carried in a
# VMEM f32 scratch; layer l+1's weights prefetched while layer l computes.
# ---------------------------------------------------------------------------
def _encoder_kernel(h_ref, wat_ref, bat_ref, g1_ref, be1_ref,
                    w1_ref, b1_ref, w2_ref, b2_ref, g2_ref, be2_ref,
                    o_ref, acc_ref, *, eps, inv_e):
    l = pl.program_id(1)

    @pl.when(l == 0)
    def _():
        acc_ref[...] = h_ref[...].astype(jnp.float32)

    h = acc_ref[...]                                                    # (TM, E) f32
    # folded attention: (x @ Wv + bv) @ Wo + bo == x @ (Wv@Wo) + (bv@Wo + bo)
    attn = jnp.dot(h.astype(jnp.bfloat16), wat_ref[...],
                   preferred_element_type=jnp.float32) + bat_ref[...]
    h1 = _layernorm(h + attn, g1_ref[...], be1_ref[...], eps, inv_e)
    ff = jnp.dot(h1.astype(jnp.bfloat16), w1_ref[...],
                 preferred_element_type=jnp.float32) + b1_ref[...]
    ff = jnp.maximum(ff, 0.0)                                           # (TM, FF) in VMEM
    ff = jnp.dot(ff.astype(jnp.bfloat16), w2_ref[...],
                 preferred_element_type=jnp.float32) + b2_ref[...]
    out = _layernorm(h1 + ff, g2_ref[...], be2_ref[...], eps, inv_e)
    acc_ref[...] = out

    @pl.when(l == pl.num_programs(1) - 1)
    def _():
        o_ref[...] = out.astype(o_ref.dtype)


def _encoder_call(h, enc, tile_m):
    n_pad, e = h.shape
    n_layers, _, ff = enc["w1"].shape
    lsel = lambda i, l: (l, 0, 0)                # pick layer l's weight slab
    return pl.pallas_call(
        partial(_encoder_kernel, eps=1e-5, inv_e=1.0 / e),
        out_shape=jax.ShapeDtypeStruct((n_pad, e), jnp.bfloat16),
        grid=(n_pad // tile_m, n_layers),
        in_specs=[
            pl.BlockSpec((tile_m, e), lambda i, l: (i, 0)),   # h tile (const over l)
            pl.BlockSpec((None, e, e), lsel),                 # W_attn[l] (folded)
            pl.BlockSpec((None, 1, e), lsel),                 # b_attn[l]
            pl.BlockSpec((None, 1, e), lsel),                 # ln1 gamma
            pl.BlockSpec((None, 1, e), lsel),                 # ln1 beta
            pl.BlockSpec((None, e, ff), lsel),                # W1[l]
            pl.BlockSpec((None, 1, ff), lsel),                # b1[l]
            pl.BlockSpec((None, ff, e), lsel),                # W2[l]
            pl.BlockSpec((None, 1, e), lsel),                 # b2[l]
            pl.BlockSpec((None, 1, e), lsel),                 # ln2 gamma
            pl.BlockSpec((None, 1, e), lsel),                 # ln2 beta
        ],
        out_specs=pl.BlockSpec((tile_m, e), lambda i, l: (i, 0)),
        scratch_shapes=[pltpu.VMEM((tile_m, e), jnp.float32)],   # layer-resident h
        compiler_params=_compiler_params(("parallel", "arbitrary")),
    )(h, enc["w_attn"], enc["b_attn"], enc["ln1_g"], enc["ln1_b"],
      enc["w1"], enc["b1"], enc["w2"], enc["b2"], enc["ln2_g"], enc["ln2_b"])


def transformer_encoder(h, enc, tile_m):
    n_tiles = h.shape[0] // tile_m
    n_layers = enc["w_attn"].shape[0]
    w_bytes = 2 * (math.prod(enc["w_attn"].shape[1:])
                   + math.prod(enc["w1"].shape[1:])
                   + math.prod(enc["w2"].shape[1:]))           # bf16 weights / layer
    act_bytes = 2 * h.shape[0] * h.shape[1] * 2                # bf16 read+write / layer hop
    # Layer-innermost fusion re-fetches weights per token tile but keeps h in
    # VMEM and hides the weight DMA behind compute; per-layer calls fetch
    # weights once per layer but round-trip h through HBM and pay an exposed
    # weight-DMA prologue + launch per layer.  Pick whichever moves fewer bytes.
    if n_tiles <= 2 or (n_tiles - 1) * w_bytes <= act_bytes:
        return _encoder_call(h, enc, tile_m)
    for l in range(n_layers):
        h = _encoder_call(h, {k: v[l:l + 1] for k, v in enc.items()}, tile_m)
    return h


# ---------------------------------------------------------------------------
# Kernel 3: fused video/audio MLP heads + shared linear_2v + sigmoid average
# ---------------------------------------------------------------------------
def _head_kernel(v_ref, a_ref, w1v_ref, b1v_ref, gv_ref, bv_ref,
                 w1a_ref, b1a_ref, ga_ref, ba_ref, w2_ref, b2_ref,
                 o_ref, *, eps, inv_e):
    w2_row = w2_ref[...]                                      # (1, E) f32, shared

    def branch(x, w1, b1, g, b):
        y = jnp.dot(x.astype(jnp.bfloat16), w1,
                    preferred_element_type=jnp.float32) + b1
        y = jnp.maximum(y, 0.0)                               # dropout p=0.5: identity (eval)
        y = _layernorm(y, g, b, eps, inv_e)
        # (E -> 1) projection as VPU multiply + lane reduce (no lane-1 MXU tile)
        return jnp.sum(y * w2_row, axis=-1, keepdims=True)    # (TM, 1)

    sv = branch(v_ref[...], w1v_ref[...], b1v_ref[...], gv_ref[...], bv_ref[...])
    sa = branch(a_ref[...], w1a_ref[...], b1a_ref[...], ga_ref[...], ba_ref[...])
    # sigmoid((sv+b) + (sa+b))/2) == sigmoid((sv+sa)/2 + b);  b2_ref is a
    # (1, LANES) lane-broadcast of the shared bias so the output slab is
    # lane-dense (unmasked stores); wrapper reads column 0.
    o_ref[...] = jax.nn.sigmoid((sv + sa) * 0.5 + b2_ref[...]).astype(o_ref.dtype)


def heads(v_half, a_half, params, tile_m):
    n, e = v_half.shape
    n_pad = _round_up(n, tile_m)
    out = pl.pallas_call(
        partial(_head_kernel, eps=1e-6, inv_e=1.0 / e),
        out_shape=jax.ShapeDtypeStruct((n_pad, LANES), jnp.float32),
        grid=(n_pad // tile_m,),
        in_specs=[
            pl.BlockSpec((tile_m, e), lambda i: (i, 0)),      # v_half tile
            pl.BlockSpec((tile_m, e), lambda i: (i, 0)),      # a_half tile
            pl.BlockSpec((e, e), lambda i: (0, 0)),           # W1v (resident)
            pl.BlockSpec((1, e), lambda i: (0, 0)),           # b1v
            pl.BlockSpec((1, e), lambda i: (0, 0)),           # lnv gamma
            pl.BlockSpec((1, e), lambda i: (0, 0)),           # lnv beta
            pl.BlockSpec((e, e), lambda i: (0, 0)),           # W1a (resident)
            pl.BlockSpec((1, e), lambda i: (0, 0)),           # b1a
            pl.BlockSpec((1, e), lambda i: (0, 0)),           # lna gamma
            pl.BlockSpec((1, e), lambda i: (0, 0)),           # lna beta
            pl.BlockSpec((1, e), lambda i: (0, 0)),           # w2v row (shared)
            pl.BlockSpec((1, LANES), lambda i: (0, 0)),       # b2v (lane broadcast)
        ],
        out_specs=pl.BlockSpec((tile_m, LANES), lambda i: (i, 0)),
        compiler_params=_compiler_params(("parallel",)),
    )(_pad_rows(v_half, n_pad), _pad_rows(a_half, n_pad),
      params["w1v"], params["b1v"], params["lnv_g"], params["lnv_b"],
      params["w1a"], params["b1a"], params["lna_g"], params["lna_b"],
      params["w2v_row"], params["b2v_lanes"])
    return out[:n, 0]


# ---------------------------------------------------------------------------
# Parameter init (folds Wv@Wo at init, stacks layers, stores matmul weights bf16)
# ---------------------------------------------------------------------------
def init_params(key, emb, audio, ff, n_layers):
    ks = iter(jax.random.split(key, 8 + 8 * n_layers))

    def xav(shape):
        bound = math.sqrt(6.0 / (shape[0] + shape[1]))
        return jax.random.uniform(next(ks), shape, jnp.float32, -bound, bound)

    def bias(n, fan_in):
        bound = 1.0 / math.sqrt(fan_in)
        return jax.random.uniform(next(ks), (1, n), jnp.float32, -bound, bound)

    params = {
        "audio_w": xav((audio, emb)).astype(jnp.bfloat16),
        "audio_b": bias(emb, audio),
        "w1v": xav((emb, emb)).astype(jnp.bfloat16), "b1v": bias(emb, emb),
        "w1a": xav((emb, emb)).astype(jnp.bfloat16), "b1a": bias(emb, emb),
        # linear_2v stored as a (1, emb) row (f32); reused for BOTH heads
        # (original-module bug preserved).  linear_2a exists but is never used.
        "w2v_row": xav((emb, 1)).reshape(1, emb),
        # linear_2v.bias.data.fill_(0.1322) in the module, broadcast to a lane slab.
        "b2v_lanes": jnp.full((1, LANES), 0.1322, jnp.float32),
        "lnv_g": jnp.ones((1, emb), jnp.float32), "lnv_b": jnp.zeros((1, emb), jnp.float32),
        "lna_g": jnp.ones((1, emb), jnp.float32), "lna_b": jnp.zeros((1, emb), jnp.float32),
    }

    per_layer = []
    for _ in range(n_layers):
        wv, bv = xav((emb, emb)), bias(emb, emb)      # V block of in_proj
        wo, bo = xav((emb, emb)), bias(emb, emb)      # attention out_proj
        # seq_len == 1 => softmax == 1 => attn(x) == (x @ Wv + bv) @ Wo + bo.
        per_layer.append({
            "w_attn": (wv @ wo).astype(jnp.bfloat16),
            "b_attn": bv @ wo + bo,
            "w1": xav((emb, ff)).astype(jnp.bfloat16), "b1": bias(ff, emb),
            "w2": xav((ff, emb)).astype(jnp.bfloat16), "b2": bias(emb, ff),
            "ln1_g": jnp.ones((1, emb), jnp.float32), "ln1_b": jnp.zeros((1, emb), jnp.float32),
            "ln2_g": jnp.ones((1, emb), jnp.float32), "ln2_b": jnp.zeros((1, emb), jnp.float32),
        })
    params["enc"] = {k: jnp.stack([ly[k] for ly in per_layer]) for k in per_layer[0]}
    return params


# ---------------------------------------------------------------------------
# Forward orchestration
# ---------------------------------------------------------------------------
def pvt_forward(params, video_emb, audio_emb, emb_size, *, tile_m=256):
    # module unsqueezes 2D video to (1, S, E); batch must be 1 for the concat,
    # so flatten to (S, E) token layout.
    if video_emb.ndim == 3:
        video_emb = video_emb.reshape(-1, emb_size)
    s_v, s_a = video_emb.shape[0], audio_emb.shape[0]

    tm = _pick_tile(max(s_v, s_a), tile_m)
    # fused: audio_linear + PE, video + PE, concat/pad -> bf16 (N_pad, E)
    h, n_v_pad, _ = fused_prep(video_emb, audio_emb,
                               params["audio_w"], params["audio_b"], tm)

    h = transformer_encoder(h, params["enc"], tm)          # whole stack, one call

    # extract the real tokens (padded regions carry junk that never mixes in)
    enc_v, enc_a = h[:n_v_pad], h[n_v_pad:]
    if s_v == s_a:
        v_half, a_half = enc_v[:s_v], enc_a[:s_a]
    else:
        # degenerate case of the original split (mixes streams); reproduce exactly.
        full = jnp.concatenate([enc_v[:s_v], enc_a[:s_a]], axis=0)
        half = (s_v + s_a) // 2
        v_half, a_half = full[:half], full[half:2 * half]

    tm_h = _pick_tile(v_half.shape[0], tile_m)
    y = heads(v_half, a_half, params, tm_h)                # (half,)
    return y, v_half.astype(jnp.float32)


# ---------------------------------------------------------------------------
# Pure-JAX reference (f32 activations, same parameterization) for a numeric check
# ---------------------------------------------------------------------------
def reference_forward(params, video_emb, audio_emb, emb):
    def ln(x, g, b, eps):
        mu = jnp.mean(x, axis=-1, keepdims=True)
        var = jnp.mean((x - mu) ** 2, axis=-1, keepdims=True)
        return (x - mu) * jax.lax.rsqrt(var + eps) * g + b

    if video_emb.ndim == 3:
        video_emb = video_emb.reshape(-1, emb)
    s_v, s_a = video_emb.shape[0], audio_emb.shape[0]
    pe = positional_encoding(max(s_v, s_a), emb)
    a = audio_emb @ params["audio_w"].astype(jnp.float32) + params["audio_b"] + pe[:s_a]
    v = video_emb + pe[:s_v]
    h = jnp.concatenate([v, a], axis=0)
    enc = params["enc"]
    for l in range(enc["w_attn"].shape[0]):
        attn = h @ enc["w_attn"][l].astype(jnp.float32) + enc["b_attn"][l]
        h1 = ln(h + attn, enc["ln1_g"][l], enc["ln1_b"][l], 1e-5)
        ff = jnp.maximum(h1 @ enc["w1"][l].astype(jnp.float32) + enc["b1"][l], 0.0)
        ff = ff @ enc["w2"][l].astype(jnp.float32) + enc["b2"][l]
        h = ln(h1 + ff, enc["ln2_g"][l], enc["ln2_b"][l], 1e-5)
    half = (s_v + s_a) // 2
    v_half, a_half = h[:half], h[half:2 * half]

    def head(x, w1, b1, g, b):
        y = jnp.maximum(x @ w1.astype(jnp.float32) + b1, 0.0)
        y = ln(y, g, b, 1e-6)
        return jnp.sum(y * params["w2v_row"], axis=-1, keepdims=True)

    sv = head(v_half, params["w1v"], params["b1v"], params["lnv_g"], params["lnv_b"])
    sa = head(a_half, params["w1a"], params["b1a"], params["lna_g"], params["lna_b"])
    y = jax.nn.sigmoid((sv + sa) * 0.5 + params["b2v_lanes"][0, 0])
    return y[:, 0], v_half


if __name__ == "__main__":
    # Small config consistent with the module (defaults emb=1024, audio=2048,
    # heads=8, layers=4, ff=2048 — scaled down for the test).
    EMB, AUDIO, FF, LAYERS = 128, 256, 256, 2
    S = 8  # video and audio sequence lengths (must match for the half split)

    key = jax.random.PRNGKey(0)
    k_p, k_v, k_a = jax.random.split(key, 3)
    params = init_params(k_p, EMB, AUDIO, FF, LAYERS)

    video_emb = jax.random.normal(k_v, (S, EMB), jnp.float32)   # 2D -> treated as batch 1
    audio_emb = jax.random.normal(k_a, (S, AUDIO), jnp.float32)

    fwd = jax.jit(lambda p, v, a: pvt_forward(p, v, a, EMB))
    y, v_out = fwd(params, video_emb, audio_emb)
    jax.block_until_ready((y, v_out))

    assert y.shape == (S,) and v_out.shape == (S, EMB)
    assert bool(jnp.all(jnp.isfinite(y))) and bool(jnp.all(jnp.isfinite(v_out)))

    # loose-tolerance check vs a pure-JAX f32 reference (kernels run bf16 matmuls
    # + bf16 inter-kernel activations, so ~1e-2 level differences are expected)
    y_ref, v_ref = reference_forward(params, video_emb, audio_emb, EMB)
    assert float(jnp.max(jnp.abs(y - y_ref))) < 5e-2
    assert float(jnp.max(jnp.abs(v_out - v_ref))) < 1.5e-1

    print("KERNEL_OK")
</pallas_src>

<mosaic_0001>
module attributes {stable_mosaic.version = 11 : i64} {
  func.func @_prep_kernel(%arg0: i32, %arg1: memref<128x128xf32, #tpu.memory_space<vmem>>, %arg2: memref<128x256xf32, #tpu.memory_space<vmem>>, %arg3: memref<256x128xbf16, #tpu.memory_space<vmem>>, %arg4: memref<1x128xf32, #tpu.memory_space<vmem>>, %arg5: memref<128x128xbf16, #tpu.memory_space<vmem>>, %arg6: memref<128x128xbf16, #tpu.memory_space<vmem>>) attributes {dimension_semantics = [#tpu.dimension_semantics<parallel>], iteration_bounds = array<i64: 2>, scalar_prefetch = 0 : i64, scratch_operands = 0 : i64, tpu.core_type = #tpu.core_type<tc>, window_params = [{transform_indices = @transform_0, window_bounds = array<i64: 128, 128>}, {transform_indices = @transform_1, window_bounds = array<i64: 128, 256>}, {pipeline_mode = #tpu.pipeline_mode<synchronous>, transform_indices = @transform_2, window_bounds = array<i64: 256, 128>}, {pipeline_mode = #tpu.pipeline_mode<synchronous>, transform_indices = @transform_3, window_bounds = array<i64: 1, 128>}, {transform_indices = @transform_4, window_bounds = array<i64: 128, 128>}, {transform_indices = @transform_5, window_bounds = array<i64: 128, 128>}]} {
    %c0 = arith.constant 0 : index
    %c0_0 = arith.constant 0 : index
    %0 = vector.load %arg5[%c0, %c0_0] : memref<128x128xbf16, #tpu.memory_space<vmem>>, vector<128x128xbf16>
    %1 = arith.extf %0 : vector<128x128xbf16> to vector<128x128xf32>
    %c1_i32 = arith.constant 1 : i32
    %2 = arith.cmpi slt, %arg0, %c1_i32 : i32
    %3 = arith.extui %2 : i1 to i32
    %c0_i32 = arith.constant 0 : i32
    %4 = arith.cmpi ne, %3, %c0_i32 : i32
    scf.if %4 {
      %c0_3 = arith.constant 0 : index
      %c0_4 = arith.constant 0 : index
      %8 = vector.load %arg1[%c0_3, %c0_4] : memref<128x128xf32, #tpu.memory_space<vmem>>, vector<128x128xf32>
      %9 = arith.addf %8, %1 : vector<128x128xf32>
      %10 = arith.truncf %9 : vector<128x128xf32> to vector<128x128xbf16>
      %c0_5 = arith.constant 0 : index
      %c0_6 = arith.constant 0 : index
      %11 = vector.load %arg6[%c0_5, %c0_6] : memref<128x128xbf16, #tpu.memory_space<vmem>>, vector<128x128xbf16>
      tpu.vector_store %arg6[%c0_5, %c0_6], %10 {strides = array<i32>} : memref<128x128xbf16, #tpu.memory_space<vmem>>, vector<128x128xbf16>,
    } else {
    }
    %c1_i32_1 = arith.constant 1 : i32
    %5 = arith.cmpi sge, %arg0, %c1_i32_1 : i32
    %6 = arith.extui %5 : i1 to i32
    %c0_i32_2 = arith.constant 0 : i32
    %7 = arith.cmpi ne, %6, %c0_i32_2 : i32
    scf.if %7 {
      %c0_3 = arith.constant 0 : index
      %c0_4 = arith.constant 0 : index
      %8 = vector.load %arg2[%c0_3, %c0_4] : memref<128x256xf32, #tpu.memory_space<vmem>>, vector<128x256xf32>
      %9 = arith.truncf %8 : vector<128x256xf32> to vector<128x256xbf16>
      %c0_5 = arith.constant 0 : index
      %c0_6 = arith.constant 0 : index
      %10 = vector.load %arg3[%c0_5, %c0_6] : memref<256x128xbf16, #tpu.memory_space<vmem>>, vector<256x128xbf16>
      %cst = arith.constant dense<0.000000e+00> : vector<128x128xf32>
      %11 = tpu.matmul %9, %10, %cst {dimension_numbers = #tpu.dot_dimension_numbers<[1], [0], [0], [1], [0, 0, 1, 1], [], []>} : vector<128x256xbf16>, vector<256x128xbf16>, vector<128x128xf32> -> vector<128x128xf32>
      %c0_7 = arith.constant 0 : index
      %c0_8 = arith.constant 0 : index
      %12 = vector.load %arg4[%c0_7, %c0_8] : memref<1x128xf32, #tpu.memory_space<vmem>>, vector<1x128xf32>
      %13 = vector.broadcast %12 : vector<1x128xf32> to vector<128x128xf32>
      %14 = arith.addf %11, %13 : vector<128x128xf32>
      %15 = arith.addf %14, %1 : vector<128x128xf32>
      %16 = arith.truncf %15 : vector<128x128xf32> to vector<128x128xbf16>
      %c0_9 = arith.constant 0 : index
      %c0_10 = arith.constant 0 : index
      %17 = vector.load %arg6[%c0_9, %c0_10] : memref<128x128xbf16, #tpu.memory_space<vmem>>, vector<128x128xbf16>
      tpu.vector_store %arg6[%c0_9, %c0_10], %16 {strides = array<i32>} : memref<128x128xbf16, #tpu.memory_space<vmem>>, vector<128x128xbf16>,
    } else {
    }
    return
  }
  func.func @transform_0(%arg0: i32) -> (i32, i32) {
    %c0_i32 = arith.constant 0 : i32
    %0 = arith.minsi %arg0, %c0_i32 : i32
    %c0_i32_0 = arith.constant 0 : i32
    %c0_i32_1 = arith.constant 0 : i32
    return %0, %c0_i32_0 : i32, i32
  }
  func.func @transform_1(%arg0: i32) -> (i32, i32) {
    %c1_i32 = arith.constant 1 : i32
    %0 = arith.subi %arg0, %c1_i32 : i32
    %c0_i32 = arith.constant 0 : i32
    %1 = arith.maxsi %0, %c0_i32 : i32
    %c0_i32_0 = arith.constant 0 : i32
    %c0_i32_1 = arith.constant 0 : i32
    return %1, %c0_i32_0 : i32, i32
  }
  func.func @transform_2(%arg0: i32) -> (i32, i32) {
    %c0_i32 = arith.constant 0 : i32
    %c0_i32_0 = arith.constant 0 : i32
    %c0_i32_1 = arith.constant 0 : i32
    return %c0_i32, %c0_i32_0 : i32, i32
  }
  func.func @transform_3(%arg0: i32) -> (i32, i32) {
    %c0_i32 = arith.constant 0 : i32
    %c0_i32_0 = arith.constant 0 : i32
    %c0_i32_1 = arith.constant 0 : i32
    return %c0_i32, %c0_i32_0 : i32, i32
  }
  func.func @transform_4(%arg0: i32) -> (i32, i32) {
    %c1_i32 = arith.constant 1 : i32
    %0 = arith.cmpi slt, %arg0, %c1_i32 : i32
    %c1_i32_0 = arith.constant 1 : i32
    %1 = arith.subi %arg0, %c1_i32_0 : i32
    %2 = arith.select %0, %arg0, %1 : i32
    %c0_i32 = arith.constant 0 : i32
    %c0_i32_1 = arith.constant 0 : i32
    return %2, %c0_i32 : i32, i32
  }
  func.func @transform_5(%arg0: i32) -> (i32, i32) {
    %c0_i32 = arith.constant 0 : i32
    %c0_i32_0 = arith.constant 0 : i32
    return %arg0, %c0_i32 : i32, i32
  }
}

module attributes {stable_mosaic.version = 11 : i64} {
  func.func @_head_kernel(%arg0: i32, %arg1: memref<128x128xbf16, #tpu.memory_space<vmem>>, %arg2: memref<128x128xbf16, #tpu.memory_space<vmem>>, %arg3: memref<128x128xbf16, #tpu.memory_space<vmem>>, %arg4: memref<1x128xf32, #tpu.memory_space<vmem>>, %arg5: memref<1x128xf32, #tpu.memory_space<vmem>>, %arg6: memref<1x128xf32, #tpu.memory_space<vmem>>, %arg7: memref<128x128xbf16, #tpu.memory_space<vmem>>, %arg8: memref<1x128xf32, #tpu.memory_space<vmem>>, %arg9: memref<1x128xf32, #tpu.memory_space<vmem>>, %arg10: memref<1x128xf32, #tpu.memory_space<vmem>>, %arg11: memref<1x128xf32, #tpu.memory_space<vmem>>, %arg12: memref<1x128xf32, #tpu.memory_space<vmem>>, %arg13: memref<128x128xf32, #tpu.memory_space<vmem>>) attributes {dimension_semantics = [#tpu.dimension_semantics<parallel>], iteration_bounds = array<i64: 1>, scalar_prefetch = 0 : i64, scratch_operands = 0 : i64, tpu.core_type = #tpu.core_type<tc>, window_params = [{transform_indices = @transform_0, window_bounds = array<i64: 128, 128>}, {transform_indices = @transform_1, window_bounds = array<i64: 128, 128>}, {pipeline_mode = #tpu.pipeline_mode<synchronous>, transform_indices = @transform_2, window_bounds = array<i64: 128, 128>}, {pipeline_mode = #tpu.pipeline_mode<synchronous>, transform_indices = @transform_3, window_bounds = array<i64: 1, 128>}, {pipeline_mode = #tpu.pipeline_mode<synchronous>, transform_indices = @transform_4, window_bounds = array<i64: 1, 128>}, {pipeline_mode = #tpu.pipeline_mode<synchronous>, transform_indices = @transform_5, window_bounds = array<i64: 1, 128>}, {pipeline_mode = #tpu.pipeline_mode<synchronous>, transform_indices = @transform_6, window_bounds = array<i64: 128, 128>}, {pipeline_mode = #tpu.pipeline_mode<synchronous>, transform_indices = @transform_7, window_bounds = array<i64: 1, 128>}, {pipeline_mode = #tpu.pipeline_mode<synchronous>, transform_indices = @transform_8, window_bounds = array<i64: 1, 128>}, {pipeline_mode = #tpu.pipeline_mode<synchronous>, transform_indices = @transform_9, window_bounds = array<i64: 1, 128>}, {pipeline_mode = #tpu.pipeline_mode<synchronous>, transform_indices = @transform_10, window_bounds = array<i64: 1, 128>}, {pipeline_mode = #tpu.pipeline_mode<synchronous>, transform_indices = @transform_11, window_bounds = array<i64: 1, 128>}, {transform_indices = @transform_12, window_bounds = array<i64: 128, 128>}]} {
    %c0 = arith.constant 0 : index
    %c0_0 = arith.constant 0 : index
    %0 = vector.load %arg11[%c0, %c0_0] : memref<1x128xf32, #tpu.memory_space<vmem>>, vector<1x128xf32>
    %c0_1 = arith.constant 0 : index
    %c0_2 = arith.constant 0 : index
    %1 = vector.load %arg1[%c0_1, %c0_2] : memref<128x128xbf16, #tpu.memory_space<vmem>>, vector<128x128xbf16>
    %c0_3 = arith.constant 0 : index
    %c0_4 = arith.constant 0 : index
    %2 = vector.load %arg3[%c0_3, %c0_4] : memref<128x128xbf16, #tpu.memory_space<vmem>>, vector<128x128xbf16>
    %c0_5 = arith.constant 0 : index
    %c0_6 = arith.constant 0 : index
    %3 = vector.load %arg4[%c0_5, %c0_6] : memref<1x128xf32, #tpu.memory_space<vmem>>, vector<1x128xf32>
    %c0_7 = arith.constant 0 : index
    %c0_8 = arith.constant 0 : index
    %4 = vector.load %arg5[%c0_7, %c0_8] : memref<1x128xf32, #tpu.memory_space<vmem>>, vector<1x128xf32>
    %c0_9 = arith.constant 0 : index
    %c0_10 = arith.constant 0 : index
    %5 = vector.load %arg6[%c0_9, %c0_10] : memref<1x128xf32, #tpu.memory_space<vmem>>, vector<1x128xf32>
    %cst = arith.constant dense<0.000000e+00> : vector<128x128xf32>
    %6 = tpu.matmul %1, %2, %cst {dimension_numbers = #tpu.dot_dimension_numbers<[1], [0], [0], [1], [0, 0, 1, 1], [], []>} : vector<128x128xbf16>, vector<128x128xbf16>, vector<128x128xf32> -> vector<128x128xf32>
    %7 = vector.broadcast %3 : vector<1x128xf32> to vector<128x128xf32>
    %8 = arith.addf %6, %7 : vector<128x128xf32>
    %cst_11 = arith.constant 0.000000e+00 : f32
    %9 = vector.broadcast %cst_11 : f32 to vector<128x128xf32>
    %10 = arith.maximumf %8, %9 : vector<128x128xf32>
    %cst_12 = arith.constant dense<0.000000e+00> : vector<128xf32>
    %11 = vector.multi_reduction <add>, %10, %cst_12 [1] : vector<128x128xf32> to vector<128xf32>
    %12 = vector.shape_cast %11 : vector<128xf32> to vector<128x1xf32>
    %cst_13 = arith.constant 7.812500e-03 : f32
    %13 = vector.broadcast %cst_13 : f32 to vector<128x1xf32>
    %14 = arith.mulf %12, %13 : vector<128x1xf32>
    %15 = vector.broadcast %14 : vector<128x1xf32> to vector<128x128xf32>
    %16 = arith.subf %10, %15 : vector<128x128xf32>
    %17 = arith.mulf %16, %16 : vector<128x128xf32>
    %cst_14 = arith.constant dense<0.000000e+00> : vector<128xf32>
    %18 = vector.multi_reduction <add>, %17, %cst_14 [1] : vector<128x128xf32> to vector<128xf32>
    %19 = vector.shape_cast %18 : vector<128xf32> to vector<128x1xf32>
    %cst_15 = arith.constant 7.812500e-03 : f32
    %20 = vector.broadcast %cst_15 : f32 to vector<128x1xf32>
    %21 = arith.mulf %19, %20 : vector<128x1xf32>
    %cst_16 = arith.constant 9.99999997E-7 : f32
    %22 = vector.broadcast %cst_16 : f32 to vector<128x1xf32>
    %23 = arith.addf %21, %22 : vector<128x1xf32>
    %24 = math.rsqrt %23 : vector<128x1xf32>
    %25 = vector.broadcast %24 : vector<128x1xf32> to vector<128x128xf32>
    %26 = arith.mulf %16, %25 : vector<128x128xf32>
    %27 = vector.broadcast %4 : vector<1x128xf32> to vector<128x128xf32>
    %28 = arith.mulf %26, %27 : vector<128x128xf32>
    %29 = vector.broadcast %5 : vector<1x128xf32> to vector<128x128xf32>
    %30 = arith.addf %28, %29 : vector<128x128xf32>
    %31 = vector.broadcast %0 : vector<1x128xf32> to vector<128x128xf32>
    %32 = arith.mulf %30, %31 : vector<128x128xf32>
    %cst_17 = arith.constant dense<0.000000e+00> : vector<128xf32>
    %33 = vector.multi_reduction <add>, %32, %cst_17 [1] : vector<128x128xf32> to vector<128xf32>
    %34 = vector.shape_cast %33 : vector<128xf32> to vector<128x1xf32>
    %c0_18 = arith.constant 0 : index
    %c0_19 = arith.constant 0 : index
    %35 = vector.load %arg2[%c0_18, %c0_19] : memref<128x128xbf16, #tpu.memory_space<vmem>>, vector<128x128xbf16>
    %c0_20 = arith.constant 0 : index
    %c0_21 = arith.constant 0 : index
    %36 = vector.load %arg7[%c0_20, %c0_21] : memref<128x128xbf16, #tpu.memory_space<vmem>>, vector<128x128xbf16>
    %c0_22 = arith.constant 0 : index
    %c0_23 = arith.constant 0 : index
    %37 = vector.load %arg8[%c0_22, %c0_23] : memref<1x128xf32, #tpu.memory_space<vmem>>, vector<1x128xf32>
    %c0_24 = arith.constant 0 : index
    %c0_25 = arith.constant 0 : index
    %38 = vector.load %arg9[%c0_24, %c0_25] : memref<1x128xf32, #tpu.memory_space<vmem>>, vector<1x128xf32>
    %c0_26 = arith.constant 0 : index
    %c0_27 = arith.constant 0 : index
    %39 = vector.load %arg10[%c0_26, %c0_27] : memref<1x128xf32, #tpu.memory_space<vmem>>, vector<1x128xf32>
    %cst_28 = arith.constant dense<0.000000e+00> : vector<128x128xf32>
    %40 = tpu.matmul %35, %36, %cst_28 {dimension_numbers = #tpu.dot_dimension_numbers<[1], [0], [0], [1], [0, 0, 1, 1], [], []>} : vector<128x128xbf16>, vector<128x128xbf16>, vector<128x128xf32> -> vector<128x128xf32>
    %41 = vector.broadcast %37 : vector<1x128xf32> to vector<128x128xf32>
    %42 = arith.addf %40, %41 : vector<128x128xf32>
    %cst_29 = arith.constant 0.000000e+00 : f32
    %43 = vector.broadcast %cst_29 : f32 to vector<128x128xf32>
    %44 = arith.maximumf %42, %43 : vector<128x128xf32>
    %cst_30 = arith.constant dense<0.000000e+00> : vector<128xf32>
    %45 = vector.multi_reduction <add>, %44, %cst_30 [1] : vector<128x128xf32> to vector<128xf32>
    %46 = vector.shape_cast %45 : vector<128xf32> to vector<128x1xf32>
    %cst_31 = arith.constant 7.812500e-03 : f32
    %47 = vector.broadcast %cst_31 : f32 to vector<128x1xf32>
    %48 = arith.mulf %46, %47 : vector<128x1xf32>
    %49 = vector.broadcast %48 : vector<128x1xf32> to vector<128x128xf32>
    %50 = arith.subf %44, %49 : vector<128x128xf32>
    %51 = arith.mulf %50, %50 : vector<128x128xf32>
    %cst_32 = arith.constant dense<0.000000e+00> : vector<128xf32>
    %52 = vector.multi_reduction <add>, %51, %cst_32 [1] : vector<128x128xf32> to vector<128xf32>
    %53 = vector.shape_cast %52 : vector<128xf32> to vector<128x1xf32>
    %cst_33 = arith.constant 7.812500e-03 : f32
    %54 = vector.broadcast %cst_33 : f32 to vector<128x1xf32>
    %55 = arith.mulf %53, %54 : vector<128x1xf32>
    %cst_34 = arith.constant 9.99999997E-7 : f32
    %56 = vector.broadcast %cst_34 : f32 to vector<128x1xf32>
    %57 = arith.addf %55, %56 : vector<128x1xf32>
    %58 = math.rsqrt %57 : vector<128x1xf32>
    %59 = vector.broadcast %58 : vector<128x1xf32> to vector<128x128xf32>
    %60 = arith.mulf %50, %59 : vector<128x128xf32>
    %61 = vector.broadcast %38 : vector<1x128xf32> to vector<128x128xf32>
    %62 = arith.mulf %60, %61 : vector<128x128xf32>
    %63 = vector.broadcast %39 : vector<1x128xf32> to vector<128x128xf32>
    %64 = arith.addf %62, %63 : vector<128x128xf32>
    %65 = vector.broadcast %0 : vector<1x128xf32> to vector<128x128xf32>
    %66 = arith.mulf %64, %65 : vector<128x128xf32>
    %cst_35 = arith.constant dense<0.000000e+00> : vector<128xf32>
    %67 = vector.multi_reduction <add>, %66, %cst_35 [1] : vector<128x128xf32> to vector<128xf32>
    %68 = vector.shape_cast %67 : vector<128xf32> to vector<128x1xf32>
    %69 = arith.addf %34, %68 : vector<128x1xf32>
    %cst_36 = arith.constant 5.000000e-01 : f32
    %70 = vector.broadcast %cst_36 : f32 to vector<128x1xf32>
    %71 = arith.mulf %69, %70 : vector<128x1xf32>
    %c0_37 = arith.constant 0 : index
    %c0_38 = arith.constant 0 : index
    %72 = vector.load %arg12[%c0_37, %c0_38] : memref<1x128xf32, #tpu.memory_space<vmem>>, vector<1x128xf32>
    %73 = vector.broadcast %71 : vector<128x1xf32> to vector<128x128xf32>
    %74 = vector.broadcast %72 : vector<1x128xf32> to vector<128x128xf32>
    %75 = arith.addf %73, %74 : vector<128x128xf32>
    %76 = arith.negf %75 : vector<128x128xf32>
    %77 = math.exp %76 : vector<128x128xf32>
    %cst_39 = arith.constant 1.000000e+00 : f32
    %78 = vector.broadcast %cst_39 : f32 to vector<128x128xf32>
    %79 = arith.addf %78, %77 : vector<128x128xf32>
    %80 = arith.divf %78, %79 : vector<128x128xf32>
    %c0_40 = arith.constant 0 : index
    %c0_41 = arith.constant 0 : index
    %81 = vector.load %arg13[%c0_40, %c0_41] : memref<128x128xf32, #tpu.memory_space<vmem>>, vector<128x128xf32>
    tpu.vector_store %arg13[%c0_40, %c0_41], %80 {strides = array<i32>} : memref<128x128xf32, #tpu.memory_space<vmem>>, vector<128x128xf32>,
    return
  }
  func.func @transform_0(%arg0: i32) -> (i32, i32) {
    %c0_i32 = arith.constant 0 : i32
    %c0_i32_0 = arith.constant 0 : i32
    return %arg0, %c0_i32 : i32, i32
  }
  func.func @transform_1(%arg0: i32) -> (i32, i32) {
    %c0_i32 = arith.constant 0 : i32
    %c0_i32_0 = arith.constant 0 : i32
    return %arg0, %c0_i32 : i32, i32
  }
  func.func @transform_2(%arg0: i32) -> (i32, i32) {
    %c0_i32 = arith.constant 0 : i32
    %c0_i32_0 = arith.constant 0 : i32
    %c0_i32_1 = arith.constant 0 : i32
    return %c0_i32, %c0_i32_0 : i32, i32
  }
  func.func @transform_3(%arg0: i32) -> (i32, i32) {
    %c0_i32 = arith.constant 0 : i32
    %c0_i32_0 = arith.constant 0 : i32
    %c0_i32_1 = arith.constant 0 : i32
    return %c0_i32, %c0_i32_0 : i32, i32
  }
  func.func @transform_4(%arg0: i32) -> (i32, i32) {
    %c0_i32 = arith.constant 0 : i32
    %c0_i32_0 = arith.constant 0 : i32
    %c0_i32_1 = arith.constant 0 : i32
    return %c0_i32, %c0_i32_0 : i32, i32
  }
  func.func @transform_5(%arg0: i32) -> (i32, i32) {
    %c0_i32 = arith.constant 0 : i32
    %c0_i32_0 = arith.constant 0 : i32
    %c0_i32_1 = arith.constant 0 : i32
    return %c0_i32, %c0_i32_0 : i32, i32
  }
  func.func @transform_6(%arg0: i32) -> (i32, i32) {
    %c0_i32 = arith.constant 0 : i32
    %c0_i32_0 = arith.constant 0 : i32
    %c0_i32_1 = arith.constant 0 : i32
    return %c0_i32, %c0_i32_0 : i32, i32
  }
  func.func @transform_7(%arg0: i32) -> (i32, i32) {
    %c0_i32 = arith.constant 0 : i32
    %c0_i32_0 = arith.constant 0 : i32
    %c0_i32_1 = arith.constant 0 : i32
    return %c0_i32, %c0_i32_0 : i32, i32
  }
  func.func @transform_8(%arg0: i32) -> (i32, i32) {
    %c0_i32 = arith.constant 0 : i32
    %c0_i32_0 = arith.constant 0 : i32
    %c0_i32_1 = arith.constant 0 : i32
    return %c0_i32, %c0_i32_0 : i32, i32
  }
  func.func @transform_9(%arg0: i32) -> (i32, i32) {
    %c0_i32 = arith.constant 0 : i32
    %c0_i32_0 = arith.constant 0 : i32
    %c0_i32_1 = arith.constant 0 : i32
    return %c0_i32, %c0_i32_0 : i32, i32
  }
  func.func @transform_10(%arg0: i32) -> (i32, i32) {
    %c0_i32 = arith.constant 0 : i32
    %c0_i32_0 = arith.constant 0 : i32
    %c0_i32_1 = arith.constant 0 : i32
    return %c0_i32, %c0_i32_0 : i32, i32
  }
  func.func @transform_11(%arg0: i32) -> (i32, i32) {
    %c0_i32 = arith.constant 0 : i32
    %c0_i32_0 = arith.constant 0 : i32
    %c0_i32_1 = arith.constant 0 : i32
    return %c0_i32, %c0_i32_0 : i32, i32
  }
  func.func @transform_12(%arg0: i32) -> (i32, i32) {
    %c0_i32 = arith.constant 0 : i32
    %c0_i32_0 = arith.constant 0 : i32
    return %arg0, %c0_i32 : i32, i32
  }
}

module attributes {stable_mosaic.version = 11 : i64} {
  func.func @_encoder_kernel(%arg0: i32, %arg1: i32, %arg2: memref<128x128xbf16, #tpu.memory_space<vmem>>, %arg3: memref<1x128x128xbf16, #tpu.memory_space<vmem>>, %arg4: memref<1x1x128xf32, #tpu.memory_space<vmem>>, %arg5: memref<1x1x128xf32, #tpu.memory_space<vmem>>, %arg6: memref<1x1x128xf32, #tpu.memory_space<vmem>>, %arg7: memref<1x128x256xbf16, #tpu.memory_space<vmem>>, %arg8: memref<1x1x256xf32, #tpu.memory_space<vmem>>, %arg9: memref<1x256x128xbf16, #tpu.memory_space<vmem>>, %arg10: memref<1x1x128xf32, #tpu.memory_space<vmem>>, %arg11: memref<1x1x128xf32, #tpu.memory_space<vmem>>, %arg12: memref<1x1x128xf32, #tpu.memory_space<vmem>>, %arg13: memref<128x128xbf16, #tpu.memory_space<vmem>>, %arg14: memref<128x128xf32, #tpu.memory_space<vmem>>) attributes {dimension_semantics = [#tpu.dimension_semantics<parallel>, #tpu.dimension_semantics<arbitrary>], iteration_bounds = array<i64: 2, 2>, scalar_prefetch = 0 : i64, scratch_operands = 1 : i64, tpu.core_type = #tpu.core_type<tc>, window_params = [{transform_indices = @transform_0, window_bounds = array<i64: 128, 128>}, {transform_indices = @transform_1, window_bounds = array<i64: 1, 128, 128>}, {transform_indices = @transform_2, window_bounds = array<i64: 1, 1, 128>}, {transform_indices = @transform_3, window_bounds = array<i64: 1, 1, 128>}, {transform_indices = @transform_4, window_bounds = array<i64: 1, 1, 128>}, {transform_indices = @transform_5, window_bounds = array<i64: 1, 128, 256>}, {transform_indices = @transform_6, window_bounds = array<i64: 1, 1, 256>}, {transform_indices = @transform_7, window_bounds = array<i64: 1, 256, 128>}, {transform_indices = @transform_8, window_bounds = array<i64: 1, 1, 128>}, {transform_indices = @transform_9, window_bounds = array<i64: 1, 1, 128>}, {transform_indices = @transform_10, window_bounds = array<i64: 1, 1, 128>}, {transform_indices = @transform_11, window_bounds = array<i64: 128, 128>}]} {
    %c0_i32 = arith.constant 0 : i32
    %0 = arith.cmpi eq, %arg1, %c0_i32 : i32
    %1 = arith.extui %0 : i1 to i32
    %c0_i32_0 = arith.constant 0 : i32
    %2 = arith.cmpi ne, %1, %c0_i32_0 : i32
    scf.if %2 {
      %c0_48 = arith.constant 0 : index
      %c0_49 = arith.constant 0 : index
      %84 = vector.load %arg2[%c0_48, %c0_49] : memref<128x128xbf16, #tpu.memory_space<vmem>>, vector<128x128xbf16>
      %85 = arith.extf %84 : vector<128x128xbf16> to vector<128x128xf32>
      %c0_50 = arith.constant 0 : index
      %c0_51 = arith.constant 0 : index
      %86 = vector.load %arg14[%c0_50, %c0_51] : memref<128x128xf32, #tpu.memory_space<vmem>>, vector<128x128xf32>
      tpu.vector_store %arg14[%c0_50, %c0_51], %85 {strides = array<i32>} : memref<128x128xf32, #tpu.memory_space<vmem>>, vector<128x128xf32>,
    } else {
    }
    %c0 = arith.constant 0 : index
    %c0_1 = arith.constant 0 : index
    %3 = vector.load %arg14[%c0, %c0_1] : memref<128x128xf32, #tpu.memory_space<vmem>>, vector<128x128xf32>
    %4 = arith.truncf %3 : vector<128x128xf32> to vector<128x128xbf16>
    %c0_2 = arith.constant 0 : index
    %c0_3 = arith.constant 0 : index
    %c0_4 = arith.constant 0 : index
    %5 = vector.load %arg3[%c0_2, %c0_3, %c0_4] : memref<1x128x128xbf16, #tpu.memory_space<vmem>>, vector<1x128x128xbf16>
    %6 = vector.shape_cast %5 : vector<1x128x128xbf16> to vector<128x128xbf16>
    %cst = arith.constant dense<0.000000e+00> : vector<128x128xf32>
    %7 = tpu.matmul %4, %6, %cst {dimension_numbers = #tpu.dot_dimension_numbers<[1], [0], [0], [1], [0, 0, 1, 1], [], []>} : vector<128x128xbf16>, vector<128x128xbf16>, vector<128x128xf32> -> vector<128x128xf32>
    %c0_5 = arith.constant 0 : index
    %c0_6 = arith.constant 0 : index
    %c0_7 = arith.constant 0 : index
    %8 = vector.load %arg4[%c0_5, %c0_6, %c0_7] : memref<1x1x128xf32, #tpu.memory_space<vmem>>, vector<1x1x128xf32>
    %9 = vector.shape_cast %8 : vector<1x1x128xf32> to vector<1x128xf32>
    %10 = vector.broadcast %9 : vector<1x128xf32> to vector<128x128xf32>
    %11 = arith.addf %7, %10 : vector<128x128xf32>
    %12 = arith.addf %3, %11 : vector<128x128xf32>
    %c0_8 = arith.constant 0 : index
    %c0_9 = arith.constant 0 : index
    %c0_10 = arith.constant 0 : index
    %13 = vector.load %arg5[%c0_8, %c0_9, %c0_10] : memref<1x1x128xf32, #tpu.memory_space<vmem>>, vector<1x1x128xf32>
    %14 = vector.shape_cast %13 : vector<1x1x128xf32> to vector<1x128xf32>
    %c0_11 = arith.constant 0 : index
    %c0_12 = arith.constant 0 : index
    %c0_13 = arith.constant 0 : index
    %15 = vector.load %arg6[%c0_11, %c0_12, %c0_13] : memref<1x1x128xf32, #tpu.memory_space<vmem>>, vector<1x1x128xf32>
    %16 = vector.shape_cast %15 : vector<1x1x128xf32> to vector<1x128xf32>
    %cst_14 = arith.constant dense<0.000000e+00> : vector<128xf32>
    %17 = vector.multi_reduction <add>, %12, %cst_14 [1] : vector<128x128xf32> to vector<128xf32>
    %18 = vector.shape_cast %17 : vector<128xf32> to vector<128x1xf32>
    %cst_15 = arith.constant 7.812500e-03 : f32
    %19 = vector.broadcast %cst_15 : f32 to vector<128x1xf32>
    %20 = arith.mulf %18, %19 : vector<128x1xf32>
    %21 = vector.broadcast %20 : vector<128x1xf32> to vector<128x128xf32>
    %22 = arith.subf %12, %21 : vector<128x128xf32>
    %23 = arith.mulf %22, %22 : vector<128x128xf32>
    %cst_16 = arith.constant dense<0.000000e+00> : vector<128xf32>
    %24 = vector.multi_reduction <add>, %23, %cst_16 [1] : vector<128x128xf32> to vector<128xf32>
    %25 = vector.shape_cast %24 : vector<128xf32> to vector<128x1xf32>
    %cst_17 = arith.constant 7.812500e-03 : f32
    %26 = vector.broadcast %cst_17 : f32 to vector<128x1xf32>
    %27 = arith.mulf %25, %26 : vector<128x1xf32>
    %cst_18 = arith.constant 9.99999974E-6 : f32
    %28 = vector.broadcast %cst_18 : f32 to vector<128x1xf32>
    %29 = arith.addf %27, %28 : vector<128x1xf32>
    %30 = math.rsqrt %29 : vector<128x1xf32>
    %31 = vector.broadcast %30 : vector<128x1xf32> to vector<128x128xf32>
    %32 = arith.mulf %22, %31 : vector<128x128xf32>
    %33 = vector.broadcast %14 : vector<1x128xf32> to vector<128x128xf32>
    %34 = arith.mulf %32, %33 : vector<128x128xf32>
    %35 = vector.broadcast %16 : vector<1x128xf32> to vector<128x128xf32>
    %36 = arith.addf %34, %35 : vector<128x128xf32>
    %37 = arith.truncf %36 : vector<128x128xf32> to vector<128x128xbf16>
    %c0_19 = arith.constant 0 : index
    %c0_20 = arith.constant 0 : index
    %c0_21 = arith.constant 0 : index
    %38 = vector.load %arg7[%c0_19, %c0_20, %c0_21] : memref<1x128x256xbf16, #tpu.memory_space<vmem>>, vector<1x128x256xbf16>
    %39 = vector.shape_cast %38 : vector<1x128x256xbf16> to vector<128x256xbf16>
    %cst_22 = arith.constant dense<0.000000e+00> : vector<128x256xf32>
    %40 = tpu.matmul %37, %39, %cst_22 {dimension_numbers = #tpu.dot_dimension_numbers<[1], [0], [0], [1], [0, 0, 1, 1], [], []>} : vector<128x128xbf16>, vector<128x256xbf16>, vector<128x256xf32> -> vector<128x256xf32>
    %c0_23 = arith.constant 0 : index
    %c0_24 = arith.constant 0 : index
    %c0_25 = arith.constant 0 : index
    %41 = vector.load %arg8[%c0_23, %c0_24, %c0_25] : memref<1x1x256xf32, #tpu.memory_space<vmem>>, vector<1x1x256xf32>
    %42 = vector.shape_cast %41 : vector<1x1x256xf32> to vector<1x256xf32>
    %43 = vector.broadcast %42 : vector<1x256xf32> to vector<128x256xf32>
    %44 = arith.addf %40, %43 : vector<128x256xf32>
    %cst_26 = arith.constant 0.000000e+00 : f32
    %45 = vector.broadcast %cst_26 : f32 to vector<128x256xf32>
    %46 = arith.maximumf %44, %45 : vector<128x256xf32>
    %47 = arith.truncf %46 : vector<128x256xf32> to vector<128x256xbf16>
    %c0_27 = arith.constant 0 : index
    %c0_28 = arith.constant 0 : index
    %c0_29 = arith.constant 0 : index
    %48 = vector.load %arg9[%c0_27, %c0_28, %c0_29] : memref<1x256x128xbf16, #tpu.memory_space<vmem>>, vector<1x256x128xbf16>
    %49 = vector.shape_cast %48 : vector<1x256x128xbf16> to vector<256x128xbf16>
    %cst_30 = arith.constant dense<0.000000e+00> : vector<128x128xf32>
    %50 = tpu.matmul %47, %49, %cst_30 {dimension_numbers = #tpu.dot_dimension_numbers<[1], [0], [0], [1], [0, 0, 1, 1], [], []>} : vector<128x256xbf16>, vector<256x128xbf16>, vector<128x128xf32> -> vector<128x128xf32>
    %c0_31 = arith.constant 0 : index
    %c0_32 = arith.constant 0 : index
    %c0_33 = arith.constant 0 : index
    %51 = vector.load %arg10[%c0_31, %c0_32, %c0_33] : memref<1x1x128xf32, #tpu.memory_space<vmem>>, vector<1x1x128xf32>
    %52 = vector.shape_cast %51 : vector<1x1x128xf32> to vector<1x128xf32>
    %53 = vector.broadcast %52 : vector<1x128xf32> to vector<128x128xf32>
    %54 = arith.addf %50, %53 : vector<128x128xf32>
    %55 = arith.addf %36, %54 : vector<128x128xf32>
    %c0_34 = arith.constant 0 : index
    %c0_35 = arith.constant 0 : index
    %c0_36 = arith.constant 0 : index
    %56 = vector.load %arg11[%c0_34, %c0_35, %c0_36] : memref<1x1x128xf32, #tpu.memory_space<vmem>>, vector<1x1x128xf32>
    %57 = vector.shape_cast %56 : vector<1x1x128xf32> to vector<1x128xf32>
    %c0_37 = arith.constant 0 : index
    %c0_38 = arith.constant 0 : index
    %c0_39 = arith.constant 0 : index
    %58 = vector.load %arg12[%c0_37, %c0_38, %c0_39] : memref<1x1x128xf32, #tpu.memory_space<vmem>>, vector<1x1x128xf32>
    %59 = vector.shape_cast %58 : vector<1x1x128xf32> to vector<1x128xf32>
    %cst_40 = arith.constant dense<0.000000e+00> : vector<128xf32>
    %60 = vector.multi_reduction <add>, %55, %cst_40 [1] : vector<128x128xf32> to vector<128xf32>
    %61 = vector.shape_cast %60 : vector<128xf32> to vector<128x1xf32>
    %cst_41 = arith.constant 7.812500e-03 : f32
    %62 = vector.broadcast %cst_41 : f32 to vector<128x1xf32>
    %63 = arith.mulf %61, %62 : vector<128x1xf32>
    %64 = vector.broadcast %63 : vector<128x1xf32> to vector<128x128xf32>
    %65 = arith.subf %55, %64 : vector<128x128xf32>
    %66 = arith.mulf %65, %65 : vector<128x128xf32>
    %cst_42 = arith.constant dense<0.000000e+00> : vector<128xf32>
    %67 = vector.multi_reduction <add>, %66, %cst_42 [1] : vector<128x128xf32> to vector<128xf32>
    %68 = vector.shape_cast %67 : vector<128xf32> to vector<128x1xf32>
    %cst_43 = arith.constant 7.812500e-03 : f32
    %69 = vector.broadcast %cst_43 : f32 to vector<128x1xf32>
    %70 = arith.mulf %68, %69 : vector<128x1xf32>
    %cst_44 = arith.constant 9.99999974E-6 : f32
    %71 = vector.broadcast %cst_44 : f32 to vector<128x1xf32>
    %72 = arith.addf %70, %71 : vector<128x1xf32>
    %73 = math.rsqrt %72 : vector<128x1xf32>
    %74 = vector.broadcast %73 : vector<128x1xf32> to vector<128x128xf32>
    %75 = arith.mulf %65, %74 : vector<128x128xf32>
    %76 = vector.broadcast %57 : vector<1x128xf32> to vector<128x128xf32>
    %77 = arith.mulf %75, %76 : vector<128x128xf32>
    %78 = vector.broadcast %59 : vector<1x128xf32> to vector<128x128xf32>
    %79 = arith.addf %77, %78 : vector<128x128xf32>
    %c0_45 = arith.constant 0 : index
    %c0_46 = arith.constant 0 : index
    %80 = vector.load %arg14[%c0_45, %c0_46] : memref<128x128xf32, #tpu.memory_space<vmem>>, vector<128x128xf32>
    tpu.vector_store %arg14[%c0_45, %c0_46], %79 {strides = array<i32>} : memref<128x128xf32, #tpu.memory_space<vmem>>, vector<128x128xf32>,
    %c1_i32 = arith.constant 1 : i32
    %81 = arith.cmpi eq, %arg1, %c1_i32 : i32
    %82 = arith.extui %81 : i1 to i32
    %c0_i32_47 = arith.constant 0 : i32
    %83 = arith.cmpi ne, %82, %c0_i32_47 : i32
    scf.if %83 {
      %84 = arith.truncf %79 : vector<128x128xf32> to vector<128x128xbf16>
      %c0_48 = arith.constant 0 : index
      %c0_49 = arith.constant 0 : index
      %85 = vector.load %arg13[%c0_48, %c0_49] : memref<128x128xbf16, #tpu.memory_space<vmem>>, vector<128x128xbf16>
      tpu.vector_store %arg13[%c0_48, %c0_49], %84 {strides = array<i32>} : memref<128x128xbf16, #tpu.memory_space<vmem>>, vector<128x128xbf16>,
    } else {
    }
    return
  }
  func.func @transform_0(%arg0: i32, %arg1: i32) -> (i32, i32) {
    %c0_i32 = arith.constant 0 : i32
    %c0_i32_0 = arith.constant 0 : i32
    return %arg0, %c0_i32 : i32, i32
  }
  func.func @transform_1(%arg0: i32, %arg1: i32) -> (i32, i32, i32) {
    %c0_i32 = arith.constant 0 : i32
    %c0_i32_0 = arith.constant 0 : i32
    %c0_i32_1 = arith.constant 0 : i32
    return %arg1, %c0_i32, %c0_i32_0 : i32, i32, i32
  }
  func.func @transform_2(%arg0: i32, %arg1: i32) -> (i32, i32, i32) {
    %c0_i32 = arith.constant 0 : i32
    %c0_i32_0 = arith.constant 0 : i32
    %c0_i32_1 = arith.constant 0 : i32
    return %arg1, %c0_i32, %c0_i32_0 : i32, i32, i32
  }
  func.func @transform_3(%arg0: i32, %arg1: i32) -> (i32, i32, i32) {
    %c0_i32 = arith.constant 0 : i32
    %c0_i32_0 = arith.constant 0 : i32
    %c0_i32_1 = arith.constant 0 : i32
    return %arg1, %c0_i32, %c0_i32_0 : i32, i32, i32
  }
  func.func @transform_4(%arg0: i32, %arg1: i32) -> (i32, i32, i32) {
    %c0_i32 = arith.constant 0 : i32
    %c0_i32_0 = arith.constant 0 : i32
    %c0_i32_1 = arith.constant 0 : i32
    return %arg1, %c0_i32, %c0_i32_0 : i32, i32, i32
  }
  func.func @transform_5(%arg0: i32, %arg1: i32) -> (i32, i32, i32) {
    %c0_i32 = arith.constant 0 : i32
    %c0_i32_0 = arith.constant 0 : i32
    %c0_i32_1 = arith.constant 0 : i32
    return %arg1, %c0_i32, %c0_i32_0 : i32, i32, i32
  }
  func.func @transform_6(%arg0: i32, %arg1: i32) -> (i32, i32, i32) {
    %c0_i32 = arith.constant 0 : i32
    %c0_i32_0 = arith.constant 0 : i32
    %c0_i32_1 = arith.constant 0 : i32
    return %arg1, %c0_i32, %c0_i32_0 : i32, i32, i32
  }
  func.func @transform_7(%arg0: i32, %arg1: i32) -> (i32, i32, i32) {
    %c0_i32 = arith.constant 0 : i32
    %c0_i32_0 = arith.constant 0 : i32
    %c0_i32_1 = arith.constant 0 : i32
    return %arg1, %c0_i32, %c0_i32_0 : i32, i32, i32
  }
  func.func @transform_8(%arg0: i32, %arg1: i32) -> (i32, i32, i32) {
    %c0_i32 = arith.constant 0 : i32
    %c0_i32_0 = arith.constant 0 : i32
    %c0_i32_1 = arith.constant 0 : i32
    return %arg1, %c0_i32, %c0_i32_0 : i32, i32, i32
  }
  func.func @transform_9(%arg0: i32, %arg1: i32) -> (i32, i32, i32) {
    %c0_i32 = arith.constant 0 : i32
    %c0_i32_0 = arith.constant 0 : i32
    %c0_i32_1 = arith.constant 0 : i32
    return %arg1, %c0_i32, %c0_i32_0 : i32, i32, i32
  }
  func.func @transform_10(%arg0: i32, %arg1: i32) -> (i32, i32, i32) {
    %c0_i32 = arith.constant 0 : i32
    %c0_i32_0 = arith.constant 0 : i32
    %c0_i32_1 = arith.constant 0 : i32
    return %arg1, %c0_i32, %c0_i32_0 : i32, i32, i32
  }
  func.func @transform_11(%arg0: i32, %arg1: i32) -> (i32, i32) {
    %c0_i32 = arith.constant 0 : i32
    %c0_i32_0 = arith.constant 0 : i32
    return %arg0, %c0_i32 : i32, i32
  }
}

</mosaic_0001>

<llo_original>
// kernel: _lambda_.3
$region0: #{_lambda_.3}
  #allocation0 [shape = 'u32[]', space=smem, size = 0x4, offset = 0x4, fixed_abs, tag = 'smem constant byte address 0x4 - core index']
  #allocation1 [shape = 'u32[144,128]{1,0:T(1,128)}', space=vmem, size = 0x12000, scoped, tag = 'internal scratch']
  %s0 = inlined_call_operand.vmem [shape: f32[128,128], index: 0, kind: input, shape index: {}]
  %s1 = inlined_call_operand.vmem [shape: f32[128,256], index: 1, kind: input, shape index: {}]
  %s2 = inlined_call_operand.vmem [shape: bf16[256,128], index: 2, kind: input, shape index: {}]
  %s3 = inlined_call_operand.vmem [shape: f32[1,128], index: 3, kind: input, shape index: {}]
  %s4 = inlined_call_operand.vmem [shape: bf16[128,128], index: 4, kind: input, shape index: {}]
  %s5 = inlined_call_operand.vmem [shape: bf16[256,128], index: 5, kind: output, shape index: {}]
  %s6 = sld [smem:[#allocation0]]
  $region61: #{_lambda_.3} parent=0
    _
  %s8 = ssub.s32 1, %s6
  %s9 = scalar_select 0, %s8, %s6
  loop: start=0, step=1, limit=4
  $region2: #{_lambda_.3} parent=0 // loop_pre_header
    _
  $region3: #{_lambda_.3} parent=0 // loop_header
    %s11 = sphi 0, %s15
    %p12 = scmp.ge.s32.totalorder %s11, 4
    %s25 = sphi 0, %s27
    %s28 = sphi 0, %s25
    %s29 = sphi 0, %s28
    %s45 = sphi 0, %s29
    %s57 = sphi 0, %s59
    %s60 = sphi 0, %s57
    %s61 = sphi 0, %s60
    %s77 = sphi 0, %s61
    %s81 = sphi 0, %s81
    %s83 = sphi 0, %s81
    %s84 = sphi 0, %s83
    %s98 = sphi 0, %s84
    %s102 = sphi 0, %s102
    %s104 = sphi 0, %s102
    %s105 = sphi 0, %s104
    %s119 = sphi 0, %s105
    %s131 = sphi 0, %s133
    %s134 = sphi 0, %s131
    %s135 = sphi 0, %s134
    %s151 = sphi 0, %s135
    %s157 = sphi 0, %s159
    %s160 = sphi 0, %s157
    %s161 = sphi 0, %s160
    %s177 = sphi 0, %s161
  $region4: #{_lambda_.3} parent=0 // loop_header_branch
    %14 = sbr.rel (%p12) target = $region8
  $region5: #{_lambda_.3} parent=0 // loop_body
    %s16 = ssub.s32 %s11, 1
    %s17 = ssub.s32 %s11, 2
    %s18 = sadd.s32 %s11, 1
    %p19 = scmp.lt.s32.totalorder %s11, 0
    %s20 = scalar_select %p19, %s11, 0
    %p21 = scmp.lt.s32.totalorder %s18, 0
    %s22 = scalar_select %p21, %s18, 0
    %s23 = ssub.s32 %s20, %s22
    %p24 = scmp.eq.s32.totalorder %s23, 0
    %s26 = sadd.s32 %s25, 1
    %s27 = scalar_select %p24, %s25, %s26
    %p30 = pneg %p24
    %p31 = scmp.eq.s32.totalorder %s11, 1
    %p32 = por %p30, %p31
    %p33 = scmp.ne.s32.totalorder %s25, %s28
    %p34 = scmp.eq.s32.totalorder %s11, 0
    %p35 = por %p33, %p34
    %p36 = scmp.ne.s32.totalorder %s25, %s28
    %p37 = scmp.eq.s32.totalorder %s16, 1
    %p38 = por %p36, %p37
    %p39 = scmp.ne.s32.totalorder %s28, %s29
    %p40 = scmp.eq.s32.totalorder %s16, 0
    %p41 = por %p39, %p40
    %p42 = scmp.ne.s32.totalorder %s28, %s29
    %p43 = scmp.eq.s32.totalorder %s17, 1
    %p44 = por %p42, %p43
    %p46 = scmp.ne.s32.totalorder %s29, %s45
    %p47 = scmp.eq.s32.totalorder %s17, 0
    %p48 = por %p46, %p47
    %s49 = ssub.s32 %s11, 1
    %p50 = scmp.gt.s32.totalorder %s49, 0
    %s51 = scalar_select %p50, %s49, 0
    %s52 = ssub.s32 %s18, 1
    %p53 = scmp.gt.s32.totalorder %s52, 0
    %s54 = scalar_select %p53, %s52, 0
    %s55 = ssub.s32 %s51, %s54
    %p56 = scmp.eq.s32.totalorder %s55, 0
    %s58 = sadd.s32 %s57, 1
    %s59 = scalar_select %p56, %s57, %s58
    %p62 = pneg %p56
    %p63 = scmp.eq.s32.totalorder %s11, 1
    %p64 = por %p62, %p63
    %p65 = scmp.ne.s32.totalorder %s57, %s60
    %p66 = scmp.eq.s32.totalorder %s11, 0
    %p67 = por %p65, %p66
    %p68 = scmp.ne.s32.totalorder %s57, %s60
    %p69 = scmp.eq.s32.totalorder %s16, 1
    %p70 = por %p68, %p69
    %p71 = scmp.ne.s32.totalorder %s60, %s61
    %p72 = scmp.eq.s32.totalorder %s16, 0
    %p73 = por %p71, %p72
    %p74 = scmp.ne.s32.totalorder %s60, %s61
    %p75 = scmp.eq.s32.totalorder %s17, 1
    %p76 = por %p74, %p75
    %p78 = scmp.ne.s32.totalorder %s61, %s77
    %p79 = scmp.eq.s32.totalorder %s17, 0
    %p80 = por %p78, %p79
    %s82 = sadd.s32 %s81, 1
    %p85 = scmp.eq.s32.totalorder %s11, 1
    %p86 = scmp.ne.s32.totalorder %s81, %s83
    %p87 = scmp.eq.s32.totalorder %s11, 0
    %p88 = por %p86, %p87
    %p89 = scmp.ne.s32.totalorder %s81, %s83
    %p90 = scmp.eq.s32.totalorder %s16, 1
    %p91 = por %p89, %p90
    %p92 = scmp.ne.s32.totalorder %s83, %s84
    %p93 = scmp.eq.s32.totalorder %s16, 0
    %p94 = por %p92, %p93
    %p95 = scmp.ne.s32.totalorder %s83, %s84
    %p96 = scmp.eq.s32.totalorder %s17, 1
    %p97 = por %p95, %p96
    %p99 = scmp.ne.s32.totalorder %s84, %s98
    %p100 = scmp.eq.s32.totalorder %s17, 0
    %p101 = por %p99, %p100
    %s103 = sadd.s32 %s102, 1
    %p106 = scmp.eq.s32.totalorder %s11, 1
    %p107 = scmp.ne.s32.totalorder %s102, %s104
    %p108 = scmp.eq.s32.totalorder %s11, 0
    %p109 = por %p107, %p108
    %p110 = scmp.ne.s32.totalorder %s102, %s104
    %p111 = scmp.eq.s32.totalorder %s16, 1
    %p112 = por %p110, %p111
    %p113 = scmp.ne.s32.totalorder %s104, %s105
    %p114 = scmp.eq.s32.totalorder %s16, 0
    %p115 = por %p113, %p114
    %p116 = scmp.ne.s32.totalorder %s104, %s105
    %p117 = scmp.eq.s32.totalorder %s17, 1
    %p118 = por %p116, %p117
    %p120 = scmp.ne.s32.totalorder %s105, %s119
    %p121 = scmp.eq.s32.totalorder %s17, 0
    %p122 = por %p120, %p121
    %p123 = scmp.lt.s32.totalorder %s11, 1
    %s124 = ssub.s32 %s11, 1
    %s125 = scalar_select %p123, %s11, %s124
    %p126 = scmp.lt.s32.totalorder %s18, 1
    %s127 = ssub.s32 %s18, 1
    %s128 = scalar_select %p126, %s18, %s127
    %s129 = ssub.s32 %s125, %s128
    %p130 = scmp.eq.s32.totalorder %s129, 0
    %s132 = sadd.s32 %s131, 1
    %s133 = scalar_select %p130, %s131, %s132
    %p136 = pneg %p130
    %p137 = scmp.eq.s32.totalorder %s11, 1
    %p138 = por %p136, %p137
    %p139 = scmp.ne.s32.totalorder %s131, %s134
    %p140 = scmp.eq.s32.totalorder %s11, 0
    %p141 = por %p139, %p140
    %p142 = scmp.ne.s32.totalorder %s131, %s134
    %p143 = scmp.eq.s32.totalorder %s16, 1
    %p144 = por %p142, %p143
    %p145 = scmp.ne.s32.totalorder %s134, %s135
    %p146 = scmp.eq.s32.totalorder %s16, 0
    %p147 = por %p145, %p146
    %p148 = scmp.ne.s32.totalorder %s134, %s135
    %p149 = scmp.eq.s32.totalorder %s17, 1
    %p150 = por %p148, %p149
    %p152 = scmp.ne.s32.totalorder %s135, %s151
    %p153 = scmp.eq.s32.totalorder %s17, 0
    %p154 = por %p152, %p153
    %s155 = ssub.s32 %s11, %s18
    %p156 = scmp.eq.s32.totalorder %s155, 0
    %s158 = sadd.s32 %s157, 1
    %s159 = scalar_select %p156, %s157, %s158
    %p162 = pneg %p156
    %p163 = scmp.eq.s32.totalorder %s11, 1
    %p164 = por %p162, %p163
    %p165 = scmp.ne.s32.totalorder %s157, %s160
    %p166 = scmp.eq.s32.totalorder %s11, 0
    %p167 = por %p165, %p166
    %p168 = scmp.ne.s32.totalorder %s157, %s160
    %p169 = scmp.eq.s32.totalorder %s16, 1
    %p170 = por %p168, %p169
    %p171 = scmp.ne.s32.totalorder %s160, %s161
    %p172 = scmp.eq.s32.totalorder %s16, 0
    %p173 = por %p171, %p172
    %p174 = scmp.ne.s32.totalorder %s160, %s161
    %p175 = scmp.eq.s32.totalorder %s17, 1
    %p176 = por %p174, %p175
    %p178 = scmp.ne.s32.totalorder %s161, %s177
    %p179 = scmp.eq.s32.totalorder %s17, 0
    %p180 = por %p178, %p179
    %p181 = scmp.le.s32.totalorder 1, %s11
    %p182 = scmp.lt.s32.totalorder %s11, 3
    %p183 = pnand %p181, %p182
    %p184 = pneg %p183
    // Predicated region
    $region9: #{_lambda_.3} parent=5 // pred_check
      _
    $region10: #{_lambda_.3} parent=5 // pred_check_branch
      %186 = sbr.rel (%p183) target = $region12
    $region11: #{_lambda_.3} parent=5 // pred_region
      %s187 = ssub.s32 %s11, 1
      // Predicated region
      $region13: #{_lambda_.3} parent=11 // pred_check
        %p188 = pneg %p94
      $region14: #{_lambda_.3} parent=11 // pred_check_branch
        %190 = sbr.rel (%p188) target = $region16
      $region15: #{_lambda_.3} parent=11 // pred_region
        _
      $region16: #{_lambda_.3} parent=11 // pred_fallthru
        _
      // Predicated region
      $region17: #{_lambda_.3} parent=11 // pred_check
        %p191 = pneg %p115
      $region18: #{_lambda_.3} parent=11 // pred_check_branch
        %193 = sbr.rel (%p191) target = $region20
      $region19: #{_lambda_.3} parent=11 // pred_region
        _
      $region20: #{_lambda_.3} parent=11 // pred_fallthru
        _
    $region12: #{_lambda_.3} parent=5 // pred_fallthru
      _
    %p194 = scmp.lt.s32.totalorder %s11, 2
    // Predicated region
    $region21: #{_lambda_.3} parent=5 // pred_check
      %p195 = pneg %p194
    $region22: #{_lambda_.3} parent=5 // pred_check_branch
      %197 = sbr.rel (%p195) target = $region24
    $region23: #{_lambda_.3} parent=5 // pred_region
      // Predicated region
      $region25: #{_lambda_.3} parent=23 // pred_check
        %p198 = pneg %p35
      $region26: #{_lambda_.3} parent=23 // pred_check_branch
        %200 = sbr.rel (%p198) target = $region28
      $region27: #{_lambda_.3} parent=23 // pred_region
        %p201 = scmp.lt.s32.totalorder %s11, 0
        %s202 = scalar_select %p201, %s11, 0
        %s203 = smul.u32 16, %s202
        %p204 = scmp.lt.s32.totalorder %s203, 15
        %s205 = scalar_select %p204, %s203, 15
        %s206 = smul.addr %s205, 8
        %s207 = scalar_lea.vmem %s0, %s206
        %p208 = scmp.lt.s32.totalorder %s11, 0
        %s209 = scalar_select %p208, %s11, 0
        %s210 = smul.u32 16, %s209
      $region28: #{_lambda_.3} parent=23 // pred_fallthru
        _
      // Predicated region
      $region29: #{_lambda_.3} parent=23 // pred_check
        %p211 = pneg %p67
      $region30: #{_lambda_.3} parent=23 // pred_check_branch
        %213 = sbr.rel (%p211) target = $region32
      $region31: #{_lambda_.3} parent=23 // pred_region
        %s214 = ssub.s32 %s11, 1
        %p215 = scmp.gt.s32.totalorder %s214, 0
        %s216 = scalar_select %p215, %s214, 0
        %s217 = smul.u32 16, %s216
        %p218 = scmp.lt.s32.totalorder %s217, 15
        %s219 = scalar_select %p218, %s217, 15
        %s220 = smul.addr %s219, 2
        %s221 = smul.addr %s220, 8
        %s222 = scalar_lea.vmem %s1, %s221
        %s223 = ssub.s32 %s11, 1
        %p224 = scmp.gt.s32.totalorder %s223, 0
        %s225 = scalar_select %p224, %s223, 0
        %s226 = smul.u32 16, %s225
      $region32: #{_lambda_.3} parent=23 // pred_fallthru
        _
      // Predicated region
      $region33: #{_lambda_.3} parent=23 // pred_check
        %p227 = pneg %p141
      $region34: #{_lambda_.3} parent=23 // pred_check_branch
        %229 = sbr.rel (%p227) target = $region36
      $region35: #{_lambda_.3} parent=23 // pred_region
        %p230 = scmp.lt.s32.totalorder %s11, 1
        %s231 = ssub.s32 %s11, 1
        %s232 = scalar_select %p230, %s11, %s231
        %s233 = smul.u32 16, %s232
        %p234 = scmp.lt.s32.totalorder %s233, 15
        %s235 = scalar_select %p234, %s233, 15
        %s236 = smul.addr %s235, 4
        %s237 = scalar_lea.vmem %s4, %s236
        %p238 = scmp.lt.s32.totalorder %s11, 1
        %s239 = ssub.s32 %s11, 1
        %s240 = scalar_select %p238, %s11, %s239
        %s241 = smul.u32 16, %s240
      $region36: #{_lambda_.3} parent=23 // pred_fallthru
        _
    $region24: #{_lambda_.3} parent=5 // pred_fallthru
      _
    %p242 = scmp.le.s32.totalorder 1, %s11
    %p243 = scmp.lt.s32.totalorder %s11, 3
    %p244 = pnand %p242, %p243
    %p245 = pneg %p244
    // Predicated region
    $region37: #{_lambda_.3} parent=5 // pred_check
      _
    $region38: #{_lambda_.3} parent=5 // pred_check_branch
      %247 = sbr.rel (%p244) target = $region40
    $region39: #{_lambda_.3} parent=5 // pred_region
      %s248 = ssub.s32 %s11, 1
      %p249 = scmp.lt.s32.totalorder %s16, 0
      %s250 = scalar_select %p249, %s16, 0
      %s251 = smul.u32 16, %s250
      %p252 = scmp.lt.s32.totalorder %s251, 15
      %s253 = scalar_select %p252, %s251, 15
      %s254 = smul.addr %s253, 8
      %s255 = scalar_lea.vmem %s0, %s254
      %p256 = pneg %p41
      %p257 = pneg %p38
      %s258 = ssub.s32 %s16, 1
      %p259 = scmp.gt.s32.totalorder %s258, 0
      %s260 = scalar_select %p259, %s258, 0
      %s261 = smul.u32 16, %s260
      %p262 = scmp.lt.s32.totalorder %s261, 15
      %s263 = scalar_select %p262, %s261, 15
      %s264 = smul.addr %s263, 2
      %s265 = smul.addr %s264, 8
      %s266 = scalar_lea.vmem %s1, %s265
      %p267 = pneg %p73
      %p268 = pneg %p70
      %p269 = pneg %p94
      %p270 = pneg %p91
      %p271 = pneg %p115
      %p272 = pneg %p112
      %p273 = scmp.lt.s32.totalorder %s16, 1
      %s274 = ssub.s32 %s16, 1
      %s275 = scalar_select %p273, %s16, %s274
      %s276 = smul.u32 16, %s275
      %p277 = scmp.lt.s32.totalorder %s276, 15
      %s278 = scalar_select %p277, %s276, 15
      %s279 = smul.addr %s278, 4
      %s280 = scalar_lea.vmem %s4, %s279
      %p281 = pneg %p147
      %p282 = pneg %p144
      %p283 = pneg %p173
      %p284 = pneg %p170
      %s285 = smul.u32 16, %s16
      %p286 = scmp.lt.s32.totalorder %s285, 31
      %s287 = scalar_select %p286, %s285, 31
      %s288 = smul.addr %s287, 4
      %s289 = scalar_lea.vmem %s5, %s288
      %p290 = scmp.lt.s32.totalorder %s16, 0
      %s291 = scalar_select %p290, %s16, 0
      %s292 = smul.u32 16, %s291
      %p293 = scmp.lt.s32.totalorder %s292, 15
      %s294 = scalar_select %p293, %s292, 15
      %s295 = smul.addr %s294, 8
      %s296 = scalar_lea.vmem %s0, %s295
      %p297 = scmp.lt.s32.totalorder %s16, 0
      %s298 = scalar_select %p297, %s16, 0
      %s299 = smul.u32 16, %s298
      %s300 = ssub.s32 %s16, 1
      %p301 = scmp.gt.s32.totalorder %s300, 0
      %s302 = scalar_select %p301, %s300, 0
      %s303 = smul.u32 16, %s302
      %p304 = scmp.lt.s32.totalorder %s303, 15
      %s305 = scalar_select %p304, %s303, 15
      %s306 = smul.addr %s305, 2
      %s307 = smul.addr %s306, 8
      %s308 = scalar_lea.vmem %s1, %s307
      %s309 = ssub.s32 %s16, 1
      %p310 = scmp.gt.s32.totalorder %s309, 0
      %s311 = scalar_select %p310, %s309, 0
      %s312 = smul.u32 16, %s311
      %p313 = scmp.lt.s32.totalorder %s16, 1
      %s314 = ssub.s32 %s16, 1
      %s315 = scalar_select %p313, %s16, %s314
      %s316 = smul.u32 16, %s315
      %p317 = scmp.lt.s32.totalorder %s316, 15
      %s318 = scalar_select %p317, %s316, 15
      %s319 = smul.addr %s318, 4
      %s320 = scalar_lea.vmem %s4, %s319
      %p321 = scmp.lt.s32.totalorder %s16, 1
      %s322 = ssub.s32 %s16, 1
      %s323 = scalar_select %p321, %s16, %s322
      %s324 = smul.u32 16, %s323
      %s325 = smul.u32 16, %s16
      %p326 = scmp.lt.s32.totalorder %s325, 31
      %s327 = scalar_select %p326, %s325, 31
      %s328 = smul.addr %s327, 4
      %s329 = scalar_lea.vmem %s5, %s328
      %s330 = smul.u32 16, %s16
      %v332 = vld [vmem:[%s320] sm:$0xf]
      %v333 = vld [vmem:[%s320 + $0x4] sm:$0xf]
      %v334 = vld [vmem:[%s320 + $0x8] sm:$0xf]
      %v335 = vld [vmem:[%s320 + $0xc] sm:$0xf]
      %v336 = vld [vmem:[%s320 + $0x10] sm:$0xf]
      %v337 = vld [vmem:[%s320 + $0x14] sm:$0xf]
      %v338 = vld [vmem:[%s320 + $0x18] sm:$0xf]
      %v339 = vld [vmem:[%s320 + $0x1c] sm:$0xf]
      %v340 = vld [vmem:[%s320 + $0x20] sm:$0xf]
      %v341 = vld [vmem:[%s320 + $0x24] sm:$0xf]
      %v342 = vld [vmem:[%s320 + $0x28] sm:$0xf]
      %v343 = vld [vmem:[%s320 + $0x2c] sm:$0xf]
      %v344 = vld [vmem:[%s320 + $0x30] sm:$0xf]
      %v345 = vld [vmem:[%s320 + $0x34] sm:$0xf]
      %v346 = vld [vmem:[%s320 + $0x38] sm:$0xf]
      %v347 = vld [vmem:[%s320 + $0x3c] sm:$0xf]
      %v348 = vunpack.c.l.bf16 %v332
      %v349 = vunpack.c.l.bf16 %v333
      %v350 = vunpack.c.l.bf16 %v334
      %v351 = vunpack.c.l.bf16 %v335
      %v352 = vunpack.c.l.bf16 %v336
      %v353 = vunpack.c.l.bf16 %v337
      %v354 = vunpack.c.l.bf16 %v338
      %v355 = vunpack.c.l.bf16 %v339
      %v356 = vunpack.c.l.bf16 %v340
      %v357 = vunpack.c.l.bf16 %v341
      %v358 = vunpack.c.l.bf16 %v342
      %v359 = vunpack.c.l.bf16 %v343
      %v360 = vunpack.c.l.bf16 %v344
      %v361 = vunpack.c.l.bf16 %v345
      %v362 = vunpack.c.l.bf16 %v346
      %v363 = vunpack.c.l.bf16 %v347
      %p364 = scmp.lt.s32.totalorder %s16, 1
      // Predicated region
      $region41: #{_lambda_.3} parent=39 // pred_check
        %p365 = pneg %p364
      $region42: #{_lambda_.3} parent=39 // pred_check_branch
        %367 = sbr.rel (%p365) target = $region44
      $region43: #{_lambda_.3} parent=39 // pred_region
        %v368 = vld [vmem:[%s296] sm:$0xff]
        %v369 = vld [vmem:[%s296 + $0x8] sm:$0xff]
        %v370 = vld [vmem:[%s296 + $0x10] sm:$0xff]
        %v371 = vld [vmem:[%s296 + $0x18] sm:$0xff]
        %v372 = vld [vmem:[%s296 + $0x20] sm:$0xff]
        %v373 = vld [vmem:[%s296 + $0x28] sm:$0xff]
        %v374 = vld [vmem:[%s296 + $0x30] sm:$0xff]
        %v375 = vld [vmem:[%s296 + $0x38] sm:$0xff]
        %v376 = vld [vmem:[%s296 + $0x40] sm:$0xff]
        %v377 = vld [vmem:[%s296 + $0x48] sm:$0xff]
        %v378 = vld [vmem:[%s296 + $0x50] sm:$0xff]
        %v379 = vld [vmem:[%s296 + $0x58] sm:$0xff]
        %v380 = vld [vmem:[%s296 + $0x60] sm:$0xff]
        %v381 = vld [vmem:[%s296 + $0x68] sm:$0xff]
        %v382 = vld [vmem:[%s296 + $0x70] sm:$0xff]
        %v383 = vld [vmem:[%s296 + $0x78] sm:$0xff]
        %v384 = vadd.f32 %v368, %v348
        %v385 = vadd.f32 %v369, %v349
        %v386 = vadd.f32 %v370, %v350
        %v387 = vadd.f32 %v371, %v351
        %v388 = vadd.f32 %v372, %v352
        %v389 = vadd.f32 %v373, %v353
        %v390 = vadd.f32 %v374, %v354
        %v391 = vadd.f32 %v375, %v355
        %v392 = vadd.f32 %v376, %v356
        %v393 = vadd.f32 %v377, %v357
        %v394 = vadd.f32 %v378, %v358
        %v395 = vadd.f32 %v379, %v359
        %v396 = vadd.f32 %v380, %v360
        %v397 = vadd.f32 %v381, %v361
        %v398 = vadd.f32 %v382, %v362
        %v399 = vadd.f32 %v383, %v363
        %v400 = vpack.c.bf16 %v385, %v384
        %v401 = vpack.c.bf16 %v387, %v386
        %v402 = vpack.c.bf16 %v389, %v388
        %v403 = vpack.c.bf16 %v391, %v390
        %v404 = vpack.c.bf16 %v393, %v392
        %v405 = vpack.c.bf16 %v395, %v394
        %v406 = vpack.c.bf16 %v397, %v396
        %v407 = vpack.c.bf16 %v399, %v398
        %v416 = vunpack.c.l.b16 %v400
        %v417 = vunpack.c.h.b16 %v400
        %v418 = vunpack.c.l.b16 %v401
        %v419 = vunpack.c.h.b16 %v401
        %v420 = vunpack.c.l.b16 %v402
        %v421 = vunpack.c.h.b16 %v402
        %v422 = vunpack.c.l.b16 %v403
        %v423 = vunpack.c.h.b16 %v403
        %v424 = vunpack.c.l.b16 %v404
        %v425 = vunpack.c.h.b16 %v404
        %v426 = vunpack.c.l.b16 %v405
        %v427 = vunpack.c.h.b16 %v405
        %v428 = vunpack.c.l.b16 %v406
        %v429 = vunpack.c.h.b16 %v406
        %v430 = vunpack.c.l.b16 %v407
        %v431 = vunpack.c.h.b16 %v407
        %v432 = vpack.c.b16 %v416, %v416
        %v433 = vpack.c.b16 %v417, %v417
        %v434 = vpack.c.b16 %v418, %v418
        %v435 = vpack.c.b16 %v419, %v419
        %v436 = vpack.c.b16 %v420, %v420
        %v437 = vpack.c.b16 %v421, %v421
        %v438 = vpack.c.b16 %v422, %v422
        %v439 = vpack.c.b16 %v423, %v423
        %v440 = vpack.c.b16 %v424, %v424
        %v441 = vpack.c.b16 %v425, %v425
        %v442 = vpack.c.b16 %v426, %v426
        %v443 = vpack.c.b16 %v427, %v427
        %v444 = vpack.c.b16 %v428, %v428
        %v445 = vpack.c.b16 %v429, %v429
        %v446 = vpack.c.b16 %v430, %v430
        %v447 = vpack.c.b16 %v431, %v431
        %464 = vst [vmem:[%s329] sm:$0xf] %v432
        %465 = vst [vmem:[%s329 + $0x4] sm:$0xf] %v433
        %466 = vst [vmem:[%s329 + $0x8] sm:$0xf] %v434
        %467 = vst [vmem:[%s329 + $0xc] sm:$0xf] %v435
        %468 = vst [vmem:[%s329 + $0x10] sm:$0xf] %v436
        %469 = vst [vmem:[%s329 + $0x14] sm:$0xf] %v437
        %470 = vst [vmem:[%s329 + $0x18] sm:$0xf] %v438
        %471 = vst [vmem:[%s329 + $0x1c] sm:$0xf] %v439
        %472 = vst [vmem:[%s329 + $0x20] sm:$0xf] %v440
        %473 = vst [vmem:[%s329 + $0x24] sm:$0xf] %v441
        %474 = vst [vmem:[%s329 + $0x28] sm:$0xf] %v442
        %475 = vst [vmem:[%s329 + $0x2c] sm:$0xf] %v443
        %476 = vst [vmem:[%s329 + $0x30] sm:$0xf] %v444
        %477 = vst [vmem:[%s329 + $0x34] sm:$0xf] %v445
        %478 = vst [vmem:[%s329 + $0x38] sm:$0xf] %v446
        %479 = vst [vmem:[%s329 + $0x3c] sm:$0xf] %v447
      $region44: #{_lambda_.3} parent=39 // pred_fallthru
        _
      %p480 = scmp.ge.s32.totalorder %s16, 1
      // Predicated region
      $region45: #{_lambda_.3} parent=39 // pred_check
        %p481 = pneg %p480
      $region46: #{_lambda_.3} parent=39 // pred_check_branch
        %483 = sbr.rel (%p481) target = $region48
      $region47: #{_lambda_.3} parent=39 // pred_region
        %v484 = vld [vmem:[%s308] sm:$0xff]
        %v485 = vld [vmem:[%s308 + $0x8] sm:$0xff]
        %v486 = vld [vmem:[%s308 + $0x10] sm:$0xff]
        %v487 = vld [vmem:[%s308 + $0x18] sm:$0xff]
        %v488 = vld [vmem:[%s308 + $0x20] sm:$0xff]
        %v489 = vld [vmem:[%s308 + $0x28] sm:$0xff]
        %v490 = vld [vmem:[%s308 + $0x30] sm:$0xff]
        %v491 = vld [vmem:[%s308 + $0x38] sm:$0xff]
        %v492 = vld [vmem:[%s308 + $0x40] sm:$0xff]
        %v493 = vld [vmem:[%s308 + $0x48] sm:$0xff]
        %v494 = vld [vmem:[%s308 + $0x50] sm:$0xff]
        %v495 = vld [vmem:[%s308 + $0x58] sm:$0xff]
        %v496 = vld [vmem:[%s308 + $0x60] sm:$0xff]
        %v497 = vld [vmem:[%s308 + $0x68] sm:$0xff]
        %v498 = vld [vmem:[%s308 + $0x70] sm:$0xff]
        %v499 = vld [vmem:[%s308 + $0x78] sm:$0xff]
        %v500 = vld [vmem:[%s308 + $0x80] sm:$0xff]
        %v501 = vld [vmem:[%s308 + $0x88] sm:$0xff]
        %v502 = vld [vmem:[%s308 + $0x90] sm:$0xff]
        %v503 = vld [vmem:[%s308 + $0x98] sm:$0xff]
        %v504 = vld [vmem:[%s308 + $0xa0] sm:$0xff]
        %v505 = vld [vmem:[%s308 + $0xa8] sm:$0xff]
        %v506 = vld [vmem:[%s308 + $0xb0] sm:$0xff]
        %v507 = vld [vmem:[%s308 + $0xb8] sm:$0xff]
        %v508 = vld [vmem:[%s308 + $0xc0] sm:$0xff]
        %v509 = vld [vmem:[%s308 + $0xc8] sm:$0xff]
        %v510 = vld [vmem:[%s308 + $0xd0] sm:$0xff]
        %v511 = vld [vmem:[%s308 + $0xd8] sm:$0xff]
        %v512 = vld [vmem:[%s308 + $0xe0] sm:$0xff]
        %v513 = vld [vmem:[%s308 + $0xe8] sm:$0xff]
        %v514 = vld [vmem:[%s308 + $0xf0] sm:$0xff]
        %v515 = vld [vmem:[%s308 + $0xf8] sm:$0xff]
        %v516 = vpack.c.bf16 %v486, %v484
        %v517 = vpack.c.bf16 %v487, %v485
        %v518 = vpack.c.bf16 %v490, %v488
        %v519 = vpack.c.bf16 %v491, %v489
        %v520 = vpack.c.bf16 %v494, %v492
        %v521 = vpack.c.bf16 %v495, %v493
        %v522 = vpack.c.bf16 %v498, %v496
        %v523 = vpack.c.bf16 %v499, %v497
        %v524 = vpack.c.bf16 %v502, %v500
        %v525 = vpack.c.bf16 %v503, %v501
        %v526 = vpack.c.bf16 %v506, %v504
        %v527 = vpack.c.bf16 %v507, %v505
        %v528 = vpack.c.bf16 %v510, %v508
        %v529 = vpack.c.bf16 %v511, %v509
        %v530 = vpack.c.bf16 %v514, %v512
        %v531 = vpack.c.bf16 %v515, %v513
        %v532 = vld [vmem:[%s2] sm:$0xf]
        %v533 = vld [vmem:[%s2 + $0x4] sm:$0xf]
        %v534 = vld [vmem:[%s2 + $0x8] sm:$0xf]
        %v535 = vld [vmem:[%s2 + $0xc] sm:$0xf]
        %v536 = vld [vmem:[%s2 + $0x10] sm:$0xf]
        %v537 = vld [vmem:[%s2 + $0x14] sm:$0xf]
        %v538 = vld [vmem:[%s2 + $0x18] sm:$0xf]
        %v539 = vld [vmem:[%s2 + $0x1c] sm:$0xf]
        %v540 = vld [vmem:[%s2 + $0x20] sm:$0xf]
        %v541 = vld [vmem:[%s2 + $0x24] sm:$0xf]
        %v542 = vld [vmem:[%s2 + $0x28] sm:$0xf]
        %v543 = vld [vmem:[%s2 + $0x2c] sm:$0xf]
        %v544 = vld [vmem:[%s2 + $0x30] sm:$0xf]
        %v545 = vld [vmem:[%s2 + $0x34] sm:$0xf]
        %v546 = vld [vmem:[%s2 + $0x38] sm:$0xf]
        %v547 = vld [vmem:[%s2 + $0x3c] sm:$0xf]
        %v548 = vld [vmem:[%s2 + $0x40] sm:$0xf]
        %v549 = vld [vmem:[%s2 + $0x44] sm:$0xf]
        %v550 = vld [vmem:[%s2 + $0x48] sm:$0xf]
        %v551 = vld [vmem:[%s2 + $0x4c] sm:$0xf]
        %v552 = vld [vmem:[%s2 + $0x50] sm:$0xf]
        %v553 = vld [vmem:[%s2 + $0x54] sm:$0xf]
        %v554 = vld [vmem:[%s2 + $0x58] sm:$0xf]
        %v555 = vld [vmem:[%s2 + $0x5c] sm:$0xf]
        %v556 = vld [vmem:[%s2 + $0x60] sm:$0xf]
        %v557 = vld [vmem:[%s2 + $0x64] sm:$0xf]
        %v558 = vld [vmem:[%s2 + $0x68] sm:$0xf]
        %v559 = vld [vmem:[%s2 + $0x6c] sm:$0xf]
        %v560 = vld [vmem:[%s2 + $0x70] sm:$0xf]
        %v561 = vld [vmem:[%s2 + $0x74] sm:$0xf]
        %v562 = vld [vmem:[%s2 + $0x78] sm:$0xf]
        %v563 = vld [vmem:[%s2 + $0x7c] sm:$0xf]
        %v564 = vld [vmem:[%s3] sm:$0x1]
        %v566 = vlaneseq
        %v567 = vshrl.u32 %v566, 7
        %v568 = vsub.s32 0, %v567
        %v569 = vrot.slane %v564, %v568
        %v603 = vunpack.c.l.b16 %v532
        %v604 = vunpack.c.l.b16 %v533
        %v605 = vunpack.c.l.b16 %v534
        %v606 = vunpack.c.l.b16 %v535
        %v607 = vunpack.c.l.b16 %v536
        %v608 = vunpack.c.l.b16 %v537
        %v609 = vunpack.c.l.b16 %v538
        %v610 = vunpack.c.l.b16 %v539
        %v611 = vunpack.c.l.b16 %v540
        %v612 = vunpack.c.l.b16 %v541
        %v613 = vunpack.c.l.b16 %v542
        %v614 = vunpack.c.l.b16 %v543
        %v615 = vunpack.c.l.b16 %v544
        %v616 = vunpack.c.l.b16 %v545
        %v617 = vunpack.c.l.b16 %v546
        %v618 = vunpack.c.l.b16 %v547
        %v619 = vunpack.c.l.b16 %v548
        %v620 = vunpack.c.l.b16 %v549
        %v621 = vunpack.c.l.b16 %v550
        %v622 = vunpack.c.l.b16 %v551
        %v623 = vunpack.c.l.b16 %v552
        %v624 = vunpack.c.l.b16 %v553
        %v625 = vunpack.c.l.b16 %v554
        %v626 = vunpack.c.l.b16 %v555
        %v627 = vunpack.c.l.b16 %v556
        %v628 = vunpack.c.l.b16 %v557
        %v629 = vunpack.c.l.b16 %v558
        %v630 = vunpack.c.l.b16 %v559
        %v631 = vunpack.c.l.b16 %v560
        %v632 = vunpack.c.l.b16 %v561
        %v633 = vunpack.c.l.b16 %v562
        %v634 = vunpack.c.l.b16 %v563
        %v635 = vpack.c.b16 %v604, %v603
        %v636 = vpack.c.b16 %v606, %v605
        %v637 = vpack.c.b16 %v608, %v607
        %v638 = vpack.c.b16 %v610, %v609
        %v639 = vpack.c.b16 %v612, %v611
        %v640 = vpack.c.b16 %v614, %v613
        %v641 = vpack.c.b16 %v616, %v615
        %v642 = vpack.c.b16 %v618, %v617
        %v643 = vpack.c.b16 %v620, %v619
        %v644 = vpack.c.b16 %v622, %v621
        %v645 = vpack.c.b16 %v624, %v623
        %v646 = vpack.c.b16 %v626, %v625
        %v647 = vpack.c.b16 %v628, %v627
        %v648 = vpack.c.b16 %v630, %v629
        %v649 = vpack.c.b16 %v632, %v631
        %v650 = vpack.c.b16 %v634, %v633
        %667 = vmatprep.subr.bf16.mxu0 0
        %668 = vmatpush1.bf16.msra.mxu0 %v635
        %669 = vmatprep.subr.bf16.mxu0 0
        %670 = vmatpush1.bf16.msra.mxu0 %v636
        %671 = vmatprep.subr.bf16.mxu0 0
        %672 = vmatpush1.bf16.msra.mxu0 %v637
        %673 = vmatprep.subr.bf16.mxu0 0
        %674 = vmatpush1.bf16.msra.mxu0 %v638
        %675 = vmatprep.subr.bf16.mxu0 0
        %676 = vmatpush1.bf16.msra.mxu0 %v639
        %677 = vmatprep.subr.bf16.mxu0 0
        %678 = vmatpush1.bf16.msra.mxu0 %v640
        %679 = vmatprep.subr.bf16.mxu0 0
        %680 = vmatpush1.bf16.msra.mxu0 %v641
        %681 = vmatprep.subr.bf16.mxu0 0
        %682 = vmatpush1.bf16.msra.mxu0 %v642
        %683 = vmatprep.subr.bf16.mxu0 0
        %684 = vmatpush1.bf16.msra.mxu0 %v643
        %685 = vmatprep.subr.bf16.mxu0 0
        %686 = vmatpush1.bf16.msra.mxu0 %v644
        %687 = vmatprep.subr.bf16.mxu0 0
        %688 = vmatpush1.bf16.msra.mxu0 %v645
        %689 = vmatprep.subr.bf16.mxu0 0
        %690 = vmatpush1.bf16.msra.mxu0 %v646
        %691 = vmatprep.subr.bf16.mxu0 0
        %692 = vmatpush1.bf16.msra.mxu0 %v647
        %693 = vmatprep.subr.bf16.mxu0 0
        %694 = vmatpush1.bf16.msra.mxu0 %v648
        %695 = vmatprep.subr.bf16.mxu0 0
        %696 = vmatpush1.bf16.msra.mxu0 %v649
        %697 = vmatprep.subr.bf16.mxu0 0
        %698 = vmatpush1.bf16.msra.mxu0 %v650
        %699 = vmatprep.mubr.bf16.mxu0 %v517
        %700 = vmatmul.mubr.bf16.gmra.mrb[0].mxu0 %v516
        %v701 = vpop.f32.mrb[0].mxu0
        %v702 = vadd.f32 %v569, %v701
        %v703 = vpop.f32.mrb[0].mxu0
        %v704 = vpop.f32.mrb[0].mxu0
        %v705 = vadd.f32 %v569, %v704
        %v706 = vpop.f32.mrb[0].mxu0
        %707 = vmatprep.mubr.bf16.mxu0 %v519
        %708 = vmatmul.mubr.bf16.gmra.mrb[0].mxu0 %v518
        %v709 = vpop.f32.mrb[0].mxu0
        %v710 = vadd.f32 %v569, %v709
        %v711 = vpop.f32.mrb[0].mxu0
        %v712 = vpop.f32.mrb[0].mxu0
        %v713 = vadd.f32 %v569, %v712
        %v714 = vpop.f32.mrb[0].mxu0
        %715 = vmatprep.mubr.bf16.mxu0 %v521
        %716 = vmatmul.mubr.bf16.gmra.mrb[0].mxu0 %v520
        %v717 = vpop.f32.mrb[0].mxu0
        %v718 = vadd.f32 %v569, %v717
        %v719 = vpop.f32.mrb[0].mxu0
        %v720 = vpop.f32.mrb[0].mxu0
        %v721 = vadd.f32 %v569, %v720
        %v722 = vpop.f32.mrb[0].mxu0
        %723 = vmatprep.mubr.bf16.mxu0 %v523
        %724 = vmatmul.mubr.bf16.gmra.mrb[0].mxu0 %v522
        %v725 = vpop.f32.mrb[0].mxu0
        %v726 = vadd.f32 %v569, %v725
        %v727 = vpop.f32.mrb[0].mxu0
        %v728 = vpop.f32.mrb[0].mxu0
        %v729 = vadd.f32 %v569, %v728
        %v730 = vpop.f32.mrb[0].mxu0
        %731 = vmatprep.mubr.bf16.mxu0 %v525
        %732 = vmatmul.mubr.bf16.gmra.mrb[0].mxu0 %v524
        %v733 = vpop.f32.mrb[0].mxu0
        %v734 = vadd.f32 %v569, %v733
        %v735 = vpop.f32.mrb[0].mxu0
        %v736 = vpop.f32.mrb[0].mxu0
        %v737 = vadd.f32 %v569, %v736
        %v738 = vpop.f32.mrb[0].mxu0
        %739 = vmatprep.mubr.bf16.mxu0 %v527
        %740 = vmatmul.mubr.bf16.gmra.mrb[0].mxu0 %v526
        %v741 = vpop.f32.mrb[0].mxu0
        %v742 = vadd.f32 %v569, %v741
        %v743 = vpop.f32.mrb[0].mxu0
        %v744 = vpop.f32.mrb[0].mxu0
        %v745 = vadd.f32 %v569, %v744
        %v746 = vpop.f32.mrb[0].mxu0
        %747 = vmatprep.mubr.bf16.mxu0 %v529
        %748 = vmatmul.mubr.bf16.gmra.mrb[0].mxu0 %v528
        %v749 = vpop.f32.mrb[0].mxu0
        %v750 = vadd.f32 %v569, %v749
        %v751 = vpop.f32.mrb[0].mxu0
        %v752 = vpop.f32.mrb[0].mxu0
        %v753 = vadd.f32 %v569, %v752
        %v754 = vpop.f32.mrb[0].mxu0
        %755 = vmatprep.mubr.bf16.mxu0 %v531
        %756 = vmatmul.mubr.bf16.gmra.mrb[0].mxu0 %v530
        %v757 = vpop.f32.mrb[0].mxu0
        %v758 = vadd.f32 %v569, %v757
        %v759 = vpop.f32.mrb[0].mxu0
        %v760 = vpop.f32.mrb[0].mxu0
        %v761 = vadd.f32 %v569, %v760
        %v762 = vpop.f32.mrb[0].mxu0
        %763 = vdwg.mxu0
        %v764 = vadd.f32 %v702, %v348
        %v765 = vadd.f32 %v705, %v349
        %v766 = vadd.f32 %v710, %v350
        %v767 = vadd.f32 %v713, %v351
        %v768 = vadd.f32 %v718, %v352
        %v769 = vadd.f32 %v721, %v353
        %v770 = vadd.f32 %v726, %v354
        %v771 = vadd.f32 %v729, %v355
        %v772 = vadd.f32 %v734, %v356
        %v773 = vadd.f32 %v737, %v357
        %v774 = vadd.f32 %v742, %v358
        %v775 = vadd.f32 %v745, %v359
        %v776 = vadd.f32 %v750, %v360
        %v777 = vadd.f32 %v753, %v361
        %v778 = vadd.f32 %v758, %v362
        %v779 = vadd.f32 %v761, %v363
        %v780 = vpack.c.bf16 %v765, %v764
        %v781 = vpack.c.bf16 %v767, %v766
        %v782 = vpack.c.bf16 %v769, %v768
        %v783 = vpack.c.bf16 %v771, %v770
        %v784 = vpack.c.bf16 %v773, %v772
        %v785 = vpack.c.bf16 %v775, %v774
        %v786 = vpack.c.bf16 %v777, %v776
        %v787 = vpack.c.bf16 %v779, %v778
        %v796 = vunpack.c.l.b16 %v780
        %v797 = vunpack.c.h.b16 %v780
        %v798 = vunpack.c.l.b16 %v781
        %v799 = vunpack.c.h.b16 %v781
        %v800 = vunpack.c.l.b16 %v782
        %v801 = vunpack.c.h.b16 %v782
        %v802 = vunpack.c.l.b16 %v783
        %v803 = vunpack.c.h.b16 %v783
        %v804 = vunpack.c.l.b16 %v784
        %v805 = vunpack.c.h.b16 %v784
        %v806 = vunpack.c.l.b16 %v785
        %v807 = vunpack.c.h.b16 %v785
        %v808 = vunpack.c.l.b16 %v786
        %v809 = vunpack.c.h.b16 %v786
        %v810 = vunpack.c.l.b16 %v787
        %v811 = vunpack.c.h.b16 %v787
        %v812 = vpack.c.b16 %v796, %v796
        %v813 = vpack.c.b16 %v797, %v797
        %v814 = vpack.c.b16 %v798, %v798
        %v815 = vpack.c.b16 %v799, %v799
        %v816 = vpack.c.b16 %v800, %v800
        %v817 = vpack.c.b16 %v801, %v801
        %v818 = vpack.c.b16 %v802, %v802
        %v819 = vpack.c.b16 %v803, %v803
        %v820 = vpack.c.b16 %v804, %v804
        %v821 = vpack.c.b16 %v805, %v805
        %v822 = vpack.c.b16 %v806, %v806
        %v823 = vpack.c.b16 %v807, %v807
        %v824 = vpack.c.b16 %v808, %v808
        %v825 = vpack.c.b16 %v809, %v809
        %v826 = vpack.c.b16 %v810, %v810
        %v827 = vpack.c.b16 %v811, %v811
        %844 = vst [vmem:[%s329] sm:$0xf] %v812
        %845 = vst [vmem:[%s329 + $0x4] sm:$0xf] %v813
        %846 = vst [vmem:[%s329 + $0x8] sm:$0xf] %v814
        %847 = vst [vmem:[%s329 + $0xc] sm:$0xf] %v815
        %848 = vst [vmem:[%s329 + $0x10] sm:$0xf] %v816
        %849 = vst [vmem:[%s329 + $0x14] sm:$0xf] %v817
        %850 = vst [vmem:[%s329 + $0x18] sm:$0xf] %v818
        %851 = vst [vmem:[%s329 + $0x1c] sm:$0xf] %v819
        %852 = vst [vmem:[%s329 + $0x20] sm:$0xf] %v820
        %853 = vst [vmem:[%s329 + $0x24] sm:$0xf] %v821
        %854 = vst [vmem:[%s329 + $0x28] sm:$0xf] %v822
        %855 = vst [vmem:[%s329 + $0x2c] sm:$0xf] %v823
        %856 = vst [vmem:[%s329 + $0x30] sm:$0xf] %v824
        %857 = vst [vmem:[%s329 + $0x34] sm:$0xf] %v825
        %858 = vst [vmem:[%s329 + $0x38] sm:$0xf] %v826
        %859 = vst [vmem:[%s329 + $0x3c] sm:$0xf] %v827
      $region48: #{_lambda_.3} parent=39 // pred_fallthru
        _
      %s860 = smul.u32 16, %s16
      %p861 = scmp.lt.s32.totalorder %s860, 31
      %s862 = scalar_select %p861, %s860, 31
      %s863 = smul.addr %s862, 4
      %s864 = scalar_lea.vmem %s5, %s863
      // Predicated region
      $region49: #{_lambda_.3} parent=39 // pred_check
        %p865 = pneg %p170
      $region50: #{_lambda_.3} parent=39 // pred_check_branch
        %867 = sbr.rel (%p865) target = $region52
      $region51: #{_lambda_.3} parent=39 // pred_region
        %s868 = smul.u32 16, %s16
      $region52: #{_lambda_.3} parent=39 // pred_fallthru
        _
    $region40: #{_lambda_.3} parent=5 // pred_fallthru
      _
    %p869 = scmp.le.s32.totalorder 2, %s11
    // Predicated region
    $region53: #{_lambda_.3} parent=5 // pred_check
      %p870 = pneg %p869
    $region54: #{_lambda_.3} parent=5 // pred_check_branch
      %872 = sbr.rel (%p870) target = $region56
    $region55: #{_lambda_.3} parent=5 // pred_region
      %s873 = ssub.s32 %s11, 2
      // Predicated region
      $region57: #{_lambda_.3} parent=55 // pred_check
        %p874 = pneg %p176
      $region58: #{_lambda_.3} parent=55 // pred_check_branch
        %876 = sbr.rel (%p874) target = $region60
      $region59: #{_lambda_.3} parent=55 // pred_region
        %s877 = smul.u32 16, %s17
        %p878 = scmp.lt.s32.totalorder %s877, 31
        %s879 = scalar_select %p878, %s877, 31
        %s880 = smul.addr %s879, 4
        %s881 = scalar_lea.vmem %s5, %s880
      $region60: #{_lambda_.3} parent=55 // pred_fallthru
        _
    $region56: #{_lambda_.3} parent=5 // pred_fallthru
      _
  $region6: #{_lambda_.3} parent=0 // loop_footer
    %s15 = sadd.s32 1, %s11
  $region7: #{_lambda_.3} parent=0 // loop_footer_branch
    %10 = sbr.rel target = $region3
  $region8: #{_lambda_.3} parent=0 // loop_exit
    _

// kernel: _lambda_.5
$region0: #{_lambda_.5}
  #allocation0 [shape = 'u32[]', space=smem, size = 0x4, offset = 0x4, fixed_abs, tag = 'smem constant byte address 0x4 - core index']
  #allocation1 [shape = 'u32[144,128]{1,0:T(1,128)}', space=vmem, size = 0x12000, scoped, tag = 'internal scratch']
  %s0 = inlined_call_operand.vmem [shape: bf16[128,128], index: 0, kind: input, shape index: {}]
  %s1 = inlined_call_operand.vmem [shape: bf16[128,128], index: 1, kind: input, shape index: {}]
  %s2 = inlined_call_operand.vmem [shape: bf16[128,128], index: 2, kind: input, shape index: {}]
  %s3 = inlined_call_operand.vmem [shape: f32[1,128], index: 3, kind: input, shape index: {}]
  %s4 = inlined_call_operand.vmem [shape: f32[1,128], index: 4, kind: input, shape index: {}]
  %s5 = inlined_call_operand.vmem [shape: f32[1,128], index: 5, kind: input, shape index: {}]
  %s6 = inlined_call_operand.vmem [shape: bf16[128,128], index: 6, kind: input, shape index: {}]
  %s7 = inlined_call_operand.vmem [shape: f32[1,128], index: 7, kind: input, shape index: {}]
  %s8 = inlined_call_operand.vmem [shape: f32[1,128], index: 8, kind: input, shape index: {}]
  %s9 = inlined_call_operand.vmem [shape: f32[1,128], index: 9, kind: input, shape index: {}]
  %s10 = inlined_call_operand.vmem [shape: f32[1,128], index: 10, kind: input, shape index: {}]
  %s11 = inlined_call_operand.vmem [shape: f32[1,128], index: 11, kind: input, shape index: {}]
  %s12 = inlined_call_operand.vmem [shape: f32[128,128], index: 12, kind: output, shape index: {}]
  %s13 = sld [smem:[#allocation0]]
  $region58: #{_lambda_.5} parent=0
    _
  %s15 = ssub.s32 1, %s13
  %s16 = scalar_select 0, %s15, %s13
  // Predicated region
  $region2: #{_lambda_.5} parent=0 // pred_check
    _
  $region3: #{_lambda_.5} parent=0 // pred_check_branch
    %18 = sbr.rel (0) target = $region5
  $region4: #{_lambda_.5} parent=0 // pred_region
    _
  $region5: #{_lambda_.5} parent=0 // pred_fallthru
    _
  // Predicated region
  $region6: #{_lambda_.5} parent=0 // pred_check
    _
  $region7: #{_lambda_.5} parent=0 // pred_check_branch
    %20 = sbr.rel (0) target = $region9
  $region8: #{_lambda_.5} parent=0 // pred_region
    _
  $region9: #{_lambda_.5} parent=0 // pred_fallthru
    _
  // Predicated region
  $region10: #{_lambda_.5} parent=0 // pred_check
    _
  $region11: #{_lambda_.5} parent=0 // pred_check_branch
    %22 = sbr.rel (0) target = $region13
  $region12: #{_lambda_.5} parent=0 // pred_region
    _
  $region13: #{_lambda_.5} parent=0 // pred_fallthru
    _
  // Predicated region
  $region14: #{_lambda_.5} parent=0 // pred_check
    _
  $region15: #{_lambda_.5} parent=0 // pred_check_branch
    %24 = sbr.rel (0) target = $region17
  $region16: #{_lambda_.5} parent=0 // pred_region
    _
  $region17: #{_lambda_.5} parent=0 // pred_fallthru
    _
  // Predicated region
  $region18: #{_lambda_.5} parent=0 // pred_check
    _
  $region19: #{_lambda_.5} parent=0 // pred_check_branch
    %26 = sbr.rel (0) target = $region21
  $region20: #{_lambda_.5} parent=0 // pred_region
    _
  $region21: #{_lambda_.5} parent=0 // pred_fallthru
    _
  // Predicated region
  $region22: #{_lambda_.5} parent=0 // pred_check
    _
  $region23: #{_lambda_.5} parent=0 // pred_check_branch
    %28 = sbr.rel (0) target = $region25
  $region24: #{_lambda_.5} parent=0 // pred_region
    _
  $region25: #{_lambda_.5} parent=0 // pred_fallthru
    _
  // Predicated region
  $region26: #{_lambda_.5} parent=0 // pred_check
    _
  $region27: #{_lambda_.5} parent=0 // pred_check_branch
    %30 = sbr.rel (0) target = $region29
  $region28: #{_lambda_.5} parent=0 // pred_region
    _
  $region29: #{_lambda_.5} parent=0 // pred_fallthru
    _
  // Predicated region
  $region30: #{_lambda_.5} parent=0 // pred_check
    _
  $region31: #{_lambda_.5} parent=0 // pred_check_branch
    %32 = sbr.rel (0) target = $region33
  $region32: #{_lambda_.5} parent=0 // pred_region
    _
  $region33: #{_lambda_.5} parent=0 // pred_fallthru
    _
  // Predicated region
  $region34: #{_lambda_.5} parent=0 // pred_check
    _
  $region35: #{_lambda_.5} parent=0 // pred_check_branch
    %34 = sbr.rel (0) target = $region37
  $region36: #{_lambda_.5} parent=0 // pred_region
    _
  $region37: #{_lambda_.5} parent=0 // pred_fallthru
    _
  // Predicated region
  $region38: #{_lambda_.5} parent=0 // pred_check
    _
  $region39: #{_lambda_.5} parent=0 // pred_check_branch
    %36 = sbr.rel (0) target = $region41
  $region40: #{_lambda_.5} parent=0 // pred_region
    _
  $region41: #{_lambda_.5} parent=0 // pred_fallthru
    _
  // Predicated region
  $region42: #{_lambda_.5} parent=0 // pred_check
    _
  $region43: #{_lambda_.5} parent=0 // pred_check_branch
    %38 = sbr.rel (0) target = $region45
  $region44: #{_lambda_.5} parent=0 // pred_region
    _
  $region45: #{_lambda_.5} parent=0 // pred_fallthru
    _
  // Predicated region
  $region46: #{_lambda_.5} parent=0 // pred_check
    _
  $region47: #{_lambda_.5} parent=0 // pred_check_branch
    %40 = sbr.rel (0) target = $region49
  $region48: #{_lambda_.5} parent=0 // pred_region
    _
  $region49: #{_lambda_.5} parent=0 // pred_fallthru
    _
  %v42 = vld [vmem:[%s10] sm:$0x1]
  %v43 = vld [vmem:[%s0] sm:$0xf]
  %v44 = vld [vmem:[%s0 + $0x4] sm:$0xf]
  %v45 = vld [vmem:[%s0 + $0x8] sm:$0xf]
  %v46 = vld [vmem:[%s0 + $0xc] sm:$0xf]
  %v47 = vld [vmem:[%s0 + $0x10] sm:$0xf]
  %v48 = vld [vmem:[%s0 + $0x14] sm:$0xf]
  %v49 = vld [vmem:[%s0 + $0x18] sm:$0xf]
  %v50 = vld [vmem:[%s0 + $0x1c] sm:$0xf]
  %v51 = vld [vmem:[%s0 + $0x20] sm:$0xf]
  %v52 = vld [vmem:[%s0 + $0x24] sm:$0xf]
  %v53 = vld [vmem:[%s0 + $0x28] sm:$0xf]
  %v54 = vld [vmem:[%s0 + $0x2c] sm:$0xf]
  %v55 = vld [vmem:[%s0 + $0x30] sm:$0xf]
  %v56 = vld [vmem:[%s0 + $0x34] sm:$0xf]
  %v57 = vld [vmem:[%s0 + $0x38] sm:$0xf]
  %v58 = vld [vmem:[%s0 + $0x3c] sm:$0xf]
  %v59 = vld [vmem:[%s2] sm:$0xf]
  %v60 = vld [vmem:[%s2 + $0x4] sm:$0xf]
  %v61 = vld [vmem:[%s2 + $0x8] sm:$0xf]
  %v62 = vld [vmem:[%s2 + $0xc] sm:$0xf]
  %v63 = vld [vmem:[%s2 + $0x10] sm:$0xf]
  %v64 = vld [vmem:[%s2 + $0x14] sm:$0xf]
  %v65 = vld [vmem:[%s2 + $0x18] sm:$0xf]
  %v66 = vld [vmem:[%s2 + $0x1c] sm:$0xf]
  %v67 = vld [vmem:[%s2 + $0x20] sm:$0xf]
  %v68 = vld [vmem:[%s2 + $0x24] sm:$0xf]
  %v69 = vld [vmem:[%s2 + $0x28] sm:$0xf]
  %v70 = vld [vmem:[%s2 + $0x2c] sm:$0xf]
  %v71 = vld [vmem:[%s2 + $0x30] sm:$0xf]
  %v72 = vld [vmem:[%s2 + $0x34] sm:$0xf]
  %v73 = vld [vmem:[%s2 + $0x38] sm:$0xf]
  %v74 = vld [vmem:[%s2 + $0x3c] sm:$0xf]
  %v75 = vld [vmem:[%s3] sm:$0x1]
  %v76 = vld [vmem:[%s4] sm:$0x1]
  %v77 = vld [vmem:[%s5] sm:$0x1]
  %v79 = vlaneseq
  %v80 = vshrl.u32 %v79, 7
  %v81 = vsub.s32 0, %v80
  %v82 = vrot.slane %v75, %v81
  %v100 = vunpack.c.l.b16 %v43
  %v101 = vunpack.c.l.b16 %v44
  %v102 = vunpack.c.l.b16 %v45
  %v103 = vunpack.c.l.b16 %v46
  %v104 = vunpack.c.l.b16 %v47
  %v105 = vunpack.c.l.b16 %v48
  %v106 = vunpack.c.l.b16 %v49
  %v107 = vunpack.c.l.b16 %v50
  %v108 = vunpack.c.l.b16 %v51
  %v109 = vunpack.c.l.b16 %v52
  %v110 = vunpack.c.l.b16 %v53
  %v111 = vunpack.c.l.b16 %v54
  %v112 = vunpack.c.l.b16 %v55
  %v113 = vunpack.c.l.b16 %v56
  %v114 = vunpack.c.l.b16 %v57
  %v115 = vunpack.c.l.b16 %v58
  %v116 = vpack.c.b16 %v101, %v100
  %v117 = vpack.c.b16 %v103, %v102
  %v118 = vpack.c.b16 %v105, %v104
  %v119 = vpack.c.b16 %v107, %v106
  %v120 = vpack.c.b16 %v109, %v108
  %v121 = vpack.c.b16 %v111, %v110
  %v122 = vpack.c.b16 %v113, %v112
  %v123 = vpack.c.b16 %v115, %v114
  %v148 = vunpack.c.l.b16 %v59
  %v149 = vunpack.c.l.b16 %v60
  %v150 = vunpack.c.l.b16 %v61
  %v151 = vunpack.c.l.b16 %v62
  %v152 = vunpack.c.l.b16 %v63
  %v153 = vunpack.c.l.b16 %v64
  %v154 = vunpack.c.l.b16 %v65
  %v155 = vunpack.c.l.b16 %v66
  %v156 = vunpack.c.l.b16 %v67
  %v157 = vunpack.c.l.b16 %v68
  %v158 = vunpack.c.l.b16 %v69
  %v159 = vunpack.c.l.b16 %v70
  %v160 = vunpack.c.l.b16 %v71
  %v161 = vunpack.c.l.b16 %v72
  %v162 = vunpack.c.l.b16 %v73
  %v163 = vunpack.c.l.b16 %v74
  %v164 = vpack.c.b16 %v149, %v148
  %v165 = vpack.c.b16 %v151, %v150
  %v166 = vpack.c.b16 %v153, %v152
  %v167 = vpack.c.b16 %v155, %v154
  %v168 = vpack.c.b16 %v157, %v156
  %v169 = vpack.c.b16 %v159, %v158
  %v170 = vpack.c.b16 %v161, %v160
  %v171 = vpack.c.b16 %v163, %v162
  %180 = vmatprep.subr.bf16.mxu0 0
  %181 = vmatpush1.bf16.msra.mxu0 %v164
  %182 = vmatprep.subr.bf16.mxu0 0
  %183 = vmatpush1.bf16.msra.mxu0 %v165
  %184 = vmatprep.subr.bf16.mxu0 0
  %185 = vmatpush1.bf16.msra.mxu0 %v166
  %186 = vmatprep.subr.bf16.mxu0 0
  %187 = vmatpush1.bf16.msra.mxu0 %v167
  %188 = vmatprep.subr.bf16.mxu0 0
  %189 = vmatpush1.bf16.msra.mxu0 %v168
  %190 = vmatprep.subr.bf16.mxu0 0
  %191 = vmatpush1.bf16.msra.mxu0 %v169
  %192 = vmatprep.subr.bf16.mxu0 0
  %193 = vmatpush1.bf16.msra.mxu0 %v170
  %194 = vmatprep.subr.bf16.mxu0 0
  %195 = vmatpush1.bf16.msra.mxu0 %v171
  %196 = vmatprep.subr.bf16.mxu0 0
  %197 = vmatpush1.bf16.msra.mxu0 0
  %198 = vmatprep.subr.bf16.mxu0 0
  %199 = vmatpush1.bf16.msra.mxu0 0
  %200 = vmatprep.subr.bf16.mxu0 0
  %201 = vmatpush1.bf16.msra.mxu0 0
  %202 = vmatprep.subr.bf16.mxu0 0
  %203 = vmatpush1.bf16.msra.mxu0 0
  %204 = vmatprep.subr.bf16.mxu0 0
  %205 = vmatpush1.bf16.msra.mxu0 0
  %206 = vmatprep.subr.bf16.mxu0 0
  %207 = vmatpush1.bf16.msra.mxu0 0
  %208 = vmatprep.subr.bf16.mxu0 0
  %209 = vmatpush1.bf16.msra.mxu0 0
  %210 = vmatprep.subr.bf16.mxu0 0
  %211 = vmatpush1.bf16.msra.mxu0 0
  %212 = vmatprep.mubr.bf16.mxu0 0
  %213 = vmatmul.mubr.bf16.gmra.mrb[0].mxu0 %v116
  %v214 = vpop.f32.mrb[0].mxu0
  %v215 = vadd.f32 %v82, %v214
  %v216 = vpop.f32.mrb[0].mxu0
  %v217 = vpop.f32.mrb[0].mxu0
  %v218 = vadd.f32 %v82, %v217
  %v219 = vpop.f32.mrb[0].mxu0
  %220 = vmatprep.mubr.bf16.mxu0 0
  %221 = vmatmul.mubr.bf16.gmra.mrb[0].mxu0 %v117
  %v222 = vpop.f32.mrb[0].mxu0
  %v223 = vadd.f32 %v82, %v222
  %v224 = vpop.f32.mrb[0].mxu0
  %v225 = vpop.f32.mrb[0].mxu0
  %v226 = vadd.f32 %v82, %v225
  %v227 = vpop.f32.mrb[0].mxu0
  %228 = vmatprep.mubr.bf16.mxu0 0
  %229 = vmatmul.mubr.bf16.gmra.mrb[0].mxu0 %v118
  %v230 = vpop.f32.mrb[0].mxu0
  %v231 = vadd.f32 %v82, %v230
  %v232 = vpop.f32.mrb[0].mxu0
  %v233 = vpop.f32.mrb[0].mxu0
  %v234 = vadd.f32 %v82, %v233
  %v235 = vpop.f32.mrb[0].mxu0
  %236 = vmatprep.mubr.bf16.mxu0 0
  %237 = vmatmul.mubr.bf16.gmra.mrb[0].mxu0 %v119
  %v238 = vpop.f32.mrb[0].mxu0
  %v239 = vadd.f32 %v82, %v238
  %v240 = vpop.f32.mrb[0].mxu0
  %v241 = vpop.f32.mrb[0].mxu0
  %v242 = vadd.f32 %v82, %v241
  %v243 = vpop.f32.mrb[0].mxu0
  %244 = vmatprep.mubr.bf16.mxu0 0
  %245 = vmatmul.mubr.bf16.gmra.mrb[0].mxu0 %v120
  %v246 = vpop.f32.mrb[0].mxu0
  %v247 = vadd.f32 %v82, %v246
  %v248 = vpop.f32.mrb[0].mxu0
  %v249 = vpop.f32.mrb[0].mxu0
  %v250 = vadd.f32 %v82, %v249
  %v251 = vpop.f32.mrb[0].mxu0
  %252 = vmatprep.mubr.bf16.mxu0 0
  %253 = vmatmul.mubr.bf16.gmra.mrb[0].mxu0 %v121
  %v254 = vpop.f32.mrb[0].mxu0
  %v255 = vadd.f32 %v82, %v254
  %v256 = vpop.f32.mrb[0].mxu0
  %v257 = vpop.f32.mrb[0].mxu0
  %v258 = vadd.f32 %v82, %v257
  %v259 = vpop.f32.mrb[0].mxu0
  %260 = vmatprep.mubr.bf16.mxu0 0
  %261 = vmatmul.mubr.bf16.gmra.mrb[0].mxu0 %v122
  %v262 = vpop.f32.mrb[0].mxu0
  %v263 = vadd.f32 %v82, %v262
  %v264 = vpop.f32.mrb[0].mxu0
  %v265 = vpop.f32.mrb[0].mxu0
  %v266 = vadd.f32 %v82, %v265
  %v267 = vpop.f32.mrb[0].mxu0
  %268 = vmatprep.mubr.bf16.mxu0 0
  %269 = vmatmul.mubr.bf16.gmra.mrb[0].mxu0 %v123
  %v270 = vpop.f32.mrb[0].mxu0
  %v271 = vadd.f32 %v82, %v270
  %v272 = vpop.f32.mrb[0].mxu0
  %v273 = vpop.f32.mrb[0].mxu0
  %v274 = vadd.f32 %v82, %v273
  %v275 = vpop.f32.mrb[0].mxu0
  %276 = vdwg.mxu0
  %v277 = vmax.f32 %v215, 0.0
  %v278 = vmax.f32 %v218, 0.0
  %v279 = vmax.f32 %v223, 0.0
  %v280 = vmax.f32 %v226, 0.0
  %v281 = vmax.f32 %v231, 0.0
  %v282 = vmax.f32 %v234, 0.0
  %v283 = vmax.f32 %v239, 0.0
  %v284 = vmax.f32 %v242, 0.0
  %v285 = vmax.f32 %v247, 0.0
  %v286 = vmax.f32 %v250, 0.0
  %v287 = vmax.f32 %v255, 0.0
  %v288 = vmax.f32 %v258, 0.0
  %v289 = vmax.f32 %v263, 0.0
  %v290 = vmax.f32 %v266, 0.0
  %v291 = vmax.f32 %v271, 0.0
  %v292 = vmax.f32 %v274, 0.0
  %293 = vadd.xlane.f32.xlu0 %v277
  %v294 = vpop.xlane.xlu0 %293
  %295 = vadd.xlane.f32.xlu0 %v278
  %v296 = vpop.xlane.xlu0 %295
  %297 = vadd.xlane.f32.xlu0 %v279
  %v298 = vpop.xlane.xlu0 %297
  %299 = vadd.xlane.f32.xlu0 %v280
  %v300 = vpop.xlane.xlu0 %299
  %301 = vadd.xlane.f32.xlu0 %v281
  %v302 = vpop.xlane.xlu0 %301
  %303 = vadd.xlane.f32.xlu0 %v282
  %v304 = vpop.xlane.xlu0 %303
  %305 = vadd.xlane.f32.xlu0 %v283
  %v306 = vpop.xlane.xlu0 %305
  %307 = vadd.xlane.f32.xlu0 %v284
  %v308 = vpop.xlane.xlu0 %307
  %309 = vadd.xlane.f32.xlu0 %v285
  %v310 = vpop.xlane.xlu0 %309
  %311 = vadd.xlane.f32.xlu0 %v286
  %v312 = vpop.xlane.xlu0 %311
  %313 = vadd.xlane.f32.xlu0 %v287
  %v314 = vpop.xlane.xlu0 %313
  %315 = vadd.xlane.f32.xlu0 %v288
  %v316 = vpop.xlane.xlu0 %315
  %317 = vadd.xlane.f32.xlu0 %v289
  %v318 = vpop.xlane.xlu0 %317
  %319 = vadd.xlane.f32.xlu0 %v290
  %v320 = vpop.xlane.xlu0 %319
  %321 = vadd.xlane.f32.xlu0 %v291
  %v322 = vpop.xlane.xlu0 %321
  %323 = vadd.xlane.f32.xlu0 %v292
  %v324 = vpop.xlane.xlu0 %323
  %v325 = vmul.f32 %v294, 0.0078125
  %v326 = vmul.f32 %v296, 0.0078125
  %v327 = vmul.f32 %v298, 0.0078125
  %v328 = vmul.f32 %v300, 0.0078125
  %v329 = vmul.f32 %v302, 0.0078125
  %v330 = vmul.f32 %v304, 0.0078125
  %v331 = vmul.f32 %v306, 0.0078125
  %v332 = vmul.f32 %v308, 0.0078125
  %v333 = vmul.f32 %v310, 0.0078125
  %v334 = vmul.f32 %v312, 0.0078125
  %v335 = vmul.f32 %v314, 0.0078125
  %v336 = vmul.f32 %v316, 0.0078125
  %v337 = vmul.f32 %v318, 0.0078125
  %v338 = vmul.f32 %v320, 0.0078125
  %v339 = vmul.f32 %v322, 0.0078125
  %v340 = vmul.f32 %v324, 0.0078125
  %v341 = vsub.f32 %v277, %v325
  %v342 = vsub.f32 %v278, %v326
  %v343 = vsub.f32 %v279, %v327
  %v344 = vsub.f32 %v280, %v328
  %v345 = vsub.f32 %v281, %v329
  %v346 = vsub.f32 %v282, %v330
  %v347 = vsub.f32 %v283, %v331
  %v348 = vsub.f32 %v284, %v332
  %v349 = vsub.f32 %v285, %v333
  %v350 = vsub.f32 %v286, %v334
  %v351 = vsub.f32 %v287, %v335
  %v352 = vsub.f32 %v288, %v336
  %v353 = vsub.f32 %v289, %v337
  %v354 = vsub.f32 %v290, %v338
  %v355 = vsub.f32 %v291, %v339
  %v356 = vsub.f32 %v292, %v340
  %v357 = vmul.f32 %v341, %v341
  %v358 = vmul.f32 %v342, %v342
  %v359 = vmul.f32 %v343, %v343
  %v360 = vmul.f32 %v344, %v344
  %v361 = vmul.f32 %v345, %v345
  %v362 = vmul.f32 %v346, %v346
  %v363 = vmul.f32 %v347, %v347
  %v364 = vmul.f32 %v348, %v348
  %v365 = vmul.f32 %v349, %v349
  %v366 = vmul.f32 %v350, %v350
  %v367 = vmul.f32 %v351, %v351
  %v368 = vmul.f32 %v352, %v352
  %v369 = vmul.f32 %v353, %v353
  %v370 = vmul.f32 %v354, %v354
  %v371 = vmul.f32 %v355, %v355
  %v372 = vmul.f32 %v356, %v356
  %373 = vadd.xlane.f32.xlu0 %v357
  %v374 = vpop.xlane.xlu0 %373
  %375 = vadd.xlane.f32.xlu0 %v358
  %v376 = vpop.xlane.xlu0 %375
  %377 = vadd.xlane.f32.xlu0 %v359
  %v378 = vpop.xlane.xlu0 %377
  %379 = vadd.xlane.f32.xlu0 %v360
  %v380 = vpop.xlane.xlu0 %379
  %381 = vadd.xlane.f32.xlu0 %v361
  %v382 = vpop.xlane.xlu0 %381
  %383 = vadd.xlane.f32.xlu0 %v362
  %v384 = vpop.xlane.xlu0 %383
  %385 = vadd.xlane.f32.xlu0 %v363
  %v386 = vpop.xlane.xlu0 %385
  %387 = vadd.xlane.f32.xlu0 %v364
  %v388 = vpop.xlane.xlu0 %387
  %389 = vadd.xlane.f32.xlu0 %v365
  %v390 = vpop.xlane.xlu0 %389
  %391 = vadd.xlane.f32.xlu0 %v366
  %v392 = vpop.xlane.xlu0 %391
  %393 = vadd.xlane.f32.xlu0 %v367
  %v394 = vpop.xlane.xlu0 %393
  %395 = vadd.xlane.f32.xlu0 %v368
  %v396 = vpop.xlane.xlu0 %395
  %397 = vadd.xlane.f32.xlu0 %v369
  %v398 = vpop.xlane.xlu0 %397
  %399 = vadd.xlane.f32.xlu0 %v370
  %v400 = vpop.xlane.xlu0 %399
  %401 = vadd.xlane.f32.xlu0 %v371
  %v402 = vpop.xlane.xlu0 %401
  %403 = vadd.xlane.f32.xlu0 %v372
  %v404 = vpop.xlane.xlu0 %403
  %v405 = vmul.f32 %v374, 0.0078125
  %v406 = vmul.f32 %v376, 0.0078125
  %v407 = vmul.f32 %v378, 0.0078125
  %v408 = vmul.f32 %v380, 0.0078125
  %v409 = vmul.f32 %v382, 0.0078125
  %v410 = vmul.f32 %v384, 0.0078125
  %v411 = vmul.f32 %v386, 0.0078125
  %v412 = vmul.f32 %v388, 0.0078125
  %v413 = vmul.f32 %v390, 0.0078125
  %v414 = vmul.f32 %v392, 0.0078125
  %v415 = vmul.f32 %v394, 0.0078125
  %v416 = vmul.f32 %v396, 0.0078125
  %v417 = vmul.f32 %v398, 0.0078125
  %v418 = vmul.f32 %v400, 0.0078125
  %v419 = vmul.f32 %v402, 0.0078125
  %v420 = vmul.f32 %v404, 0.0078125
  %v421 = vadd.f32 %v405, 1e-06
  %v422 = vadd.f32 %v406, 1e-06
  %v423 = vadd.f32 %v407, 1e-06
  %v424 = vadd.f32 %v408, 1e-06
  %v425 = vadd.f32 %v409, 1e-06
  %v426 = vadd.f32 %v410, 1e-06
  %v427 = vadd.f32 %v411, 1e-06
  %v428 = vadd.f32 %v412, 1e-06
  %v429 = vadd.f32 %v413, 1e-06
  %v430 = vadd.f32 %v414, 1e-06
  %v431 = vadd.f32 %v415, 1e-06
  %v432 = vadd.f32 %v416, 1e-06
  %v433 = vadd.f32 %v417, 1e-06
  %v434 = vadd.f32 %v418, 1e-06
  %v435 = vadd.f32 %v419, 1e-06
  %v436 = vadd.f32 %v420, 1e-06
  %v437 = vrsqrt.pop %v421
  %v438 = vrsqrt.pop %v422
  %v439 = vrsqrt.pop %v423
  %v440 = vrsqrt.pop %v424
  %v441 = vrsqrt.pop %v425
  %v442 = vrsqrt.pop %v426
  %v443 = vrsqrt.pop %v427
  %v444 = vrsqrt.pop %v428
  %v445 = vrsqrt.pop %v429
  %v446 = vrsqrt.pop %v430
  %v447 = vrsqrt.pop %v431
  %v448 = vrsqrt.pop %v432
  %v449 = vrsqrt.pop %v433
  %v450 = vrsqrt.pop %v434
  %v451 = vrsqrt.pop %v435
  %v452 = vrsqrt.pop %v436
  %v453 = vmul.f32 %v341, %v437
  %v454 = vmul.f32 %v342, %v438
  %v455 = vmul.f32 %v343, %v439
  %v456 = vmul.f32 %v344, %v440
  %v457 = vmul.f32 %v345, %v441
  %v458 = vmul.f32 %v346, %v442
  %v459 = vmul.f32 %v347, %v443
  %v460 = vmul.f32 %v348, %v444
  %v461 = vmul.f32 %v349, %v445
  %v462 = vmul.f32 %v350, %v446
  %v463 = vmul.f32 %v351, %v447
  %v464 = vmul.f32 %v352, %v448
  %v465 = vmul.f32 %v353, %v449
  %v466 = vmul.f32 %v354, %v450
  %v467 = vmul.f32 %v355, %v451
  %v468 = vmul.f32 %v356, %v452
  %v470 = vlaneseq
  %v471 = vshrl.u32 %v470, 7
  %v472 = vsub.s32 0, %v471
  %v473 = vrot.slane %v76, %v472
  %v475 = vmul.f32 %v453, %v473
  %v476 = vmul.f32 %v454, %v473
  %v477 = vmul.f32 %v455, %v473
  %v478 = vmul.f32 %v456, %v473
  %v479 = vmul.f32 %v457, %v473
  %v480 = vmul.f32 %v458, %v473
  %v481 = vmul.f32 %v459, %v473
  %v482 = vmul.f32 %v460, %v473
  %v483 = vmul.f32 %v461, %v473
  %v484 = vmul.f32 %v462, %v473
  %v485 = vmul.f32 %v463, %v473
  %v486 = vmul.f32 %v464, %v473
  %v487 = vmul.f32 %v465, %v473
  %v488 = vmul.f32 %v466, %v473
  %v489 = vmul.f32 %v467, %v473
  %v490 = vmul.f32 %v468, %v473
  %v492 = vlaneseq
  %v493 = vshrl.u32 %v492, 7
  %v494 = vsub.s32 0, %v493
  %v495 = vrot.slane %v77, %v494
  %v497 = vadd.f32 %v475, %v495
  %v498 = vadd.f32 %v476, %v495
  %v499 = vadd.f32 %v477, %v495
  %v500 = vadd.f32 %v478, %v495
  %v501 = vadd.f32 %v479, %v495
  %v502 = vadd.f32 %v480, %v495
  %v503 = vadd.f32 %v481, %v495
  %v504 = vadd.f32 %v482, %v495
  %v505 = vadd.f32 %v483, %v495
  %v506 = vadd.f32 %v484, %v495
  %v507 = vadd.f32 %v485, %v495
  %v508 = vadd.f32 %v486, %v495
  %v509 = vadd.f32 %v487, %v495
  %v510 = vadd.f32 %v488, %v495
  %v511 = vadd.f32 %v489, %v495
  %v512 = vadd.f32 %v490, %v495
  %v514 = vlaneseq
  %v515 = vshrl.u32 %v514, 7
  %v516 = vsub.s32 0, %v515
  %v517 = vrot.slane %v42, %v516
  %v519 = vmul.f32 %v497, %v517
  %v520 = vmul.f32 %v498, %v517
  %v521 = vmul.f32 %v499, %v517
  %v522 = vmul.f32 %v500, %v517
  %v523 = vmul.f32 %v501, %v517
  %v524 = vmul.f32 %v502, %v517
  %v525 = vmul.f32 %v503, %v517
  %v526 = vmul.f32 %v504, %v517
  %v527 = vmul.f32 %v505, %v517
  %v528 = vmul.f32 %v506, %v517
  %v529 = vmul.f32 %v507, %v517
  %v530 = vmul.f32 %v508, %v517
  %v531 = vmul.f32 %v509, %v517
  %v532 = vmul.f32 %v510, %v517
  %v533 = vmul.f32 %v511, %v517
  %v534 = vmul.f32 %v512, %v517
  %535 = vadd.xlane.f32.xlu0 %v519
  %v536 = vpop.xlane.xlu0 %535
  %537 = vadd.xlane.f32.xlu0 %v520
  %v538 = vpop.xlane.xlu0 %537
  %539 = vadd.xlane.f32.xlu0 %v521
  %v540 = vpop.xlane.xlu0 %539
  %541 = vadd.xlane.f32.xlu0 %v522
  %v542 = vpop.xlane.xlu0 %541
  %543 = vadd.xlane.f32.xlu0 %v523
  %v544 = vpop.xlane.xlu0 %543
  %545 = vadd.xlane.f32.xlu0 %v524
  %v546 = vpop.xlane.xlu0 %545
  %547 = vadd.xlane.f32.xlu0 %v525
  %v548 = vpop.xlane.xlu0 %547
  %549 = vadd.xlane.f32.xlu0 %v526
  %v550 = vpop.xlane.xlu0 %549
  %551 = vadd.xlane.f32.xlu0 %v527
  %v552 = vpop.xlane.xlu0 %551
  %553 = vadd.xlane.f32.xlu0 %v528
  %v554 = vpop.xlane.xlu0 %553
  %555 = vadd.xlane.f32.xlu0 %v529
  %v556 = vpop.xlane.xlu0 %555
  %557 = vadd.xlane.f32.xlu0 %v530
  %v558 = vpop.xlane.xlu0 %557
  %559 = vadd.xlane.f32.xlu0 %v531
  %v560 = vpop.xlane.xlu0 %559
  %561 = vadd.xlane.f32.xlu0 %v532
  %v562 = vpop.xlane.xlu0 %561
  %563 = vadd.xlane.f32.xlu0 %v533
  %v564 = vpop.xlane.xlu0 %563
  %565 = vadd.xlane.f32.xlu0 %v534
  %v566 = vpop.xlane.xlu0 %565
  %v567 = vld [vmem:[%s1] sm:$0xf]
  %v568 = vld [vmem:[%s1 + $0x4] sm:$0xf]
  %v569 = vld [vmem:[%s1 + $0x8] sm:$0xf]
  %v570 = vld [vmem:[%s1 + $0xc] sm:$0xf]
  %v571 = vld [vmem:[%s1 + $0x10] sm:$0xf]
  %v572 = vld [vmem:[%s1 + $0x14] sm:$0xf]
  %v573 = vld [vmem:[%s1 + $0x18] sm:$0xf]
  %v574 = vld [vmem:[%s1 + $0x1c] sm:$0xf]
  %v575 = vld [vmem:[%s1 + $0x20] sm:$0xf]
  %v576 = vld [vmem:[%s1 + $0x24] sm:$0xf]
  %v577 = vld [vmem:[%s1 + $0x28] sm:$0xf]
  %v578 = vld [vmem:[%s1 + $0x2c] sm:$0xf]
  %v579 = vld [vmem:[%s1 + $0x30] sm:$0xf]
  %v580 = vld [vmem:[%s1 + $0x34] sm:$0xf]
  %v581 = vld [vmem:[%s1 + $0x38] sm:$0xf]
  %v582 = vld [vmem:[%s1 + $0x3c] sm:$0xf]
  %v583 = vld [vmem:[%s6] sm:$0xf]
  %v584 = vld [vmem:[%s6 + $0x4] sm:$0xf]
  %v585 = vld [vmem:[%s6 + $0x8] sm:$0xf]
  %v586 = vld [vmem:[%s6 + $0xc] sm:$0xf]
  %v587 = vld [vmem:[%s6 + $0x10] sm:$0xf]
  %v588 = vld [vmem:[%s6 + $0x14] sm:$0xf]
  %v589 = vld [vmem:[%s6 + $0x18] sm:$0xf]
  %v590 = vld [vmem:[%s6 + $0x1c] sm:$0xf]
  %v591 = vld [vmem:[%s6 + $0x20] sm:$0xf]
  %v592 = vld [vmem:[%s6 + $0x24] sm:$0xf]
  %v593 = vld [vmem:[%s6 + $0x28] sm:$0xf]
  %v594 = vld [vmem:[%s6 + $0x2c] sm:$0xf]
  %v595 = vld [vmem:[%s6 + $0x30] sm:$0xf]
  %v596 = vld [vmem:[%s6 + $0x34] sm:$0xf]
  %v597 = vld [vmem:[%s6 + $0x38] sm:$0xf]
  %v598 = vld [vmem:[%s6 + $0x3c] sm:$0xf]
  %v599 = vld [vmem:[%s7] sm:$0x1]
  %v600 = vld [vmem:[%s8] sm:$0x1]
  %v601 = vld [vmem:[%s9] sm:$0x1]
  %v603 = vlaneseq
  %v604 = vshrl.u32 %v603, 7
  %v605 = vsub.s32 0, %v604
  %v606 = vrot.slane %v599, %v605
  %v624 = vunpack.c.l.b16 %v567
  %v625 = vunpack.c.l.b16 %v568
  %v626 = vunpack.c.l.b16 %v569
  %v627 = vunpack.c.l.b16 %v570
  %v628 = vunpack.c.l.b16 %v571
  %v629 = vunpack.c.l.b16 %v572
  %v630 = vunpack.c.l.b16 %v573
  %v631 = vunpack.c.l.b16 %v574
  %v632 = vunpack.c.l.b16 %v575
  %v633 = vunpack.c.l.b16 %v576
  %v634 = vunpack.c.l.b16 %v577
  %v635 = vunpack.c.l.b16 %v578
  %v636 = vunpack.c.l.b16 %v579
  %v637 = vunpack.c.l.b16 %v580
  %v638 = vunpack.c.l.b16 %v581
  %v639 = vunpack.c.l.b16 %v582
  %v640 = vpack.c.b16 %v625, %v624
  %v641 = vpack.c.b16 %v627, %v626
  %v642 = vpack.c.b16 %v629, %v628
  %v643 = vpack.c.b16 %v631, %v630
  %v644 = vpack.c.b16 %v633, %v632
  %v645 = vpack.c.b16 %v635, %v634
  %v646 = vpack.c.b16 %v637, %v636
  %v647 = vpack.c.b16 %v639, %v638
  %v672 = vunpack.c.l.b16 %v583
  %v673 = vunpack.c.l.b16 %v584
  %v674 = vunpack.c.l.b16 %v585
  %v675 = vunpack.c.l.b16 %v586
  %v676 = vunpack.c.l.b16 %v587
  %v677 = vunpack.c.l.b16 %v588
  %v678 = vunpack.c.l.b16 %v589
  %v679 = vunpack.c.l.b16 %v590
  %v680 = vunpack.c.l.b16 %v591
  %v681 = vunpack.c.l.b16 %v592
  %v682 = vunpack.c.l.b16 %v593
  %v683 = vunpack.c.l.b16 %v594
  %v684 = vunpack.c.l.b16 %v595
  %v685 = vunpack.c.l.b16 %v596
  %v686 = vunpack.c.l.b16 %v597
  %v687 = vunpack.c.l.b16 %v598
  %v688 = vpack.c.b16 %v673, %v672
  %v689 = vpack.c.b16 %v675, %v674
  %v690 = vpack.c.b16 %v677, %v676
  %v691 = vpack.c.b16 %v679, %v678
  %v692 = vpack.c.b16 %v681, %v680
  %v693 = vpack.c.b16 %v683, %v682
  %v694 = vpack.c.b16 %v685, %v684
  %v695 = vpack.c.b16 %v687, %v686
  %704 = vmatprep.subr.bf16.mxu0 0
  %705 = vmatpush1.bf16.msra.mxu0 %v688
  %706 = vmatprep.subr.bf16.mxu0 0
  %707 = vmatpush1.bf16.msra.mxu0 %v689
  %708 = vmatprep.subr.bf16.mxu0 0
  %709 = vmatpush1.bf16.msra.mxu0 %v690
  %710 = vmatprep.subr.bf16.mxu0 0
  %711 = vmatpush1.bf16.msra.mxu0 %v691
  %712 = vmatprep.subr.bf16.mxu0 0
  %713 = vmatpush1.bf16.msra.mxu0 %v692
  %714 = vmatprep.subr.bf16.mxu0 0
  %715 = vmatpush1.bf16.msra.mxu0 %v693
  %716 = vmatprep.subr.bf16.mxu0 0
  %717 = vmatpush1.bf16.msra.mxu0 %v694
  %718 = vmatprep.subr.bf16.mxu0 0
  %719 = vmatpush1.bf16.msra.mxu0 %v695
  %720 = vmatprep.subr.bf16.mxu0 0
  %721 = vmatpush1.bf16.msra.mxu0 0
  %722 = vmatprep.subr.bf16.mxu0 0
  %723 = vmatpush1.bf16.msra.mxu0 0
  %724 = vmatprep.subr.bf16.mxu0 0
  %725 = vmatpush1.bf16.msra.mxu0 0
  %726 = vmatprep.subr.bf16.mxu0 0
  %727 = vmatpush1.bf16.msra.mxu0 0
  %728 = vmatprep.subr.bf16.mxu0 0
  %729 = vmatpush1.bf16.msra.mxu0 0
  %730 = vmatprep.subr.bf16.mxu0 0
  %731 = vmatpush1.bf16.msra.mxu0 0
  %732 = vmatprep.subr.bf16.mxu0 0
  %733 = vmatpush1.bf16.msra.mxu0 0
  %734 = vmatprep.subr.bf16.mxu0 0
  %735 = vmatpush1.bf16.msra.mxu0 0
  %736 = vmatprep.mubr.bf16.mxu0 0
  %737 = vmatmul.mubr.bf16.gmra.mrb[0].mxu0 %v640
  %v738 = vpop.f32.mrb[0].mxu0
  %v739 = vadd.f32 %v606, %v738
  %v740 = vpop.f32.mrb[0].mxu0
  %v741 = vpop.f32.mrb[0].mxu0
  %v742 = vadd.f32 %v606, %v741
  %v743 = vpop.f32.mrb[0].mxu0
  %744 = vmatprep.mubr.bf16.mxu0 0
  %745 = vmatmul.mubr.bf16.gmra.mrb[0].mxu0 %v641
  %v746 = vpop.f32.mrb[0].mxu0
  %v747 = vadd.f32 %v606, %v746
  %v748 = vpop.f32.mrb[0].mxu0
  %v749 = vpop.f32.mrb[0].mxu0
  %v750 = vadd.f32 %v606, %v749
  %v751 = vpop.f32.mrb[0].mxu0
  %752 = vmatprep.mubr.bf16.mxu0 0
  %753 = vmatmul.mubr.bf16.gmra.mrb[0].mxu0 %v642
  %v754 = vpop.f32.mrb[0].mxu0
  %v755 = vadd.f32 %v606, %v754
  %v756 = vpop.f32.mrb[0].mxu0
  %v757 = vpop.f32.mrb[0].mxu0
  %v758 = vadd.f32 %v606, %v757
  %v759 = vpop.f32.mrb[0].mxu0
  %760 = vmatprep.mubr.bf16.mxu0 0
  %761 = vmatmul.mubr.bf16.gmra.mrb[0].mxu0 %v643
  %v762 = vpop.f32.mrb[0].mxu0
  %v763 = vadd.f32 %v606, %v762
  %v764 = vpop.f32.mrb[0].mxu0
  %v765 = vpop.f32.mrb[0].mxu0
  %v766 = vadd.f32 %v606, %v765
  %v767 = vpop.f32.mrb[0].mxu0
  %768 = vmatprep.mubr.bf16.mxu0 0
  %769 = vmatmul.mubr.bf16.gmra.mrb[0].mxu0 %v644
  %v770 = vpop.f32.mrb[0].mxu0
  %v771 = vadd.f32 %v606, %v770
  %v772 = vpop.f32.mrb[0].mxu0
  %v773 = vpop.f32.mrb[0].mxu0
  %v774 = vadd.f32 %v606, %v773
  %v775 = vpop.f32.mrb[0].mxu0
  %776 = vmatprep.mubr.bf16.mxu0 0
  %777 = vmatmul.mubr.bf16.gmra.mrb[0].mxu0 %v645
  %v778 = vpop.f32.mrb[0].mxu0
  %v779 = vadd.f32 %v606, %v778
  %v780 = vpop.f32.mrb[0].mxu0
  %v781 = vpop.f32.mrb[0].mxu0
  %v782 = vadd.f32 %v606, %v781
  %v783 = vpop.f32.mrb[0].mxu0
  %784 = vmatprep.mubr.bf16.mxu0 0
  %785 = vmatmul.mubr.bf16.gmra.mrb[0].mxu0 %v646
  %v786 = vpop.f32.mrb[0].mxu0
  %v787 = vadd.f32 %v606, %v786
  %v788 = vpop.f32.mrb[0].mxu0
  %v789 = vpop.f32.mrb[0].mxu0
  %v790 = vadd.f32 %v606, %v789
  %v791 = vpop.f32.mrb[0].mxu0
  %792 = vmatprep.mubr.bf16.mxu0 0
  %793 = vmatmul.mubr.bf16.gmra.mrb[0].mxu0 %v647
  %v794 = vpop.f32.mrb[0].mxu0
  %v795 = vadd.f32 %v606, %v794
  %v796 = vpop.f32.mrb[0].mxu0
  %v797 = vpop.f32.mrb[0].mxu0
  %v798 = vadd.f32 %v606, %v797
  %v799 = vpop.f32.mrb[0].mxu0
  %800 = vdwg.mxu0
  %v801 = vmax.f32 %v739, 0.0
  %v802 = vmax.f32 %v742, 0.0
  %v803 = vmax.f32 %v747, 0.0
  %v804 = vmax.f32 %v750, 0.0
  %v805 = vmax.f32 %v755, 0.0
  %v806 = vmax.f32 %v758, 0.0
  %v807 = vmax.f32 %v763, 0.0
  %v808 = vmax.f32 %v766, 0.0
  %v809 = vmax.f32 %v771, 0.0
  %v810 = vmax.f32 %v774, 0.0
  %v811 = vmax.f32 %v779, 0.0
  %v812 = vmax.f32 %v782, 0.0
  %v813 = vmax.f32 %v787, 0.0
  %v814 = vmax.f32 %v790, 0.0
  %v815 = vmax.f32 %v795, 0.0
  %v816 = vmax.f32 %v798, 0.0
  %817 = vadd.xlane.f32.xlu0 %v801
  %v818 = vpop.xlane.xlu0 %817
  %819 = vadd.xlane.f32.xlu0 %v802
  %v820 = vpop.xlane.xlu0 %819
  %821 = vadd.xlane.f32.xlu0 %v803
  %v822 = vpop.xlane.xlu0 %821
  %823 = vadd.xlane.f32.xlu0 %v804
  %v824 = vpop.xlane.xlu0 %823
  %825 = vadd.xlane.f32.xlu0 %v805
  %v826 = vpop.xlane.xlu0 %825
  %827 = vadd.xlane.f32.xlu0 %v806
  %v828 = vpop.xlane.xlu0 %827
  %829 = vadd.xlane.f32.xlu0 %v807
  %v830 = vpop.xlane.xlu0 %829
  %831 = vadd.xlane.f32.xlu0 %v808
  %v832 = vpop.xlane.xlu0 %831
  %833 = vadd.xlane.f32.xlu0 %v809
  %v834 = vpop.xlane.xlu0 %833
  %835 = vadd.xlane.f32.xlu0 %v810
  %v836 = vpop.xlane.xlu0 %835
  %837 = vadd.xlane.f32.xlu0 %v811
  %v838 = vpop.xlane.xlu0 %837
  %839 = vadd.xlane.f32.xlu0 %v812
  %v840 = vpop.xlane.xlu0 %839
  %841 = vadd.xlane.f32.xlu0 %v813
  %v842 = vpop.xlane.xlu0 %841
  %843 = vadd.xlane.f32.xlu0 %v814
  %v844 = vpop.xlane.xlu0 %843
  %845 = vadd.xlane.f32.xlu0 %v815
  %v846 = vpop.xlane.xlu0 %845
  %847 = vadd.xlane.f32.xlu0 %v816
  %v848 = vpop.xlane.xlu0 %847
  %v849 = vmul.f32 %v818, 0.0078125
  %v850 = vmul.f32 %v820, 0.0078125
  %v851 = vmul.f32 %v822, 0.0078125
  %v852 = vmul.f32 %v824, 0.0078125
  %v853 = vmul.f32 %v826, 0.0078125
  %v854 = vmul.f32 %v828, 0.0078125
  %v855 = vmul.f32 %v830, 0.0078125
  %v856 = vmul.f32 %v832, 0.0078125
  %v857 = vmul.f32 %v834, 0.0078125
  %v858 = vmul.f32 %v836, 0.0078125
  %v859 = vmul.f32 %v838, 0.0078125
  %v860 = vmul.f32 %v840, 0.0078125
  %v861 = vmul.f32 %v842, 0.0078125
  %v862 = vmul.f32 %v844, 0.0078125
  %v863 = vmul.f32 %v846, 0.0078125
  %v864 = vmul.f32 %v848, 0.0078125
  %v865 = vsub.f32 %v801, %v849
  %v866 = vsub.f32 %v802, %v850
  %v867 = vsub.f32 %v803, %v851
  %v868 = vsub.f32 %v804, %v852
  %v869 = vsub.f32 %v805, %v853
  %v870 = vsub.f32 %v806, %v854
  %v871 = vsub.f32 %v807, %v855
  %v872 = vsub.f32 %v808, %v856
  %v873 = vsub.f32 %v809, %v857
  %v874 = vsub.f32 %v810, %v858
  %v875 = vsub.f32 %v811, %v859
  %v876 = vsub.f32 %v812, %v860
  %v877 = vsub.f32 %v813, %v861
  %v878 = vsub.f32 %v814, %v862
  %v879 = vsub.f32 %v815, %v863
  %v880 = vsub.f32 %v816, %v864
  %v881 = vmul.f32 %v865, %v865
  %v882 = vmul.f32 %v866, %v866
  %v883 = vmul.f32 %v867, %v867
  %v884 = vmul.f32 %v868, %v868
  %v885 = vmul.f32 %v869, %v869
  %v886 = vmul.f32 %v870, %v870
  %v887 = vmul.f32 %v871, %v871
  %v888 = vmul.f32 %v872, %v872
  %v889 = vmul.f32 %v873, %v873
  %v890 = vmul.f32 %v874, %v874
  %v891 = vmul.f32 %v875, %v875
  %v892 = vmul.f32 %v876, %v876
  %v893 = vmul.f32 %v877, %v877
  %v894 = vmul.f32 %v878, %v878
  %v895 = vmul.f32 %v879, %v879
  %v896 = vmul.f32 %v880, %v880
  %897 = vadd.xlane.f32.xlu0 %v881
  %v898 = vpop.xlane.xlu0 %897
  %899 = vadd.xlane.f32.xlu0 %v882
  %v900 = vpop.xlane.xlu0 %899
  %901 = vadd.xlane.f32.xlu0 %v883
  %v902 = vpop.xlane.xlu0 %901
  %903 = vadd.xlane.f32.xlu0 %v884
  %v904 = vpop.xlane.xlu0 %903
  %905 = vadd.xlane.f32.xlu0 %v885
  %v906 = vpop.xlane.xlu0 %905
  %907 = vadd.xlane.f32.xlu0 %v886
  %v908 = vpop.xlane.xlu0 %907
  %909 = vadd.xlane.f32.xlu0 %v887
  %v910 = vpop.xlane.xlu0 %909
  %911 = vadd.xlane.f32.xlu0 %v888
  %v912 = vpop.xlane.xlu0 %911
  %913 = vadd.xlane.f32.xlu0 %v889
  %v914 = vpop.xlane.xlu0 %913
  %915 = vadd.xlane.f32.xlu0 %v890
  %v916 = vpop.xlane.xlu0 %915
  %917 = vadd.xlane.f32.xlu0 %v891
  %v918 = vpop.xlane.xlu0 %917
  %919 = vadd.xlane.f32.xlu0 %v892
  %v920 = vpop.xlane.xlu0 %919
  %921 = vadd.xlane.f32.xlu0 %v893
  %v922 = vpop.xlane.xlu0 %921
  %923 = vadd.xlane.f32.xlu0 %v894
  %v924 = vpop.xlane.xlu0 %923
  %925 = vadd.xlane.f32.xlu0 %v895
  %v926 = vpop.xlane.xlu0 %925
  %927 = vadd.xlane.f32.xlu0 %v896
  %v928 = vpop.xlane.xlu0 %927
  %v929 = vmul.f32 %v898, 0.0078125
  %v930 = vmul.f32 %v900, 0.0078125
  %v931 = vmul.f32 %v902, 0.0078125
  %v932 = vmul.f32 %v904, 0.0078125
  %v933 = vmul.f32 %v906, 0.0078125
  %v934 = vmul.f32 %v908, 0.0078125
  %v935 = vmul.f32 %v910, 0.0078125
  %v936 = vmul.f32 %v912, 0.0078125
  %v937 = vmul.f32 %v914, 0.0078125
  %v938 = vmul.f32 %v916, 0.0078125
  %v939 = vmul.f32 %v918, 0.0078125
  %v940 = vmul.f32 %v920, 0.0078125
  %v941 = vmul.f32 %v922, 0.0078125
  %v942 = vmul.f32 %v924, 0.0078125
  %v943 = vmul.f32 %v926, 0.0078125
  %v944 = vmul.f32 %v928, 0.0078125
  %v945 = vadd.f32 %v929, 1e-06
  %v946 = vadd.f32 %v930, 1e-06
  %v947 = vadd.f32 %v931, 1e-06
  %v948 = vadd.f32 %v932, 1e-06
  %v949 = vadd.f32 %v933, 1e-06
  %v950 = vadd.f32 %v934, 1e-06
  %v951 = vadd.f32 %v935, 1e-06
  %v952 = vadd.f32 %v936, 1e-06
  %v953 = vadd.f32 %v937, 1e-06
  %v954 = vadd.f32 %v938, 1e-06
  %v955 = vadd.f32 %v939, 1e-06
  %v956 = vadd.f32 %v940, 1e-06
  %v957 = vadd.f32 %v941, 1e-06
  %v958 = vadd.f32 %v942, 1e-06
  %v959 = vadd.f32 %v943, 1e-06
  %v960 = vadd.f32 %v944, 1e-06
  %v961 = vrsqrt.pop %v945
  %v962 = vrsqrt.pop %v946
  %v963 = vrsqrt.pop %v947
  %v964 = vrsqrt.pop %v948
  %v965 = vrsqrt.pop %v949
  %v966 = vrsqrt.pop %v950
  %v967 = vrsqrt.pop %v951
  %v968 = vrsqrt.pop %v952
  %v969 = vrsqrt.pop %v953
  %v970 = vrsqrt.pop %v954
  %v971 = vrsqrt.pop %v955
  %v972 = vrsqrt.pop %v956
  %v973 = vrsqrt.pop %v957
  %v974 = vrsqrt.pop %v958
  %v975 = vrsqrt.pop %v959
  %v976 = vrsqrt.pop %v960
  %v977 = vmul.f32 %v865, %v961
  %v978 = vmul.f32 %v866, %v962
  %v979 = vmul.f32 %v867, %v963
  %v980 = vmul.f32 %v868, %v964
  %v981 = vmul.f32 %v869, %v965
  %v982 = vmul.f32 %v870, %v966
  %v983 = vmul.f32 %v871, %v967
  %v984 = vmul.f32 %v872, %v968
  %v985 = vmul.f32 %v873, %v969
  %v986 = vmul.f32 %v874, %v970
  %v987 = vmul.f32 %v875, %v971
  %v988 = vmul.f32 %v876, %v972
  %v989 = vmul.f32 %v877, %v973
  %v990 = vmul.f32 %v878, %v974
  %v991 = vmul.f32 %v879, %v975
  %v992 = vmul.f32 %v880, %v976
  %v994 = vlaneseq
  %v995 = vshrl.u32 %v994, 7
  %v996 = vsub.s32 0, %v995
  %v997 = vrot.slane %v600, %v996
  %v999 = vmul.f32 %v977, %v997
  %v1000 = vmul.f32 %v978, %v997
  %v1001 = vmul.f32 %v979, %v997
  %v1002 = vmul.f32 %v980, %v997
  %v1003 = vmul.f32 %v981, %v997
  %v1004 = vmul.f32 %v982, %v997
  %v1005 = vmul.f32 %v983, %v997
  %v1006 = vmul.f32 %v984, %v997
  %v1007 = vmul.f32 %v985, %v997
  %v1008 = vmul.f32 %v986, %v997
  %v1009 = vmul.f32 %v987, %v997
  %v1010 = vmul.f32 %v988, %v997
  %v1011 = vmul.f32 %v989, %v997
  %v1012 = vmul.f32 %v990, %v997
  %v1013 = vmul.f32 %v991, %v997
  %v1014 = vmul.f32 %v992, %v997
  %v1016 = vlaneseq
  %v1017 = vshrl.u32 %v1016, 7
  %v1018 = vsub.s32 0, %v1017
  %v1019 = vrot.slane %v601, %v1018
  %v1021 = vadd.f32 %v999, %v1019
  %v1022 = vadd.f32 %v1000, %v1019
  %v1023 = vadd.f32 %v1001, %v1019
  %v1024 = vadd.f32 %v1002, %v1019
  %v1025 = vadd.f32 %v1003, %v1019
  %v1026 = vadd.f32 %v1004, %v1019
  %v1027 = vadd.f32 %v1005, %v1019
  %v1028 = vadd.f32 %v1006, %v1019
  %v1029 = vadd.f32 %v1007, %v1019
  %v1030 = vadd.f32 %v1008, %v1019
  %v1031 = vadd.f32 %v1009, %v1019
  %v1032 = vadd.f32 %v1010, %v1019
  %v1033 = vadd.f32 %v1011, %v1019
  %v1034 = vadd.f32 %v1012, %v1019
  %v1035 = vadd.f32 %v1013, %v1019
  %v1036 = vadd.f32 %v1014, %v1019
  %v1037 = vmul.f32 %v1021, %v517
  %v1038 = vmul.f32 %v1022, %v517
  %v1039 = vmul.f32 %v1023, %v517
  %v1040 = vmul.f32 %v1024, %v517
  %v1041 = vmul.f32 %v1025, %v517
  %v1042 = vmul.f32 %v1026, %v517
  %v1043 = vmul.f32 %v1027, %v517
  %v1044 = vmul.f32 %v1028, %v517
  %v1045 = vmul.f32 %v1029, %v517
  %v1046 = vmul.f32 %v1030, %v517
  %v1047 = vmul.f32 %v1031, %v517
  %v1048 = vmul.f32 %v1032, %v517
  %v1049 = vmul.f32 %v1033, %v517
  %v1050 = vmul.f32 %v1034, %v517
  %v1051 = vmul.f32 %v1035, %v517
  %v1052 = vmul.f32 %v1036, %v517
  %1053 = vadd.xlane.f32.xlu0 %v1037
  %v1054 = vpop.xlane.xlu0 %1053
  %1055 = vadd.xlane.f32.xlu0 %v1038
  %v1056 = vpop.xlane.xlu0 %1055
  %1057 = vadd.xlane.f32.xlu0 %v1039
  %v1058 = vpop.xlane.xlu0 %1057
  %1059 = vadd.xlane.f32.xlu0 %v1040
  %v1060 = vpop.xlane.xlu0 %1059
  %1061 = vadd.xlane.f32.xlu0 %v1041
  %v1062 = vpop.xlane.xlu0 %1061
  %1063 = vadd.xlane.f32.xlu0 %v1042
  %v1064 = vpop.xlane.xlu0 %1063
  %1065 = vadd.xlane.f32.xlu0 %v1043
  %v1066 = vpop.xlane.xlu0 %1065
  %1067 = vadd.xlane.f32.xlu0 %v1044
  %v1068 = vpop.xlane.xlu0 %1067
  %1069 = vadd.xlane.f32.xlu0 %v1045
  %v1070 = vpop.xlane.xlu0 %1069
  %1071 = vadd.xlane.f32.xlu0 %v1046
  %v1072 = vpop.xlane.xlu0 %1071
  %1073 = vadd.xlane.f32.xlu0 %v1047
  %v1074 = vpop.xlane.xlu0 %1073
  %1075 = vadd.xlane.f32.xlu0 %v1048
  %v1076 = vpop.xlane.xlu0 %1075
  %1077 = vadd.xlane.f32.xlu0 %v1049
  %v1078 = vpop.xlane.xlu0 %1077
  %1079 = vadd.xlane.f32.xlu0 %v1050
  %v1080 = vpop.xlane.xlu0 %1079
  %1081 = vadd.xlane.f32.xlu0 %v1051
  %v1082 = vpop.xlane.xlu0 %1081
  %1083 = vadd.xlane.f32.xlu0 %v1052
  %v1084 = vpop.xlane.xlu0 %1083
  %v1085 = vadd.f32 %v536, %v1054
  %v1086 = vadd.f32 %v538, %v1056
  %v1087 = vadd.f32 %v540, %v1058
  %v1088 = vadd.f32 %v542, %v1060
  %v1089 = vadd.f32 %v544, %v1062
  %v1090 = vadd.f32 %v546, %v1064
  %v1091 = vadd.f32 %v548, %v1066
  %v1092 = vadd.f32 %v550, %v1068
  %v1093 = vadd.f32 %v552, %v1070
  %v1094 = vadd.f32 %v554, %v1072
  %v1095 = vadd.f32 %v556, %v1074
  %v1096 = vadd.f32 %v558, %v1076
  %v1097 = vadd.f32 %v560, %v1078
  %v1098 = vadd.f32 %v562, %v1080
  %v1099 = vadd.f32 %v564, %v1082
  %v1100 = vadd.f32 %v566, %v1084
  %v1101 = vmul.f32 %v1085, 0.5
  %v1102 = vmul.f32 %v1086, 0.5
  %v1103 = vmul.f32 %v1087, 0.5
  %v1104 = vmul.f32 %v1088, 0.5
  %v1105 = vmul.f32 %v1089, 0.5
  %v1106 = vmul.f32 %v1090, 0.5
  %v1107 = vmul.f32 %v1091, 0.5
  %v1108 = vmul.f32 %v1092, 0.5
  %v1109 = vmul.f32 %v1093, 0.5
  %v1110 = vmul.f32 %v1094, 0.5
  %v1111 = vmul.f32 %v1095, 0.5
  %v1112 = vmul.f32 %v1096, 0.5
  %v1113 = vmul.f32 %v1097, 0.5
  %v1114 = vmul.f32 %v1098, 0.5
  %v1115 = vmul.f32 %v1099, 0.5
  %v1116 = vmul.f32 %v1100, 0.5
  %v1117 = vld [vmem:[%s11] sm:$0x1]
  %v1119 = vlaneseq
  %v1120 = vshrl.u32 %v1119, 7
  %v1121 = vsub.s32 0, %v1120
  %v1122 = vrot.slane %v1117, %v1121
  %v1124 = vadd.f32 %v1101, %v1122
  %v1125 = vadd.f32 %v1102, %v1122
  %v1126 = vadd.f32 %v1103, %v1122
  %v1127 = vadd.f32 %v1104, %v1122
  %v1128 = vadd.f32 %v1105, %v1122
  %v1129 = vadd.f32 %v1106, %v1122
  %v1130 = vadd.f32 %v1107, %v1122
  %v1131 = vadd.f32 %v1108, %v1122
  %v1132 = vadd.f32 %v1109, %v1122
  %v1133 = vadd.f32 %v1110, %v1122
  %v1134 = vadd.f32 %v1111, %v1122
  %v1135 = vadd.f32 %v1112, %v1122
  %v1136 = vadd.f32 %v1113, %v1122
  %v1137 = vadd.f32 %v1114, %v1122
  %v1138 = vadd.f32 %v1115, %v1122
  %v1139 = vadd.f32 %v1116, %v1122
  %v1140 = vxor.u32 %v1124, 2147483648
  %v1141 = vxor.u32 %v1125, 2147483648
  %v1142 = vxor.u32 %v1126, 2147483648
  %v1143 = vxor.u32 %v1127, 2147483648
  %v1144 = vxor.u32 %v1128, 2147483648
  %v1145 = vxor.u32 %v1129, 2147483648
  %v1146 = vxor.u32 %v1130, 2147483648
  %v1147 = vxor.u32 %v1131, 2147483648
  %v1148 = vxor.u32 %v1132, 2147483648
  %v1149 = vxor.u32 %v1133, 2147483648
  %v1150 = vxor.u32 %v1134, 2147483648
  %v1151 = vxor.u32 %v1135, 2147483648
  %v1152 = vxor.u32 %v1136, 2147483648
  %v1153 = vxor.u32 %v1137, 2147483648
  %v1154 = vxor.u32 %v1138, 2147483648
  %v1155 = vxor.u32 %v1139, 2147483648
  %v1156 = vmul.f32 %v1140, 1.442695
  %v1157 = vpow.pop %v1156
  %v1158 = vmul.f32 %v1141, 1.442695
  %v1159 = vpow.pop %v1158
  %v1160 = vmul.f32 %v1142, 1.442695
  %v1161 = vpow.pop %v1160
  %v1162 = vmul.f32 %v1143, 1.442695
  %v1163 = vpow.pop %v1162
  %v1164 = vmul.f32 %v1144, 1.442695
  %v1165 = vpow.pop %v1164
  %v1166 = vmul.f32 %v1145, 1.442695
  %v1167 = vpow.pop %v1166
  %v1168 = vmul.f32 %v1146, 1.442695
  %v1169 = vpow.pop %v1168
  %v1170 = vmul.f32 %v1147, 1.442695
  %v1171 = vpow.pop %v1170
  %v1172 = vmul.f32 %v1148, 1.442695
  %v1173 = vpow.pop %v1172
  %v1174 = vmul.f32 %v1149, 1.442695
  %v1175 = vpow.pop %v1174
  %v1176 = vmul.f32 %v1150, 1.442695
  %v1177 = vpow.pop %v1176
  %v1178 = vmul.f32 %v1151, 1.442695
  %v1179 = vpow.pop %v1178
  %v1180 = vmul.f32 %v1152, 1.442695
  %v1181 = vpow.pop %v1180
  %v1182 = vmul.f32 %v1153, 1.442695
  %v1183 = vpow.pop %v1182
  %v1184 = vmul.f32 %v1154, 1.442695
  %v1185 = vpow.pop %v1184
  %v1186 = vmul.f32 %v1155, 1.442695
  %v1187 = vpow.pop %v1186
  %v1188 = vadd.f32 %v1157, 1.0
  %v1189 = vadd.f32 %v1159, 1.0
  %v1190 = vadd.f32 %v1161, 1.0
  %v1191 = vadd.f32 %v1163, 1.0
  %v1192 = vadd.f32 %v1165, 1.0
  %v1193 = vadd.f32 %v1167, 1.0
  %v1194 = vadd.f32 %v1169, 1.0
  %v1195 = vadd.f32 %v1171, 1.0
  %v1196 = vadd.f32 %v1173, 1.0
  %v1197 = vadd.f32 %v1175, 1.0
  %v1198 = vadd.f32 %v1177, 1.0
  %v1199 = vadd.f32 %v1179, 1.0
  %v1200 = vadd.f32 %v1181, 1.0
  %v1201 = vadd.f32 %v1183, 1.0
  %v1202 = vadd.f32 %v1185, 1.0
  %v1203 = vadd.f32 %v1187, 1.0
  %v1204 = vrcp.pop %v1188
  %v1205 = vmul.f32 1.0, %v1204
  %v1206 = vrcp.pop %v1189
  %v1207 = vmul.f32 1.0, %v1206
  %v1208 = vrcp.pop %v1190
  %v1209 = vmul.f32 1.0, %v1208
  %v1210 = vrcp.pop %v1191
  %v1211 = vmul.f32 1.0, %v1210
  %v1212 = vrcp.pop %v1192
  %v1213 = vmul.f32 1.0, %v1212
  %v1214 = vrcp.pop %v1193
  %v1215 = vmul.f32 1.0, %v1214
  %v1216 = vrcp.pop %v1194
  %v1217 = vmul.f32 1.0, %v1216
  %v1218 = vrcp.pop %v1195
  %v1219 = vmul.f32 1.0, %v1218
  %v1220 = vrcp.pop %v1196
  %v1221 = vmul.f32 1.0, %v1220
  %v1222 = vrcp.pop %v1197
  %v1223 = vmul.f32 1.0, %v1222
  %v1224 = vrcp.pop %v1198
  %v1225 = vmul.f32 1.0, %v1224
  %v1226 = vrcp.pop %v1199
  %v1227 = vmul.f32 1.0, %v1226
  %v1228 = vrcp.pop %v1200
  %v1229 = vmul.f32 1.0, %v1228
  %v1230 = vrcp.pop %v1201
  %v1231 = vmul.f32 1.0, %v1230
  %v1232 = vrcp.pop %v1202
  %v1233 = vmul.f32 1.0, %v1232
  %v1234 = vrcp.pop %v1203
  %v1235 = vmul.f32 1.0, %v1234
  %1236 = vst [vmem:[%s12] sm:$0xff] %v1205
  %1237 = vst [vmem:[%s12 + $0x8] sm:$0xff] %v1207
  %1238 = vst [vmem:[%s12 + $0x10] sm:$0xff] %v1209
  %1239 = vst [vmem:[%s12 + $0x18] sm:$0xff] %v1211
  %1240 = vst [vmem:[%s12 + $0x20] sm:$0xff] %v1213
  %1241 = vst [vmem:[%s12 + $0x28] sm:$0xff] %v1215
  %1242 = vst [vmem:[%s12 + $0x30] sm:$0xff] %v1217
  %1243 = vst [vmem:[%s12 + $0x38] sm:$0xff] %v1219
  %1244 = vst [vmem:[%s12 + $0x40] sm:$0xff] %v1221
  %1245 = vst [vmem:[%s12 + $0x48] sm:$0xff] %v1223
  %1246 = vst [vmem:[%s12 + $0x50] sm:$0xff] %v1225
  %1247 = vst [vmem:[%s12 + $0x58] sm:$0xff] %v1227
  %1248 = vst [vmem:[%s12 + $0x60] sm:$0xff] %v1229
  %1249 = vst [vmem:[%s12 + $0x68] sm:$0xff] %v1231
  %1250 = vst [vmem:[%s12 + $0x70] sm:$0xff] %v1233
  %1251 = vst [vmem:[%s12 + $0x78] sm:$0xff] %v1235
  // Predicated region
  $region50: #{_lambda_.5} parent=0 // pred_check
    _
  $region51: #{_lambda_.5} parent=0 // pred_check_branch
    %1253 = sbr.rel (0) target = $region53
  $region52: #{_lambda_.5} parent=0 // pred_region
    _
  $region53: #{_lambda_.5} parent=0 // pred_fallthru
    _
  // Predicated region
  $region54: #{_lambda_.5} parent=0 // pred_check
    _
  $region55: #{_lambda_.5} parent=0 // pred_check_branch
    %1255 = sbr.rel (0) target = $region57
  $region56: #{_lambda_.5} parent=0 // pred_region
    _
  $region57: #{_lambda_.5} parent=0 // pred_fallthru
    _

// kernel: _lambda_.4
$region0: #{_lambda_.4}
  #allocation0 [shape = 'u32[]', space=smem, size = 0x4, offset = 0x4, fixed_abs, tag = 'smem constant byte address 0x4 - core index']
  #allocation1 [shape = 'u32[144,128]{1,0:T(1,128)}', space=vmem, size = 0x12000, scoped, tag = 'internal scratch']
  #allocation2 [shape = 'f32[128,128]{1,0:T(8,128)}', space=vmem, size = 0x10000, scoped, tag = 'scratch operand']
  %s0 = inlined_call_operand.vmem [shape: bf16[256,128], index: 0, kind: input, shape index: {}]
  %s1 = inlined_call_operand.vmem [shape: bf16[2,128,128], index: 1, kind: input, shape index: {}]
  %s2 = inlined_call_operand.vmem [shape: f32[2,1,128], index: 2, kind: input, shape index: {}]
  %s3 = inlined_call_operand.vmem [shape: f32[2,1,128], index: 3, kind: input, shape index: {}]
  %s4 = inlined_call_operand.vmem [shape: f32[2,1,128], index: 4, kind: input, shape index: {}]
  %s5 = inlined_call_operand.vmem [shape: bf16[2,128,256], index: 5, kind: input, shape index: {}]
  %s6 = inlined_call_operand.vmem [shape: f32[2,1,256], index: 6, kind: input, shape index: {}]
  %s7 = inlined_call_operand.vmem [shape: bf16[2,256,128], index: 7, kind: input, shape index: {}]
  %s8 = inlined_call_operand.vmem [shape: f32[2,1,128], index: 8, kind: input, shape index: {}]
  %s9 = inlined_call_operand.vmem [shape: f32[2,1,128], index: 9, kind: input, shape index: {}]
  %s10 = inlined_call_operand.vmem [shape: f32[2,1,128], index: 10, kind: input, shape index: {}]
  %s11 = inlined_call_operand.vmem [shape: bf16[256,128], index: 11, kind: output, shape index: {}]
  %s12 = sld [smem:[#allocation0]]
  $region85: #{_lambda_.4} parent=0
    _
  %s14 = ssub.s32 1, %s12
  %s15 = scalar_select 0, %s14, %s12
  loop: start=0, step=1, limit=6
  $region2: #{_lambda_.4} parent=0 // loop_pre_header
    _
  $region3: #{_lambda_.4} parent=0 // loop_header
    %s17 = sphi 0, %s21
    %p18 = scmp.ge.s32.totalorder %s17, 6
    %s24 = sphi 0, %s36
    %s25 = sphi 0, %s32
    %s26 = sphi 0, %s24
    %s27 = sphi 0, %s25
    %s28 = sphi 0, %s26
    %s29 = sphi 0, %s27
    %s39 = sphi 0, %s41
    %s42 = sphi 0, %s39
    %s43 = sphi 0, %s42
    %s59 = sphi 0, %s43
    %s65 = sphi 0, %s67
    %s68 = sphi 0, %s65
    %s69 = sphi 0, %s68
    %s85 = sphi 0, %s69
    %s91 = sphi 0, %s93
    %s94 = sphi 0, %s91
    %s95 = sphi 0, %s94
    %s111 = sphi 0, %s95
    %s117 = sphi 0, %s119
    %s120 = sphi 0, %s117
    %s121 = sphi 0, %s120
    %s137 = sphi 0, %s121
    %s143 = sphi 0, %s145
    %s146 = sphi 0, %s143
    %s147 = sphi 0, %s146
    %s163 = sphi 0, %s147
    %s169 = sphi 0, %s171
    %s172 = sphi 0, %s169
    %s173 = sphi 0, %s172
    %s189 = sphi 0, %s173
    %s195 = sphi 0, %s197
    %s198 = sphi 0, %s195
    %s199 = sphi 0, %s198
    %s215 = sphi 0, %s199
    %s221 = sphi 0, %s223
    %s224 = sphi 0, %s221
    %s225 = sphi 0, %s224
    %s241 = sphi 0, %s225
    %s247 = sphi 0, %s249
    %s250 = sphi 0, %s247
    %s251 = sphi 0, %s250
    %s267 = sphi 0, %s251
    %s273 = sphi 0, %s275
    %s276 = sphi 0, %s273
    %s277 = sphi 0, %s276
    %s293 = sphi 0, %s277
    %s299 = sphi 0, %s301
    %s302 = sphi 0, %s299
    %s303 = sphi 0, %s302
    %s319 = sphi 0, %s303
    %s325 = sphi 0, %s327
    %s328 = sphi 0, %s325
    %s329 = sphi 0, %s328
    %s345 = sphi 0, %s329
  $region4: #{_lambda_.4} parent=0 // loop_header_branch
    %20 = sbr.rel (%p18) target = $region8
  $region5: #{_lambda_.4} parent=0 // loop_body
    %s22 = ssub.s32 %s17, 1
    %s23 = ssub.s32 %s17, 2
    %s30 = sadd.s32 1, %s25
    %p31 = scmp.ge.s32.totalorder %s30, 2
    %s32 = scalar_select %p31, 0, %s30
    %s33 = sadd.s32 1, %s24
    %s34 = scalar_select %p31, %s33, %s24
    %p35 = scmp.ge.s32.totalorder %s34, 2
    %s36 = scalar_select %p35, 0, %s34
    %s37 = ssub.s32 %s24, %s36
    %p38 = scmp.eq.s32.totalorder %s37, 0
    %s40 = sadd.s32 %s39, 1
    %s41 = scalar_select %p38, %s39, %s40
    %p44 = pneg %p38
    %p45 = scmp.eq.s32.totalorder %s17, 3
    %p46 = por %p44, %p45
    %p47 = scmp.ne.s32.totalorder %s39, %s42
    %p48 = scmp.eq.s32.totalorder %s17, 0
    %p49 = por %p47, %p48
    %p50 = scmp.ne.s32.totalorder %s39, %s42
    %p51 = scmp.eq.s32.totalorder %s22, 3
    %p52 = por %p50, %p51
    %p53 = scmp.ne.s32.totalorder %s42, %s43
    %p54 = scmp.eq.s32.totalorder %s22, 0
    %p55 = por %p53, %p54
    %p56 = scmp.ne.s32.totalorder %s42, %s43
    %p57 = scmp.eq.s32.totalorder %s23, 3
    %p58 = por %p56, %p57
    %p60 = scmp.ne.s32.totalorder %s43, %s59
    %p61 = scmp.eq.s32.totalorder %s23, 0
    %p62 = por %p60, %p61
    %s63 = ssub.s32 %s25, %s32
    %p64 = scmp.eq.s32.totalorder %s63, 0
    %s66 = sadd.s32 %s65, 1
    %s67 = scalar_select %p64, %s65, %s66
    %p70 = pneg %p64
    %p71 = scmp.eq.s32.totalorder %s17, 3
    %p72 = por %p70, %p71
    %p73 = scmp.ne.s32.totalorder %s65, %s68
    %p74 = scmp.eq.s32.totalorder %s17, 0
    %p75 = por %p73, %p74
    %p76 = scmp.ne.s32.totalorder %s65, %s68
    %p77 = scmp.eq.s32.totalorder %s22, 3
    %p78 = por %p76, %p77
    %p79 = scmp.ne.s32.totalorder %s68, %s69
    %p80 = scmp.eq.s32.totalorder %s22, 0
    %p81 = por %p79, %p80
    %p82 = scmp.ne.s32.totalorder %s68, %s69
    %p83 = scmp.eq.s32.totalorder %s23, 3
    %p84 = por %p82, %p83
    %p86 = scmp.ne.s32.totalorder %s69, %s85
    %p87 = scmp.eq.s32.totalorder %s23, 0
    %p88 = por %p86, %p87
    %s89 = ssub.s32 %s25, %s32
    %p90 = scmp.eq.s32.totalorder %s89, 0
    %s92 = sadd.s32 %s91, 1
    %s93 = scalar_select %p90, %s91, %s92
    %p96 = pneg %p90
    %p97 = scmp.eq.s32.totalorder %s17, 3
    %p98 = por %p96, %p97
    %p99 = scmp.ne.s32.totalorder %s91, %s94
    %p100 = scmp.eq.s32.totalorder %s17, 0
    %p101 = por %p99, %p100
    %p102 = scmp.ne.s32.totalorder %s91, %s94
    %p103 = scmp.eq.s32.totalorder %s22, 3
    %p104 = por %p102, %p103
    %p105 = scmp.ne.s32.totalorder %s94, %s95
    %p106 = scmp.eq.s32.totalorder %s22, 0
    %p107 = por %p105, %p106
    %p108 = scmp.ne.s32.totalorder %s94, %s95
    %p109 = scmp.eq.s32.totalorder %s23, 3
    %p110 = por %p108, %p109
    %p112 = scmp.ne.s32.totalorder %s95, %s111
    %p113 = scmp.eq.s32.totalorder %s23, 0
    %p114 = por %p112, %p113
    %s115 = ssub.s32 %s25, %s32
    %p116 = scmp.eq.s32.totalorder %s115, 0
    %s118 = sadd.s32 %s117, 1
    %s119 = scalar_select %p116, %s117, %s118
    %p122 = pneg %p116
    %p123 = scmp.eq.s32.totalorder %s17, 3
    %p124 = por %p122, %p123
    %p125 = scmp.ne.s32.totalorder %s117, %s120
    %p126 = scmp.eq.s32.totalorder %s17, 0
    %p127 = por %p125, %p126
    %p128 = scmp.ne.s32.totalorder %s117, %s120
    %p129 = scmp.eq.s32.totalorder %s22, 3
    %p130 = por %p128, %p129
    %p131 = scmp.ne.s32.totalorder %s120, %s121
    %p132 = scmp.eq.s32.totalorder %s22, 0
    %p133 = por %p131, %p132
    %p134 = scmp.ne.s32.totalorder %s120, %s121
    %p135 = scmp.eq.s32.totalorder %s23, 3
    %p136 = por %p134, %p135
    %p138 = scmp.ne.s32.totalorder %s121, %s137
    %p139 = scmp.eq.s32.totalorder %s23, 0
    %p140 = por %p138, %p139
    %s141 = ssub.s32 %s25, %s32
    %p142 = scmp.eq.s32.totalorder %s141, 0
    %s144 = sadd.s32 %s143, 1
    %s145 = scalar_select %p142, %s143, %s144
    %p148 = pneg %p142
    %p149 = scmp.eq.s32.totalorder %s17, 3
    %p150 = por %p148, %p149
    %p151 = scmp.ne.s32.totalorder %s143, %s146
    %p152 = scmp.eq.s32.totalorder %s17, 0
    %p153 = por %p151, %p152
    %p154 = scmp.ne.s32.totalorder %s143, %s146
    %p155 = scmp.eq.s32.totalorder %s22, 3
    %p156 = por %p154, %p155
    %p157 = scmp.ne.s32.totalorder %s146, %s147
    %p158 = scmp.eq.s32.totalorder %s22, 0
    %p159 = por %p157, %p158
    %p160 = scmp.ne.s32.totalorder %s146, %s147
    %p161 = scmp.eq.s32.totalorder %s23, 3
    %p162 = por %p160, %p161
    %p164 = scmp.ne.s32.totalorder %s147, %s163
    %p165 = scmp.eq.s32.totalorder %s23, 0
    %p166 = por %p164, %p165
    %s167 = ssub.s32 %s25, %s32
    %p168 = scmp.eq.s32.totalorder %s167, 0
    %s170 = sadd.s32 %s169, 1
    %s171 = scalar_select %p168, %s169, %s170
    %p174 = pneg %p168
    %p175 = scmp.eq.s32.totalorder %s17, 3
    %p176 = por %p174, %p175
    %p177 = scmp.ne.s32.totalorder %s169, %s172
    %p178 = scmp.eq.s32.totalorder %s17, 0
    %p179 = por %p177, %p178
    %p180 = scmp.ne.s32.totalorder %s169, %s172
    %p181 = scmp.eq.s32.totalorder %s22, 3
    %p182 = por %p180, %p181
    %p183 = scmp.ne.s32.totalorder %s172, %s173
    %p184 = scmp.eq.s32.totalorder %s22, 0
    %p185 = por %p183, %p184
    %p186 = scmp.ne.s32.totalorder %s172, %s173
    %p187 = scmp.eq.s32.totalorder %s23, 3
    %p188 = por %p186, %p187
    %p190 = scmp.ne.s32.totalorder %s173, %s189
    %p191 = scmp.eq.s32.totalorder %s23, 0
    %p192 = por %p190, %p191
    %s193 = ssub.s32 %s25, %s32
    %p194 = scmp.eq.s32.totalorder %s193, 0
    %s196 = sadd.s32 %s195, 1
    %s197 = scalar_select %p194, %s195, %s196
    %p200 = pneg %p194
    %p201 = scmp.eq.s32.totalorder %s17, 3
    %p202 = por %p200, %p201
    %p203 = scmp.ne.s32.totalorder %s195, %s198
    %p204 = scmp.eq.s32.totalorder %s17, 0
    %p205 = por %p203, %p204
    %p206 = scmp.ne.s32.totalorder %s195, %s198
    %p207 = scmp.eq.s32.totalorder %s22, 3
    %p208 = por %p206, %p207
    %p209 = scmp.ne.s32.totalorder %s198, %s199
    %p210 = scmp.eq.s32.totalorder %s22, 0
    %p211 = por %p209, %p210
    %p212 = scmp.ne.s32.totalorder %s198, %s199
    %p213 = scmp.eq.s32.totalorder %s23, 3
    %p214 = por %p212, %p213
    %p216 = scmp.ne.s32.totalorder %s199, %s215
    %p217 = scmp.eq.s32.totalorder %s23, 0
    %p218 = por %p216, %p217
    %s219 = ssub.s32 %s25, %s32
    %p220 = scmp.eq.s32.totalorder %s219, 0
    %s222 = sadd.s32 %s221, 1
    %s223 = scalar_select %p220, %s221, %s222
    %p226 = pneg %p220
    %p227 = scmp.eq.s32.totalorder %s17, 3
    %p228 = por %p226, %p227
    %p229 = scmp.ne.s32.totalorder %s221, %s224
    %p230 = scmp.eq.s32.totalorder %s17, 0
    %p231 = por %p229, %p230
    %p232 = scmp.ne.s32.totalorder %s221, %s224
    %p233 = scmp.eq.s32.totalorder %s22, 3
    %p234 = por %p232, %p233
    %p235 = scmp.ne.s32.totalorder %s224, %s225
    %p236 = scmp.eq.s32.totalorder %s22, 0
    %p237 = por %p235, %p236
    %p238 = scmp.ne.s32.totalorder %s224, %s225
    %p239 = scmp.eq.s32.totalorder %s23, 3
    %p240 = por %p238, %p239
    %p242 = scmp.ne.s32.totalorder %s225, %s241
    %p243 = scmp.eq.s32.totalorder %s23, 0
    %p244 = por %p242, %p243
    %s245 = ssub.s32 %s25, %s32
    %p246 = scmp.eq.s32.totalorder %s245, 0
    %s248 = sadd.s32 %s247, 1
    %s249 = scalar_select %p246, %s247, %s248
    %p252 = pneg %p246
    %p253 = scmp.eq.s32.totalorder %s17, 3
    %p254 = por %p252, %p253
    %p255 = scmp.ne.s32.totalorder %s247, %s250
    %p256 = scmp.eq.s32.totalorder %s17, 0
    %p257 = por %p255, %p256
    %p258 = scmp.ne.s32.totalorder %s247, %s250
    %p259 = scmp.eq.s32.totalorder %s22, 3
    %p260 = por %p258, %p259
    %p261 = scmp.ne.s32.totalorder %s250, %s251
    %p262 = scmp.eq.s32.totalorder %s22, 0
    %p263 = por %p261, %p262
    %p264 = scmp.ne.s32.totalorder %s250, %s251
    %p265 = scmp.eq.s32.totalorder %s23, 3
    %p266 = por %p264, %p265
    %p268 = scmp.ne.s32.totalorder %s251, %s267
    %p269 = scmp.eq.s32.totalorder %s23, 0
    %p270 = por %p268, %p269
    %s271 = ssub.s32 %s25, %s32
    %p272 = scmp.eq.s32.totalorder %s271, 0
    %s274 = sadd.s32 %s273, 1
    %s275 = scalar_select %p272, %s273, %s274
    %p278 = pneg %p272
    %p279 = scmp.eq.s32.totalorder %s17, 3
    %p280 = por %p278, %p279
    %p281 = scmp.ne.s32.totalorder %s273, %s276
    %p282 = scmp.eq.s32.totalorder %s17, 0
    %p283 = por %p281, %p282
    %p284 = scmp.ne.s32.totalorder %s273, %s276
    %p285 = scmp.eq.s32.totalorder %s22, 3
    %p286 = por %p284, %p285
    %p287 = scmp.ne.s32.totalorder %s276, %s277
    %p288 = scmp.eq.s32.totalorder %s22, 0
    %p289 = por %p287, %p288
    %p290 = scmp.ne.s32.totalorder %s276, %s277
    %p291 = scmp.eq.s32.totalorder %s23, 3
    %p292 = por %p290, %p291
    %p294 = scmp.ne.s32.totalorder %s277, %s293
    %p295 = scmp.eq.s32.totalorder %s23, 0
    %p296 = por %p294, %p295
    %s297 = ssub.s32 %s25, %s32
    %p298 = scmp.eq.s32.totalorder %s297, 0
    %s300 = sadd.s32 %s299, 1
    %s301 = scalar_select %p298, %s299, %s300
    %p304 = pneg %p298
    %p305 = scmp.eq.s32.totalorder %s17, 3
    %p306 = por %p304, %p305
    %p307 = scmp.ne.s32.totalorder %s299, %s302
    %p308 = scmp.eq.s32.totalorder %s17, 0
    %p309 = por %p307, %p308
    %p310 = scmp.ne.s32.totalorder %s299, %s302
    %p311 = scmp.eq.s32.totalorder %s22, 3
    %p312 = por %p310, %p311
    %p313 = scmp.ne.s32.totalorder %s302, %s303
    %p314 = scmp.eq.s32.totalorder %s22, 0
    %p315 = por %p313, %p314
    %p316 = scmp.ne.s32.totalorder %s302, %s303
    %p317 = scmp.eq.s32.totalorder %s23, 3
    %p318 = por %p316, %p317
    %p320 = scmp.ne.s32.totalorder %s303, %s319
    %p321 = scmp.eq.s32.totalorder %s23, 0
    %p322 = por %p320, %p321
    %s323 = ssub.s32 %s24, %s36
    %p324 = scmp.eq.s32.totalorder %s323, 0
    %s326 = sadd.s32 %s325, 1
    %s327 = scalar_select %p324, %s325, %s326
    %p330 = pneg %p324
    %p331 = scmp.eq.s32.totalorder %s17, 3
    %p332 = por %p330, %p331
    %p333 = scmp.ne.s32.totalorder %s325, %s328
    %p334 = scmp.eq.s32.totalorder %s17, 0
    %p335 = por %p333, %p334
    %p336 = scmp.ne.s32.totalorder %s325, %s328
    %p337 = scmp.eq.s32.totalorder %s22, 3
    %p338 = por %p336, %p337
    %p339 = scmp.ne.s32.totalorder %s328, %s329
    %p340 = scmp.eq.s32.totalorder %s22, 0
    %p341 = por %p339, %p340
    %p342 = scmp.ne.s32.totalorder %s328, %s329
    %p343 = scmp.eq.s32.totalorder %s23, 3
    %p344 = por %p342, %p343
    %p346 = scmp.ne.s32.totalorder %s329, %s345
    %p347 = scmp.eq.s32.totalorder %s23, 0
    %p348 = por %p346, %p347
    %p349 = scmp.le.s32.totalorder 1, %s17
    %p350 = scmp.lt.s32.totalorder %s17, 5
    %p351 = pnand %p349, %p350
    %p352 = pneg %p351
    // Predicated region
    $region9: #{_lambda_.4} parent=5 // pred_check
      _
    $region10: #{_lambda_.4} parent=5 // pred_check_branch
      %354 = sbr.rel (%p351) target = $region12
    $region11: #{_lambda_.4} parent=5 // pred_region
      %s355 = ssub.s32 %s17, 1
    $region12: #{_lambda_.4} parent=5 // pred_fallthru
      _
    %p356 = scmp.lt.s32.totalorder %s17, 4
    // Predicated region
    $region13: #{_lambda_.4} parent=5 // pred_check
      %p357 = pneg %p356
    $region14: #{_lambda_.4} parent=5 // pred_check_branch
      %359 = sbr.rel (%p357) target = $region16
    $region15: #{_lambda_.4} parent=5 // pred_region
      // Predicated region
      $region17: #{_lambda_.4} parent=15 // pred_check
        %p360 = pneg %p49
      $region18: #{_lambda_.4} parent=15 // pred_check_branch
        %362 = sbr.rel (%p360) target = $region20
      $region19: #{_lambda_.4} parent=15 // pred_region
        %s363 = smul.u32 16, %s24
        %p364 = scmp.lt.s32.totalorder %s363, 31
        %s365 = scalar_select %p364, %s363, 31
        %s366 = smul.addr %s365, 4
        %s367 = scalar_lea.vmem %s0, %s366
        %s368 = smul.u32 16, %s24
      $region20: #{_lambda_.4} parent=15 // pred_fallthru
        _
      // Predicated region
      $region21: #{_lambda_.4} parent=15 // pred_check
        %p369 = pneg %p75
      $region22: #{_lambda_.4} parent=15 // pred_check_branch
        %371 = sbr.rel (%p369) target = $region24
      $region23: #{_lambda_.4} parent=15 // pred_region
        %p372 = scmp.lt.s32.totalorder %s25, 1
        %s373 = scalar_select %p372, %s25, 1
        %s374 = smul.addr %s373, 16
        %s375 = smul.addr %s374, 4
        %s376 = scalar_lea.vmem %s1, %s375
      $region24: #{_lambda_.4} parent=15 // pred_fallthru
        _
      // Predicated region
      $region25: #{_lambda_.4} parent=15 // pred_check
        %p377 = pneg %p101
      $region26: #{_lambda_.4} parent=15 // pred_check_branch
        %379 = sbr.rel (%p377) target = $region28
      $region27: #{_lambda_.4} parent=15 // pred_region
        %p380 = scmp.lt.s32.totalorder %s25, 1
        %s381 = scalar_select %p380, %s25, 1
        %s382 = scalar_lea.vmem %s2, %s381
      $region28: #{_lambda_.4} parent=15 // pred_fallthru
        _
      // Predicated region
      $region29: #{_lambda_.4} parent=15 // pred_check
        %p383 = pneg %p127
      $region30: #{_lambda_.4} parent=15 // pred_check_branch
        %385 = sbr.rel (%p383) target = $region32
      $region31: #{_lambda_.4} parent=15 // pred_region
        %p386 = scmp.lt.s32.totalorder %s25, 1
        %s387 = scalar_select %p386, %s25, 1
        %s388 = scalar_lea.vmem %s3, %s387
      $region32: #{_lambda_.4} parent=15 // pred_fallthru
        _
      // Predicated region
      $region33: #{_lambda_.4} parent=15 // pred_check
        %p389 = pneg %p153
      $region34: #{_lambda_.4} parent=15 // pred_check_branch
        %391 = sbr.rel (%p389) target = $region36
      $region35: #{_lambda_.4} parent=15 // pred_region
        %p392 = scmp.lt.s32.totalorder %s25, 1
        %s393 = scalar_select %p392, %s25, 1
        %s394 = scalar_lea.vmem %s4, %s393
      $region36: #{_lambda_.4} parent=15 // pred_fallthru
        _
      // Predicated region
      $region37: #{_lambda_.4} parent=15 // pred_check
        %p395 = pneg %p179
      $region38: #{_lambda_.4} parent=15 // pred_check_branch
        %397 = sbr.rel (%p395) target = $region40
      $region39: #{_lambda_.4} parent=15 // pred_region
        %p398 = scmp.lt.s32.totalorder %s25, 1
        %s399 = scalar_select %p398, %s25, 1
        %s400 = smul.addr %s399, 32
        %s401 = smul.addr %s400, 4
        %s402 = scalar_lea.vmem %s5, %s401
      $region40: #{_lambda_.4} parent=15 // pred_fallthru
        _
      // Predicated region
      $region41: #{_lambda_.4} parent=15 // pred_check
        %p403 = pneg %p205
      $region42: #{_lambda_.4} parent=15 // pred_check_branch
        %405 = sbr.rel (%p403) target = $region44
      $region43: #{_lambda_.4} parent=15 // pred_region
        %p406 = scmp.lt.s32.totalorder %s25, 1
        %s407 = scalar_select %p406, %s25, 1
        %s408 = smul.addr %s407, 2
        %s409 = scalar_lea.vmem %s6, %s408
      $region44: #{_lambda_.4} parent=15 // pred_fallthru
        _
      // Predicated region
      $region45: #{_lambda_.4} parent=15 // pred_check
        %p410 = pneg %p231
      $region46: #{_lambda_.4} parent=15 // pred_check_branch
        %412 = sbr.rel (%p410) target = $region48
      $region47: #{_lambda_.4} parent=15 // pred_region
        %p413 = scmp.lt.s32.totalorder %s25, 1
        %s414 = scalar_select %p413, %s25, 1
        %s415 = smul.addr %s414, 32
        %s416 = smul.addr %s415, 4
        %s417 = scalar_lea.vmem %s7, %s416
      $region48: #{_lambda_.4} parent=15 // pred_fallthru
        _
      // Predicated region
      $region49: #{_lambda_.4} parent=15 // pred_check
        %p418 = pneg %p257
      $region50: #{_lambda_.4} parent=15 // pred_check_branch
        %420 = sbr.rel (%p418) target = $region52
      $region51: #{_lambda_.4} parent=15 // pred_region
        %p421 = scmp.lt.s32.totalorder %s25, 1
        %s422 = scalar_select %p421, %s25, 1
        %s423 = scalar_lea.vmem %s8, %s422
      $region52: #{_lambda_.4} parent=15 // pred_fallthru
        _
      // Predicated region
      $region53: #{_lambda_.4} parent=15 // pred_check
        %p424 = pneg %p283
      $region54: #{_lambda_.4} parent=15 // pred_check_branch
        %426 = sbr.rel (%p424) target = $region56
      $region55: #{_lambda_.4} parent=15 // pred_region
        %p427 = scmp.lt.s32.totalorder %s25, 1
        %s428 = scalar_select %p427, %s25, 1
        %s429 = scalar_lea.vmem %s9, %s428
      $region56: #{_lambda_.4} parent=15 // pred_fallthru
        _
      // Predicated region
      $region57: #{_lambda_.4} parent=15 // pred_check
        %p430 = pneg %p309
      $region58: #{_lambda_.4} parent=15 // pred_check_branch
        %432 = sbr.rel (%p430) target = $region60
      $region59: #{_lambda_.4} parent=15 // pred_region
        %p433 = scmp.lt.s32.totalorder %s25, 1
        %s434 = scalar_select %p433, %s25, 1
        %s435 = scalar_lea.vmem %s10, %s434
      $region60: #{_lambda_.4} parent=15 // pred_fallthru
        _
    $region16: #{_lambda_.4} parent=5 // pred_fallthru
      _
    %p436 = scmp.le.s32.totalorder 1, %s17
    %p437 = scmp.lt.s32.totalorder %s17, 5
    %p438 = pnand %p436, %p437
    %p439 = pneg %p438
    // Predicated region
    $region61: #{_lambda_.4} parent=5 // pred_check
      _
    $region62: #{_lambda_.4} parent=5 // pred_check_branch
      %441 = sbr.rel (%p438) target = $region64
    $region63: #{_lambda_.4} parent=5 // pred_region
      %s442 = ssub.s32 %s17, 1
      %s443 = smul.u32 16, %s26
      %p444 = scmp.lt.s32.totalorder %s443, 31
      %s445 = scalar_select %p444, %s443, 31
      %s446 = smul.addr %s445, 4
      %s447 = scalar_lea.vmem %s0, %s446
      %p448 = pneg %p55
      %p449 = pneg %p52
      %p450 = scmp.lt.s32.totalorder %s27, 1
      %s451 = scalar_select %p450, %s27, 1
      %s452 = smul.addr %s451, 16
      %s453 = smul.addr %s452, 4
      %s454 = scalar_lea.vmem %s1, %s453
      %p455 = pneg %p81
      %p456 = pneg %p78
      %p457 = scmp.lt.s32.totalorder %s27, 1
      %s458 = scalar_select %p457, %s27, 1
      %s459 = scalar_lea.vmem %s2, %s458
      %p460 = pneg %p107
      %p461 = pneg %p104
      %p462 = scmp.lt.s32.totalorder %s27, 1
      %s463 = scalar_select %p462, %s27, 1
      %s464 = scalar_lea.vmem %s3, %s463
      %p465 = pneg %p133
      %p466 = pneg %p130
      %p467 = scmp.lt.s32.totalorder %s27, 1
      %s468 = scalar_select %p467, %s27, 1
      %s469 = scalar_lea.vmem %s4, %s468
      %p470 = pneg %p159
      %p471 = pneg %p156
      %p472 = scmp.lt.s32.totalorder %s27, 1
      %s473 = scalar_select %p472, %s27, 1
      %s474 = smul.addr %s473, 32
      %s475 = smul.addr %s474, 4
      %s476 = scalar_lea.vmem %s5, %s475
      %p477 = pneg %p185
      %p478 = pneg %p182
      %p479 = scmp.lt.s32.totalorder %s27, 1
      %s480 = scalar_select %p479, %s27, 1
      %s481 = smul.addr %s480, 2
      %s482 = scalar_lea.vmem %s6, %s481
      %p483 = pneg %p211
      %p484 = pneg %p208
      %p485 = scmp.lt.s32.totalorder %s27, 1
      %s486 = scalar_select %p485, %s27, 1
      %s487 = smul.addr %s486, 32
      %s488 = smul.addr %s487, 4
      %s489 = scalar_lea.vmem %s7, %s488
      %p490 = pneg %p237
      %p491 = pneg %p234
      %p492 = scmp.lt.s32.totalorder %s27, 1
      %s493 = scalar_select %p492, %s27, 1
      %s494 = scalar_lea.vmem %s8, %s493
      %p495 = pneg %p263
      %p496 = pneg %p260
      %p497 = scmp.lt.s32.totalorder %s27, 1
      %s498 = scalar_select %p497, %s27, 1
      %s499 = scalar_lea.vmem %s9, %s498
      %p500 = pneg %p289
      %p501 = pneg %p286
      %p502 = scmp.lt.s32.totalorder %s27, 1
      %s503 = scalar_select %p502, %s27, 1
      %s504 = scalar_lea.vmem %s10, %s503
      %p505 = pneg %p315
      %p506 = pneg %p312
      %p507 = pneg %p341
      %p508 = pneg %p338
      %s509 = smul.u32 16, %s26
      %p510 = scmp.lt.s32.totalorder %s509, 31
      %s511 = scalar_select %p510, %s509, 31
      %s512 = smul.addr %s511, 4
      %s513 = scalar_lea.vmem %s11, %s512
      %s514 = smul.u32 16, %s26
      %p515 = scmp.lt.s32.totalorder %s514, 31
      %s516 = scalar_select %p515, %s514, 31
      %s517 = smul.addr %s516, 4
      %s518 = scalar_lea.vmem %s0, %s517
      %s519 = smul.u32 16, %s26
      %p520 = scmp.lt.s32.totalorder %s27, 1
      %s521 = scalar_select %p520, %s27, 1
      %s522 = smul.addr %s521, 16
      %s523 = smul.addr %s522, 4
      %s524 = scalar_lea.vmem %s1, %s523
      %p525 = scmp.lt.s32.totalorder %s27, 1
      %s526 = scalar_select %p525, %s27, 1
      %s527 = scalar_lea.vmem %s2, %s526
      %p528 = scmp.lt.s32.totalorder %s27, 1
      %s529 = scalar_select %p528, %s27, 1
      %s530 = scalar_lea.vmem %s3, %s529
      %p531 = scmp.lt.s32.totalorder %s27, 1
      %s532 = scalar_select %p531, %s27, 1
      %s533 = scalar_lea.vmem %s4, %s532
      %p534 = scmp.lt.s32.totalorder %s27, 1
      %s535 = scalar_select %p534, %s27, 1
      %s536 = smul.addr %s535, 32
      %s537 = smul.addr %s536, 4
      %s538 = scalar_lea.vmem %s5, %s537
      %p539 = scmp.lt.s32.totalorder %s27, 1
      %s540 = scalar_select %p539, %s27, 1
      %s541 = smul.addr %s540, 2
      %s542 = scalar_lea.vmem %s6, %s541
      %p543 = scmp.lt.s32.totalorder %s27, 1
      %s544 = scalar_select %p543, %s27, 1
      %s545 = smul.addr %s544, 32
      %s546 = smul.addr %s545, 4
      %s547 = scalar_lea.vmem %s7, %s546
      %p548 = scmp.lt.s32.totalorder %s27, 1
      %s549 = scalar_select %p548, %s27, 1
      %s550 = scalar_lea.vmem %s8, %s549
      %p551 = scmp.lt.s32.totalorder %s27, 1
      %s552 = scalar_select %p551, %s27, 1
      %s553 = scalar_lea.vmem %s9, %s552
      %p554 = scmp.lt.s32.totalorder %s27, 1
      %s555 = scalar_select %p554, %s27, 1
      %s556 = scalar_lea.vmem %s10, %s555
      %s557 = smul.u32 16, %s26
      %p558 = scmp.lt.s32.totalorder %s557, 31
      %s559 = scalar_select %p558, %s557, 31
      %s560 = smul.addr %s559, 4
      %s561 = scalar_lea.vmem %s11, %s560
      %s562 = smul.u32 16, %s26
      %p564 = scmp.eq.s32.totalorder %s27, 0
      // Predicated region
      $region65: #{_lambda_.4} parent=63 // pred_check
        %p565 = pneg %p564
      $region66: #{_lambda_.4} parent=63 // pred_check_branch
        %567 = sbr.rel (%p565) target = $region68
      $region67: #{_lambda_.4} parent=63 // pred_region
        %v568 = vld [vmem:[%s518] sm:$0xf]
        %v569 = vld [vmem:[%s518 + $0x4] sm:$0xf]
        %v570 = vld [vmem:[%s518 + $0x8] sm:$0xf]
        %v571 = vld [vmem:[%s518 + $0xc] sm:$0xf]
        %v572 = vld [vmem:[%s518 + $0x10] sm:$0xf]
        %v573 = vld [vmem:[%s518 + $0x14] sm:$0xf]
        %v574 = vld [vmem:[%s518 + $0x18] sm:$0xf]
        %v575 = vld [vmem:[%s518 + $0x1c] sm:$0xf]
        %v576 = vld [vmem:[%s518 + $0x20] sm:$0xf]
        %v577 = vld [vmem:[%s518 + $0x24] sm:$0xf]
        %v578 = vld [vmem:[%s518 + $0x28] sm:$0xf]
        %v579 = vld [vmem:[%s518 + $0x2c] sm:$0xf]
        %v580 = vld [vmem:[%s518 + $0x30] sm:$0xf]
        %v581 = vld [vmem:[%s518 + $0x34] sm:$0xf]
        %v582 = vld [vmem:[%s518 + $0x38] sm:$0xf]
        %v583 = vld [vmem:[%s518 + $0x3c] sm:$0xf]
        %v584 = vunpack.c.l.bf16 %v568
        %v585 = vunpack.c.l.bf16 %v569
        %v586 = vunpack.c.l.bf16 %v570
        %v587 = vunpack.c.l.bf16 %v571
        %v588 = vunpack.c.l.bf16 %v572
        %v589 = vunpack.c.l.bf16 %v573
        %v590 = vunpack.c.l.bf16 %v574
        %v591 = vunpack.c.l.bf16 %v575
        %v592 = vunpack.c.l.bf16 %v576
        %v593 = vunpack.c.l.bf16 %v577
        %v594 = vunpack.c.l.bf16 %v578
        %v595 = vunpack.c.l.bf16 %v579
        %v596 = vunpack.c.l.bf16 %v580
        %v597 = vunpack.c.l.bf16 %v581
        %v598 = vunpack.c.l.bf16 %v582
        %v599 = vunpack.c.l.bf16 %v583
        %600 = vst [vmem:[#allocation2] sm:$0xff] %v584
        %601 = vst [vmem:[#allocation2 + $0x8] sm:$0xff] %v585
        %602 = vst [vmem:[#allocation2 + $0x10] sm:$0xff] %v586
        %603 = vst [vmem:[#allocation2 + $0x18] sm:$0xff] %v587
        %604 = vst [vmem:[#allocation2 + $0x20] sm:$0xff] %v588
        %605 = vst [vmem:[#allocation2 + $0x28] sm:$0xff] %v589
        %606 = vst [vmem:[#allocation2 + $0x30] sm:$0xff] %v590
        %607 = vst [vmem:[#allocation2 + $0x38] sm:$0xff] %v591
        %608 = vst [vmem:[#allocation2 + $0x40] sm:$0xff] %v592
        %609 = vst [vmem:[#allocation2 + $0x48] sm:$0xff] %v593
        %610 = vst [vmem:[#allocation2 + $0x50] sm:$0xff] %v594
        %611 = vst [vmem:[#allocation2 + $0x58] sm:$0xff] %v595
        %612 = vst [vmem:[#allocation2 + $0x60] sm:$0xff] %v596
        %613 = vst [vmem:[#allocation2 + $0x68] sm:$0xff] %v597
        %614 = vst [vmem:[#allocation2 + $0x70] sm:$0xff] %v598
        %615 = vst [vmem:[#allocation2 + $0x78] sm:$0xff] %v599
      $region68: #{_lambda_.4} parent=63 // pred_fallthru
        _
      %v616 = vld [vmem:[#allocation2] sm:$0xff]
      %v617 = vld [vmem:[#allocation2 + $0x8] sm:$0xff]
      %v618 = vld [vmem:[#allocation2 + $0x10] sm:$0xff]
      %v619 = vld [vmem:[#allocation2 + $0x18] sm:$0xff]
      %v620 = vld [vmem:[#allocation2 + $0x20] sm:$0xff]
      %v621 = vld [vmem:[#allocation2 + $0x28] sm:$0xff]
      %v622 = vld [vmem:[#allocation2 + $0x30] sm:$0xff]
      %v623 = vld [vmem:[#allocation2 + $0x38] sm:$0xff]
      %v624 = vld [vmem:[#allocation2 + $0x40] sm:$0xff]
      %v625 = vld [vmem:[#allocation2 + $0x48] sm:$0xff]
      %v626 = vld [vmem:[#allocation2 + $0x50] sm:$0xff]
      %v627 = vld [vmem:[#allocation2 + $0x58] sm:$0xff]
      %v628 = vld [vmem:[#allocation2 + $0x60] sm:$0xff]
      %v629 = vld [vmem:[#allocation2 + $0x68] sm:$0xff]
      %v630 = vld [vmem:[#allocation2 + $0x70] sm:$0xff]
      %v631 = vld [vmem:[#allocation2 + $0x78] sm:$0xff]
      %v632 = vpack.c.bf16 %v617, %v616
      %v633 = vpack.c.bf16 %v619, %v618
      %v634 = vpack.c.bf16 %v621, %v620
      %v635 = vpack.c.bf16 %v623, %v622
      %v636 = vpack.c.bf16 %v625, %v624
      %v637 = vpack.c.bf16 %v627, %v626
      %v638 = vpack.c.bf16 %v629, %v628
      %v639 = vpack.c.bf16 %v631, %v630
      %v640 = vld [vmem:[%s524] sm:$0xf]
      %v641 = vld [vmem:[%s524 + $0x4] sm:$0xf]
      %v642 = vld [vmem:[%s524 + $0x8] sm:$0xf]
      %v643 = vld [vmem:[%s524 + $0xc] sm:$0xf]
      %v644 = vld [vmem:[%s524 + $0x10] sm:$0xf]
      %v645 = vld [vmem:[%s524 + $0x14] sm:$0xf]
      %v646 = vld [vmem:[%s524 + $0x18] sm:$0xf]
      %v647 = vld [vmem:[%s524 + $0x1c] sm:$0xf]
      %v648 = vld [vmem:[%s524 + $0x20] sm:$0xf]
      %v649 = vld [vmem:[%s524 + $0x24] sm:$0xf]
      %v650 = vld [vmem:[%s524 + $0x28] sm:$0xf]
      %v651 = vld [vmem:[%s524 + $0x2c] sm:$0xf]
      %v652 = vld [vmem:[%s524 + $0x30] sm:$0xf]
      %v653 = vld [vmem:[%s524 + $0x34] sm:$0xf]
      %v654 = vld [vmem:[%s524 + $0x38] sm:$0xf]
      %v655 = vld [vmem:[%s524 + $0x3c] sm:$0xf]
      %v656 = vld [vmem:[%s527] sm:$0x1]
      %v658 = vlaneseq
      %v659 = vshrl.u32 %v658, 7
      %v660 = vsub.s32 0, %v659
      %v661 = vrot.slane %v656, %v660
      %v679 = vunpack.c.l.b16 %v640
      %v680 = vunpack.c.l.b16 %v641
      %v681 = vunpack.c.l.b16 %v642
      %v682 = vunpack.c.l.b16 %v643
      %v683 = vunpack.c.l.b16 %v644
      %v684 = vunpack.c.l.b16 %v645
      %v685 = vunpack.c.l.b16 %v646
      %v686 = vunpack.c.l.b16 %v647
      %v687 = vunpack.c.l.b16 %v648
      %v688 = vunpack.c.l.b16 %v649
      %v689 = vunpack.c.l.b16 %v650
      %v690 = vunpack.c.l.b16 %v651
      %v691 = vunpack.c.l.b16 %v652
      %v692 = vunpack.c.l.b16 %v653
      %v693 = vunpack.c.l.b16 %v654
      %v694 = vunpack.c.l.b16 %v655
      %v695 = vpack.c.b16 %v680, %v679
      %v696 = vpack.c.b16 %v682, %v681
      %v697 = vpack.c.b16 %v684, %v683
      %v698 = vpack.c.b16 %v686, %v685
      %v699 = vpack.c.b16 %v688, %v687
      %v700 = vpack.c.b16 %v690, %v689
      %v701 = vpack.c.b16 %v692, %v691
      %v702 = vpack.c.b16 %v694, %v693
      %711 = vmatprep.subr.bf16.mxu0 0
      %712 = vmatpush1.bf16.msra.mxu0 %v695
      %713 = vmatprep.subr.bf16.mxu0 0
      %714 = vmatpush1.bf16.msra.mxu0 %v696
      %715 = vmatprep.subr.bf16.mxu0 0
      %716 = vmatpush1.bf16.msra.mxu0 %v697
      %717 = vmatprep.subr.bf16.mxu0 0
      %718 = vmatpush1.bf16.msra.mxu0 %v698
      %719 = vmatprep.subr.bf16.mxu0 0
      %720 = vmatpush1.bf16.msra.mxu0 %v699
      %721 = vmatprep.subr.bf16.mxu0 0
      %722 = vmatpush1.bf16.msra.mxu0 %v700
      %723 = vmatprep.subr.bf16.mxu0 0
      %724 = vmatpush1.bf16.msra.mxu0 %v701
      %725 = vmatprep.subr.bf16.mxu0 0
      %726 = vmatpush1.bf16.msra.mxu0 %v702
      %727 = vmatprep.subr.bf16.mxu0 0
      %728 = vmatpush1.bf16.msra.mxu0 0
      %729 = vmatprep.subr.bf16.mxu0 0
      %730 = vmatpush1.bf16.msra.mxu0 0
      %731 = vmatprep.subr.bf16.mxu0 0
      %732 = vmatpush1.bf16.msra.mxu0 0
      %733 = vmatprep.subr.bf16.mxu0 0
      %734 = vmatpush1.bf16.msra.mxu0 0
      %735 = vmatprep.subr.bf16.mxu0 0
      %736 = vmatpush1.bf16.msra.mxu0 0
      %737 = vmatprep.subr.bf16.mxu0 0
      %738 = vmatpush1.bf16.msra.mxu0 0
      %739 = vmatprep.subr.bf16.mxu0 0
      %740 = vmatpush1.bf16.msra.mxu0 0
      %741 = vmatprep.subr.bf16.mxu0 0
      %742 = vmatpush1.bf16.msra.mxu0 0
      %743 = vmatprep.mubr.bf16.mxu0 0
      %744 = vmatmul.mubr.bf16.gmra.mrb[0].mxu0 %v632
      %v745 = vpop.f32.mrb[0].mxu0
      %v746 = vadd.f32 %v661, %v745
      %v747 = vpop.f32.mrb[0].mxu0
      %v748 = vpop.f32.mrb[0].mxu0
      %v749 = vadd.f32 %v661, %v748
      %v750 = vpop.f32.mrb[0].mxu0
      %751 = vmatprep.mubr.bf16.mxu0 0
      %752 = vmatmul.mubr.bf16.gmra.mrb[0].mxu0 %v633
      %v753 = vpop.f32.mrb[0].mxu0
      %v754 = vadd.f32 %v661, %v753
      %v755 = vpop.f32.mrb[0].mxu0
      %v756 = vpop.f32.mrb[0].mxu0
      %v757 = vadd.f32 %v661, %v756
      %v758 = vpop.f32.mrb[0].mxu0
      %759 = vmatprep.mubr.bf16.mxu0 0
      %760 = vmatmul.mubr.bf16.gmra.mrb[0].mxu0 %v634
      %v761 = vpop.f32.mrb[0].mxu0
      %v762 = vadd.f32 %v661, %v761
      %v763 = vpop.f32.mrb[0].mxu0
      %v764 = vpop.f32.mrb[0].mxu0
      %v765 = vadd.f32 %v661, %v764
      %v766 = vpop.f32.mrb[0].mxu0
      %767 = vmatprep.mubr.bf16.mxu0 0
      %768 = vmatmul.mubr.bf16.gmra.mrb[0].mxu0 %v635
      %v769 = vpop.f32.mrb[0].mxu0
      %v770 = vadd.f32 %v661, %v769
      %v771 = vpop.f32.mrb[0].mxu0
      %v772 = vpop.f32.mrb[0].mxu0
      %v773 = vadd.f32 %v661, %v772
      %v774 = vpop.f32.mrb[0].mxu0
      %775 = vmatprep.mubr.bf16.mxu0 0
      %776 = vmatmul.mubr.bf16.gmra.mrb[0].mxu0 %v636
      %v777 = vpop.f32.mrb[0].mxu0
      %v778 = vadd.f32 %v661, %v777
      %v779 = vpop.f32.mrb[0].mxu0
      %v780 = vpop.f32.mrb[0].mxu0
      %v781 = vadd.f32 %v661, %v780
      %v782 = vpop.f32.mrb[0].mxu0
      %783 = vmatprep.mubr.bf16.mxu0 0
      %784 = vmatmul.mubr.bf16.gmra.mrb[0].mxu0 %v637
      %v785 = vpop.f32.mrb[0].mxu0
      %v786 = vadd.f32 %v661, %v785
      %v787 = vpop.f32.mrb[0].mxu0
      %v788 = vpop.f32.mrb[0].mxu0
      %v789 = vadd.f32 %v661, %v788
      %v790 = vpop.f32.mrb[0].mxu0
      %791 = vmatprep.mubr.bf16.mxu0 0
      %792 = vmatmul.mubr.bf16.gmra.mrb[0].mxu0 %v638
      %v793 = vpop.f32.mrb[0].mxu0
      %v794 = vadd.f32 %v661, %v793
      %v795 = vpop.f32.mrb[0].mxu0
      %v796 = vpop.f32.mrb[0].mxu0
      %v797 = vadd.f32 %v661, %v796
      %v798 = vpop.f32.mrb[0].mxu0
      %799 = vmatprep.mubr.bf16.mxu0 0
      %800 = vmatmul.mubr.bf16.gmra.mrb[0].mxu0 %v639
      %v801 = vpop.f32.mrb[0].mxu0
      %v802 = vadd.f32 %v661, %v801
      %v803 = vpop.f32.mrb[0].mxu0
      %v804 = vpop.f32.mrb[0].mxu0
      %v805 = vadd.f32 %v661, %v804
      %v806 = vpop.f32.mrb[0].mxu0
      %807 = vdwg.mxu0
      %v808 = vadd.f32 %v616, %v746
      %v809 = vadd.f32 %v617, %v749
      %v810 = vadd.f32 %v618, %v754
      %v811 = vadd.f32 %v619, %v757
      %v812 = vadd.f32 %v620, %v762
      %v813 = vadd.f32 %v621, %v765
      %v814 = vadd.f32 %v622, %v770
      %v815 = vadd.f32 %v623, %v773
      %v816 = vadd.f32 %v624, %v778
      %v817 = vadd.f32 %v625, %v781
      %v818 = vadd.f32 %v626, %v786
      %v819 = vadd.f32 %v627, %v789
      %v820 = vadd.f32 %v628, %v794
      %v821 = vadd.f32 %v629, %v797
      %v822 = vadd.f32 %v630, %v802
      %v823 = vadd.f32 %v631, %v805
      %v824 = vld [vmem:[%s530] sm:$0x1]
      %v825 = vld [vmem:[%s533] sm:$0x1]
      %826 = vadd.xlane.f32.xlu0 %v808
      %v827 = vpop.xlane.xlu0 %826
      %828 = vadd.xlane.f32.xlu0 %v809
      %v829 = vpop.xlane.xlu0 %828
      %830 = vadd.xlane.f32.xlu0 %v810
      %v831 = vpop.xlane.xlu0 %830
      %832 = vadd.xlane.f32.xlu0 %v811
      %v833 = vpop.xlane.xlu0 %832
      %834 = vadd.xlane.f32.xlu0 %v812
      %v835 = vpop.xlane.xlu0 %834
      %836 = vadd.xlane.f32.xlu0 %v813
      %v837 = vpop.xlane.xlu0 %836
      %838 = vadd.xlane.f32.xlu0 %v814
      %v839 = vpop.xlane.xlu0 %838
      %840 = vadd.xlane.f32.xlu0 %v815
      %v841 = vpop.xlane.xlu0 %840
      %842 = vadd.xlane.f32.xlu0 %v816
      %v843 = vpop.xlane.xlu0 %842
      %844 = vadd.xlane.f32.xlu0 %v817
      %v845 = vpop.xlane.xlu0 %844
      %846 = vadd.xlane.f32.xlu0 %v818
      %v847 = vpop.xlane.xlu0 %846
      %848 = vadd.xlane.f32.xlu0 %v819
      %v849 = vpop.xlane.xlu0 %848
      %850 = vadd.xlane.f32.xlu0 %v820
      %v851 = vpop.xlane.xlu0 %850
      %852 = vadd.xlane.f32.xlu0 %v821
      %v853 = vpop.xlane.xlu0 %852
      %854 = vadd.xlane.f32.xlu0 %v822
      %v855 = vpop.xlane.xlu0 %854
      %856 = vadd.xlane.f32.xlu0 %v823
      %v857 = vpop.xlane.xlu0 %856
      %v858 = vmul.f32 %v827, 0.0078125
      %v859 = vmul.f32 %v829, 0.0078125
      %v860 = vmul.f32 %v831, 0.0078125
      %v861 = vmul.f32 %v833, 0.0078125
      %v862 = vmul.f32 %v835, 0.0078125
      %v863 = vmul.f32 %v837, 0.0078125
      %v864 = vmul.f32 %v839, 0.0078125
      %v865 = vmul.f32 %v841, 0.0078125
      %v866 = vmul.f32 %v843, 0.0078125
      %v867 = vmul.f32 %v845, 0.0078125
      %v868 = vmul.f32 %v847, 0.0078125
      %v869 = vmul.f32 %v849, 0.0078125
      %v870 = vmul.f32 %v851, 0.0078125
      %v871 = vmul.f32 %v853, 0.0078125
      %v872 = vmul.f32 %v855, 0.0078125
      %v873 = vmul.f32 %v857, 0.0078125
      %v874 = vsub.f32 %v808, %v858
      %v875 = vsub.f32 %v809, %v859
      %v876 = vsub.f32 %v810, %v860
      %v877 = vsub.f32 %v811, %v861
      %v878 = vsub.f32 %v812, %v862
      %v879 = vsub.f32 %v813, %v863
      %v880 = vsub.f32 %v814, %v864
      %v881 = vsub.f32 %v815, %v865
      %v882 = vsub.f32 %v816, %v866
      %v883 = vsub.f32 %v817, %v867
      %v884 = vsub.f32 %v818, %v868
      %v885 = vsub.f32 %v819, %v869
      %v886 = vsub.f32 %v820, %v870
      %v887 = vsub.f32 %v821, %v871
      %v888 = vsub.f32 %v822, %v872
      %v889 = vsub.f32 %v823, %v873
      %v890 = vmul.f32 %v874, %v874
      %v891 = vmul.f32 %v875, %v875
      %v892 = vmul.f32 %v876, %v876
      %v893 = vmul.f32 %v877, %v877
      %v894 = vmul.f32 %v878, %v878
      %v895 = vmul.f32 %v879, %v879
      %v896 = vmul.f32 %v880, %v880
      %v897 = vmul.f32 %v881, %v881
      %v898 = vmul.f32 %v882, %v882
      %v899 = vmul.f32 %v883, %v883
      %v900 = vmul.f32 %v884, %v884
      %v901 = vmul.f32 %v885, %v885
      %v902 = vmul.f32 %v886, %v886
      %v903 = vmul.f32 %v887, %v887
      %v904 = vmul.f32 %v888, %v888
      %v905 = vmul.f32 %v889, %v889
      %906 = vadd.xlane.f32.xlu0 %v890
      %v907 = vpop.xlane.xlu0 %906
      %908 = vadd.xlane.f32.xlu0 %v891
      %v909 = vpop.xlane.xlu0 %908
      %910 = vadd.xlane.f32.xlu0 %v892
      %v911 = vpop.xlane.xlu0 %910
      %912 = vadd.xlane.f32.xlu0 %v893
      %v913 = vpop.xlane.xlu0 %912
      %914 = vadd.xlane.f32.xlu0 %v894
      %v915 = vpop.xlane.xlu0 %914
      %916 = vadd.xlane.f32.xlu0 %v895
      %v917 = vpop.xlane.xlu0 %916
      %918 = vadd.xlane.f32.xlu0 %v896
      %v919 = vpop.xlane.xlu0 %918
      %920 = vadd.xlane.f32.xlu0 %v897
      %v921 = vpop.xlane.xlu0 %920
      %922 = vadd.xlane.f32.xlu0 %v898
      %v923 = vpop.xlane.xlu0 %922
      %924 = vadd.xlane.f32.xlu0 %v899
      %v925 = vpop.xlane.xlu0 %924
      %926 = vadd.xlane.f32.xlu0 %v900
      %v927 = vpop.xlane.xlu0 %926
      %928 = vadd.xlane.f32.xlu0 %v901
      %v929 = vpop.xlane.xlu0 %928
      %930 = vadd.xlane.f32.xlu0 %v902
      %v931 = vpop.xlane.xlu0 %930
      %932 = vadd.xlane.f32.xlu0 %v903
      %v933 = vpop.xlane.xlu0 %932
      %934 = vadd.xlane.f32.xlu0 %v904
      %v935 = vpop.xlane.xlu0 %934
      %936 = vadd.xlane.f32.xlu0 %v905
      %v937 = vpop.xlane.xlu0 %936
      %v938 = vmul.f32 %v907, 0.0078125
      %v939 = vmul.f32 %v909, 0.0078125
      %v940 = vmul.f32 %v911, 0.0078125
      %v941 = vmul.f32 %v913, 0.0078125
      %v942 = vmul.f32 %v915, 0.0078125
      %v943 = vmul.f32 %v917, 0.0078125
      %v944 = vmul.f32 %v919, 0.0078125
      %v945 = vmul.f32 %v921, 0.0078125
      %v946 = vmul.f32 %v923, 0.0078125
      %v947 = vmul.f32 %v925, 0.0078125
      %v948 = vmul.f32 %v927, 0.0078125
      %v949 = vmul.f32 %v929, 0.0078125
      %v950 = vmul.f32 %v931, 0.0078125
      %v951 = vmul.f32 %v933, 0.0078125
      %v952 = vmul.f32 %v935, 0.0078125
      %v953 = vmul.f32 %v937, 0.0078125
      %v954 = vadd.f32 %v938, 1e-05
      %v955 = vadd.f32 %v939, 1e-05
      %v956 = vadd.f32 %v940, 1e-05
      %v957 = vadd.f32 %v941, 1e-05
      %v958 = vadd.f32 %v942, 1e-05
      %v959 = vadd.f32 %v943, 1e-05
      %v960 = vadd.f32 %v944, 1e-05
      %v961 = vadd.f32 %v945, 1e-05
      %v962 = vadd.f32 %v946, 1e-05
      %v963 = vadd.f32 %v947, 1e-05
      %v964 = vadd.f32 %v948, 1e-05
      %v965 = vadd.f32 %v949, 1e-05
      %v966 = vadd.f32 %v950, 1e-05
      %v967 = vadd.f32 %v951, 1e-05
      %v968 = vadd.f32 %v952, 1e-05
      %v969 = vadd.f32 %v953, 1e-05
      %v970 = vrsqrt.pop %v954
      %v971 = vrsqrt.pop %v955
      %v972 = vrsqrt.pop %v956
      %v973 = vrsqrt.pop %v957
      %v974 = vrsqrt.pop %v958
      %v975 = vrsqrt.pop %v959
      %v976 = vrsqrt.pop %v960
      %v977 = vrsqrt.pop %v961
      %v978 = vrsqrt.pop %v962
      %v979 = vrsqrt.pop %v963
      %v980 = vrsqrt.pop %v964
      %v981 = vrsqrt.pop %v965
      %v982 = vrsqrt.pop %v966
      %v983 = vrsqrt.pop %v967
      %v984 = vrsqrt.pop %v968
      %v985 = vrsqrt.pop %v969
      %v986 = vmul.f32 %v874, %v970
      %v987 = vmul.f32 %v875, %v971
      %v988 = vmul.f32 %v876, %v972
      %v989 = vmul.f32 %v877, %v973
      %v990 = vmul.f32 %v878, %v974
      %v991 = vmul.f32 %v879, %v975
      %v992 = vmul.f32 %v880, %v976
      %v993 = vmul.f32 %v881, %v977
      %v994 = vmul.f32 %v882, %v978
      %v995 = vmul.f32 %v883, %v979
      %v996 = vmul.f32 %v884, %v980
      %v997 = vmul.f32 %v885, %v981
      %v998 = vmul.f32 %v886, %v982
      %v999 = vmul.f32 %v887, %v983
      %v1000 = vmul.f32 %v888, %v984
      %v1001 = vmul.f32 %v889, %v985
      %v1003 = vlaneseq
      %v1004 = vshrl.u32 %v1003, 7
      %v1005 = vsub.s32 0, %v1004
      %v1006 = vrot.slane %v824, %v1005
      %v1008 = vmul.f32 %v986, %v1006
      %v1009 = vmul.f32 %v987, %v1006
      %v1010 = vmul.f32 %v988, %v1006
      %v1011 = vmul.f32 %v989, %v1006
      %v1012 = vmul.f32 %v990, %v1006
      %v1013 = vmul.f32 %v991, %v1006
      %v1014 = vmul.f32 %v992, %v1006
      %v1015 = vmul.f32 %v993, %v1006
      %v1016 = vmul.f32 %v994, %v1006
      %v1017 = vmul.f32 %v995, %v1006
      %v1018 = vmul.f32 %v996, %v1006
      %v1019 = vmul.f32 %v997, %v1006
      %v1020 = vmul.f32 %v998, %v1006
      %v1021 = vmul.f32 %v999, %v1006
      %v1022 = vmul.f32 %v1000, %v1006
      %v1023 = vmul.f32 %v1001, %v1006
      %v1025 = vlaneseq
      %v1026 = vshrl.u32 %v1025, 7
      %v1027 = vsub.s32 0, %v1026
      %v1028 = vrot.slane %v825, %v1027
      %v1030 = vadd.f32 %v1008, %v1028
      %v1031 = vadd.f32 %v1009, %v1028
      %v1032 = vadd.f32 %v1010, %v1028
      %v1033 = vadd.f32 %v1011, %v1028
      %v1034 = vadd.f32 %v1012, %v1028
      %v1035 = vadd.f32 %v1013, %v1028
      %v1036 = vadd.f32 %v1014, %v1028
      %v1037 = vadd.f32 %v1015, %v1028
      %v1038 = vadd.f32 %v1016, %v1028
      %v1039 = vadd.f32 %v1017, %v1028
      %v1040 = vadd.f32 %v1018, %v1028
      %v1041 = vadd.f32 %v1019, %v1028
      %v1042 = vadd.f32 %v1020, %v1028
      %v1043 = vadd.f32 %v1021, %v1028
      %v1044 = vadd.f32 %v1022, %v1028
      %v1045 = vadd.f32 %v1023, %v1028
      %v1046 = vpack.c.bf16 %v1031, %v1030
      %v1047 = vpack.c.bf16 %v1033, %v1032
      %v1048 = vpack.c.bf16 %v1035, %v1034
      %v1049 = vpack.c.bf16 %v1037, %v1036
      %v1050 = vpack.c.bf16 %v1039, %v1038
      %v1051 = vpack.c.bf16 %v1041, %v1040
      %v1052 = vpack.c.bf16 %v1043, %v1042
      %v1053 = vpack.c.bf16 %v1045, %v1044
      %v1054 = vld [vmem:[%s538] sm:$0xff]
      %v1055 = vld [vmem:[%s538 + $0x8] sm:$0xff]
      %v1056 = vld [vmem:[%s538 + $0x10] sm:$0xff]
      %v1057 = vld [vmem:[%s538 + $0x18] sm:$0xff]
      %v1058 = vld [vmem:[%s538 + $0x20] sm:$0xff]
      %v1059 = vld [vmem:[%s538 + $0x28] sm:$0xff]
      %v1060 = vld [vmem:[%s538 + $0x30] sm:$0xff]
      %v1061 = vld [vmem:[%s538 + $0x38] sm:$0xff]
      %v1062 = vld [vmem:[%s538 + $0x40] sm:$0xff]
      %v1063 = vld [vmem:[%s538 + $0x48] sm:$0xff]
      %v1064 = vld [vmem:[%s538 + $0x50] sm:$0xff]
      %v1065 = vld [vmem:[%s538 + $0x58] sm:$0xff]
      %v1066 = vld [vmem:[%s538 + $0x60] sm:$0xff]
      %v1067 = vld [vmem:[%s538 + $0x68] sm:$0xff]
      %v1068 = vld [vmem:[%s538 + $0x70] sm:$0xff]
      %v1069 = vld [vmem:[%s538 + $0x78] sm:$0xff]
      %v1070 = vld [vmem:[%s542] sm:$0x3]
      %v1072 = vlaneseq
      %v1073 = vshrl.u32 %v1072, 7
      %v1074 = vsub.s32 0, %v1073
      %v1075 = vrot.slane %v1070, %v1074
      %v1076 = vlaneseq
      %v1077 = vshrl.u32 %v1076, 7
      %v1078 = vsub.s32 1, %v1077
      %v1079 = vrot.slane %v1070, %v1078
      %v1098 = vunpack.c.l.b16 %v1054
      %v1099 = vunpack.c.h.b16 %v1054
      %v1100 = vunpack.c.l.b16 %v1055
      %v1101 = vunpack.c.h.b16 %v1055
      %v1102 = vunpack.c.l.b16 %v1056
      %v1103 = vunpack.c.h.b16 %v1056
      %v1104 = vunpack.c.l.b16 %v1057
      %v1105 = vunpack.c.h.b16 %v1057
      %v1106 = vunpack.c.l.b16 %v1058
      %v1107 = vunpack.c.h.b16 %v1058
      %v1108 = vunpack.c.l.b16 %v1059
      %v1109 = vunpack.c.h.b16 %v1059
      %v1110 = vunpack.c.l.b16 %v1060
      %v1111 = vunpack.c.h.b16 %v1060
      %v1112 = vunpack.c.l.b16 %v1061
      %v1113 = vunpack.c.h.b16 %v1061
      %v1114 = vunpack.c.l.b16 %v1062
      %v1115 = vunpack.c.h.b16 %v1062
      %v1116 = vunpack.c.l.b16 %v1063
      %v1117 = vunpack.c.h.b16 %v1063
      %v1118 = vunpack.c.l.b16 %v1064
      %v1119 = vunpack.c.h.b16 %v1064
      %v1120 = vunpack.c.l.b16 %v1065
      %v1121 = vunpack.c.h.b16 %v1065
      %v1122 = vunpack.c.l.b16 %v1066
      %v1123 = vunpack.c.h.b16 %v1066
      %v1124 = vunpack.c.l.b16 %v1067
      %v1125 = vunpack.c.h.b16 %v1067
      %v1126 = vunpack.c.l.b16 %v1068
      %v1127 = vunpack.c.h.b16 %v1068
      %v1128 = vunpack.c.l.b16 %v1069
      %v1129 = vunpack.c.h.b16 %v1069
      %v1130 = vpack.c.b16 %v1100, %v1098
      %v1131 = vpack.c.b16 %v1101, %v1099
      %v1132 = vpack.c.b16 %v1104, %v1102
      %v1133 = vpack.c.b16 %v1105, %v1103
      %v1134 = vpack.c.b16 %v1108, %v1106
      %v1135 = vpack.c.b16 %v1109, %v1107
      %v1136 = vpack.c.b16 %v1112, %v1110
      %v1137 = vpack.c.b16 %v1113, %v1111
      %v1138 = vpack.c.b16 %v1116, %v1114
      %v1139 = vpack.c.b16 %v1117, %v1115
      %v1140 = vpack.c.b16 %v1120, %v1118
      %v1141 = vpack.c.b16 %v1121, %v1119
      %v1142 = vpack.c.b16 %v1124, %v1122
      %v1143 = vpack.c.b16 %v1125, %v1123
      %v1144 = vpack.c.b16 %v1128, %v1126
      %v1145 = vpack.c.b16 %v1129, %v1127
      %1162 = vmatprep.subr.bf16.mxu0 %v1131
      %1163 = vmatpush1.bf16.msra.mxu0 %v1130
      %1164 = vmatprep.subr.bf16.mxu0 %v1133
      %1165 = vmatpush1.bf16.msra.mxu0 %v1132
      %1166 = vmatprep.subr.bf16.mxu0 %v1135
      %1167 = vmatpush1.bf16.msra.mxu0 %v1134
      %1168 = vmatprep.subr.bf16.mxu0 %v1137
      %1169 = vmatpush1.bf16.msra.mxu0 %v1136
      %1170 = vmatprep.subr.bf16.mxu0 %v1139
      %1171 = vmatpush1.bf16.msra.mxu0 %v1138
      %1172 = vmatprep.subr.bf16.mxu0 %v1141
      %1173 = vmatpush1.bf16.msra.mxu0 %v1140
      %1174 = vmatprep.subr.bf16.mxu0 %v1143
      %1175 = vmatpush1.bf16.msra.mxu0 %v1142
      %1176 = vmatprep.subr.bf16.mxu0 %v1145
      %1177 = vmatpush1.bf16.msra.mxu0 %v1144
      %1178 = vmatprep.subr.bf16.mxu0 0
      %1179 = vmatpush1.bf16.msra.mxu0 0
      %1180 = vmatprep.subr.bf16.mxu0 0
      %1181 = vmatpush1.bf16.msra.mxu0 0
      %1182 = vmatprep.subr.bf16.mxu0 0
      %1183 = vmatpush1.bf16.msra.mxu0 0
      %1184 = vmatprep.subr.bf16.mxu0 0
      %1185 = vmatpush1.bf16.msra.mxu0 0
      %1186 = vmatprep.subr.bf16.mxu0 0
      %1187 = vmatpush1.bf16.msra.mxu0 0
      %1188 = vmatprep.subr.bf16.mxu0 0
      %1189 = vmatpush1.bf16.msra.mxu0 0
      %1190 = vmatprep.subr.bf16.mxu0 0
      %1191 = vmatpush1.bf16.msra.mxu0 0
      %1192 = vmatprep.subr.bf16.mxu0 0
      %1193 = vmatpush1.bf16.msra.mxu0 0
      %1194 = vmatprep.mubr.bf16.mxu0 0
      %1195 = vmatmul.mubr.bf16.gmra.mrb[0].mxu0 %v1046
      %v1196 = vpop.f32.mrb[0].mxu0
      %v1197 = vadd.f32 %v1075, %v1196
      %v1198 = vpop.f32.mrb[0].mxu0
      %v1199 = vadd.f32 %v1079, %v1198
      %v1200 = vpop.f32.mrb[0].mxu0
      %v1201 = vadd.f32 %v1075, %v1200
      %v1202 = vpop.f32.mrb[0].mxu0
      %v1203 = vadd.f32 %v1079, %v1202
      %1204 = vmatprep.mubr.bf16.mxu0 0
      %1205 = vmatmul.mubr.bf16.gmra.mrb[0].mxu0 %v1047
      %v1206 = vpop.f32.mrb[0].mxu0
      %v1207 = vadd.f32 %v1075, %v1206
      %v1208 = vpop.f32.mrb[0].mxu0
      %v1209 = vadd.f32 %v1079, %v1208
      %v1210 = vpop.f32.mrb[0].mxu0
      %v1211 = vadd.f32 %v1075, %v1210
      %v1212 = vpop.f32.mrb[0].mxu0
      %v1213 = vadd.f32 %v1079, %v1212
      %1214 = vmatprep.mubr.bf16.mxu0 0
      %1215 = vmatmul.mubr.bf16.gmra.mrb[0].mxu0 %v1048
      %v1216 = vpop.f32.mrb[0].mxu0
      %v1217 = vadd.f32 %v1075, %v1216
      %v1218 = vpop.f32.mrb[0].mxu0
      %v1219 = vadd.f32 %v1079, %v1218
      %v1220 = vpop.f32.mrb[0].mxu0
      %v1221 = vadd.f32 %v1075, %v1220
      %v1222 = vpop.f32.mrb[0].mxu0
      %v1223 = vadd.f32 %v1079, %v1222
      %1224 = vmatprep.mubr.bf16.mxu0 0
      %1225 = vmatmul.mubr.bf16.gmra.mrb[0].mxu0 %v1049
      %v1226 = vpop.f32.mrb[0].mxu0
      %v1227 = vadd.f32 %v1075, %v1226
      %v1228 = vpop.f32.mrb[0].mxu0
      %v1229 = vadd.f32 %v1079, %v1228
      %v1230 = vpop.f32.mrb[0].mxu0
      %v1231 = vadd.f32 %v1075, %v1230
      %v1232 = vpop.f32.mrb[0].mxu0
      %v1233 = vadd.f32 %v1079, %v1232
      %1234 = vmatprep.mubr.bf16.mxu0 0
      %1235 = vmatmul.mubr.bf16.gmra.mrb[0].mxu0 %v1050
      %v1236 = vpop.f32.mrb[0].mxu0
      %v1237 = vadd.f32 %v1075, %v1236
      %v1238 = vpop.f32.mrb[0].mxu0
      %v1239 = vadd.f32 %v1079, %v1238
      %v1240 = vpop.f32.mrb[0].mxu0
      %v1241 = vadd.f32 %v1075, %v1240
      %v1242 = vpop.f32.mrb[0].mxu0
      %v1243 = vadd.f32 %v1079, %v1242
      %1244 = vmatprep.mubr.bf16.mxu0 0
      %1245 = vmatmul.mubr.bf16.gmra.mrb[0].mxu0 %v1051
      %v1246 = vpop.f32.mrb[0].mxu0
      %v1247 = vadd.f32 %v1075, %v1246
      %v1248 = vpop.f32.mrb[0].mxu0
      %v1249 = vadd.f32 %v1079, %v1248
      %v1250 = vpop.f32.mrb[0].mxu0
      %v1251 = vadd.f32 %v1075, %v1250
      %v1252 = vpop.f32.mrb[0].mxu0
      %v1253 = vadd.f32 %v1079, %v1252
      %1254 = vmatprep.mubr.bf16.mxu0 0
      %1255 = vmatmul.mubr.bf16.gmra.mrb[0].mxu0 %v1052
      %v1256 = vpop.f32.mrb[0].mxu0
      %v1257 = vadd.f32 %v1075, %v1256
      %v1258 = vpop.f32.mrb[0].mxu0
      %v1259 = vadd.f32 %v1079, %v1258
      %v1260 = vpop.f32.mrb[0].mxu0
      %v1261 = vadd.f32 %v1075, %v1260
      %v1262 = vpop.f32.mrb[0].mxu0
      %v1263 = vadd.f32 %v1079, %v1262
      %1264 = vmatprep.mubr.bf16.mxu0 0
      %1265 = vmatmul.mubr.bf16.gmra.mrb[0].mxu0 %v1053
      %v1266 = vpop.f32.mrb[0].mxu0
      %v1267 = vadd.f32 %v1075, %v1266
      %v1268 = vpop.f32.mrb[0].mxu0
      %v1269 = vadd.f32 %v1079, %v1268
      %v1270 = vpop.f32.mrb[0].mxu0
      %v1271 = vadd.f32 %v1075, %v1270
      %v1272 = vpop.f32.mrb[0].mxu0
      %v1273 = vadd.f32 %v1079, %v1272
      %1274 = vdwg.mxu0
      %v1275 = vmax.f32 %v1197, 0.0
      %v1276 = vmax.f32 %v1199, 0.0
      %v1277 = vmax.f32 %v1201, 0.0
      %v1278 = vmax.f32 %v1203, 0.0
      %v1279 = vmax.f32 %v1207, 0.0
      %v1280 = vmax.f32 %v1209, 0.0
      %v1281 = vmax.f32 %v1211, 0.0
      %v1282 = vmax.f32 %v1213, 0.0
      %v1283 = vmax.f32 %v1217, 0.0
      %v1284 = vmax.f32 %v1219, 0.0
      %v1285 = vmax.f32 %v1221, 0.0
      %v1286 = vmax.f32 %v1223, 0.0
      %v1287 = vmax.f32 %v1227, 0.0
      %v1288 = vmax.f32 %v1229, 0.0
      %v1289 = vmax.f32 %v1231, 0.0
      %v1290 = vmax.f32 %v1233, 0.0
      %v1291 = vmax.f32 %v1237, 0.0
      %v1292 = vmax.f32 %v1239, 0.0
      %v1293 = vmax.f32 %v1241, 0.0
      %v1294 = vmax.f32 %v1243, 0.0
      %v1295 = vmax.f32 %v1247, 0.0
      %v1296 = vmax.f32 %v1249, 0.0
      %v1297 = vmax.f32 %v1251, 0.0
      %v1298 = vmax.f32 %v1253, 0.0
      %v1299 = vmax.f32 %v1257, 0.0
      %v1300 = vmax.f32 %v1259, 0.0
      %v1301 = vmax.f32 %v1261, 0.0
      %v1302 = vmax.f32 %v1263, 0.0
      %v1303 = vmax.f32 %v1267, 0.0
      %v1304 = vmax.f32 %v1269, 0.0
      %v1305 = vmax.f32 %v1271, 0.0
      %v1306 = vmax.f32 %v1273, 0.0
      %v1307 = vpack.c.bf16 %v1277, %v1275
      %v1308 = vpack.c.bf16 %v1278, %v1276
      %v1309 = vpack.c.bf16 %v1281, %v1279
      %v1310 = vpack.c.bf16 %v1282, %v1280
      %v1311 = vpack.c.bf16 %v1285, %v1283
      %v1312 = vpack.c.bf16 %v1286, %v1284
      %v1313 = vpack.c.bf16 %v1289, %v1287
      %v1314 = vpack.c.bf16 %v1290, %v1288
      %v1315 = vpack.c.bf16 %v1293, %v1291
      %v1316 = vpack.c.bf16 %v1294, %v1292
      %v1317 = vpack.c.bf16 %v1297, %v1295
      %v1318 = vpack.c.bf16 %v1298, %v1296
      %v1319 = vpack.c.bf16 %v1301, %v1299
      %v1320 = vpack.c.bf16 %v1302, %v1300
      %v1321 = vpack.c.bf16 %v1305, %v1303
      %v1322 = vpack.c.bf16 %v1306, %v1304
      %v1323 = vld [vmem:[%s547] sm:$0xf]
      %v1324 = vld [vmem:[%s547 + $0x4] sm:$0xf]
      %v1325 = vld [vmem:[%s547 + $0x8] sm:$0xf]
      %v1326 = vld [vmem:[%s547 + $0xc] sm:$0xf]
      %v1327 = vld [vmem:[%s547 + $0x10] sm:$0xf]
      %v1328 = vld [vmem:[%s547 + $0x14] sm:$0xf]
      %v1329 = vld [vmem:[%s547 + $0x18] sm:$0xf]
      %v1330 = vld [vmem:[%s547 + $0x1c] sm:$0xf]
      %v1331 = vld [vmem:[%s547 + $0x20] sm:$0xf]
      %v1332 = vld [vmem:[%s547 + $0x24] sm:$0xf]
      %v1333 = vld [vmem:[%s547 + $0x28] sm:$0xf]
      %v1334 = vld [vmem:[%s547 + $0x2c] sm:$0xf]
      %v1335 = vld [vmem:[%s547 + $0x30] sm:$0xf]
      %v1336 = vld [vmem:[%s547 + $0x34] sm:$0xf]
      %v1337 = vld [vmem:[%s547 + $0x38] sm:$0xf]
      %v1338 = vld [vmem:[%s547 + $0x3c] sm:$0xf]
      %v1339 = vld [vmem:[%s547 + $0x40] sm:$0xf]
      %v1340 = vld [vmem:[%s547 + $0x44] sm:$0xf]
      %v1341 = vld [vmem:[%s547 + $0x48] sm:$0xf]
      %v1342 = vld [vmem:[%s547 + $0x4c] sm:$0xf]
      %v1343 = vld [vmem:[%s547 + $0x50] sm:$0xf]
      %v1344 = vld [vmem:[%s547 + $0x54] sm:$0xf]
      %v1345 = vld [vmem:[%s547 + $0x58] sm:$0xf]
      %v1346 = vld [vmem:[%s547 + $0x5c] sm:$0xf]
      %v1347 = vld [vmem:[%s547 + $0x60] sm:$0xf]
      %v1348 = vld [vmem:[%s547 + $0x64] sm:$0xf]
      %v1349 = vld [vmem:[%s547 + $0x68] sm:$0xf]
      %v1350 = vld [vmem:[%s547 + $0x6c] sm:$0xf]
      %v1351 = vld [vmem:[%s547 + $0x70] sm:$0xf]
      %v1352 = vld [vmem:[%s547 + $0x74] sm:$0xf]
      %v1353 = vld [vmem:[%s547 + $0x78] sm:$0xf]
      %v1354 = vld [vmem:[%s547 + $0x7c] sm:$0xf]
      %v1355 = vld [vmem:[%s550] sm:$0x1]
      %v1357 = vlaneseq
      %v1358 = vshrl.u32 %v1357, 7
      %v1359 = vsub.s32 0, %v1358
      %v1360 = vrot.slane %v1355, %v1359
      %v1394 = vunpack.c.l.b16 %v1323
      %v1395 = vunpack.c.l.b16 %v1324
      %v1396 = vunpack.c.l.b16 %v1325
      %v1397 = vunpack.c.l.b16 %v1326
      %v1398 = vunpack.c.l.b16 %v1327
      %v1399 = vunpack.c.l.b16 %v1328
      %v1400 = vunpack.c.l.b16 %v1329
      %v1401 = vunpack.c.l.b16 %v1330
      %v1402 = vunpack.c.l.b16 %v1331
      %v1403 = vunpack.c.l.b16 %v1332
      %v1404 = vunpack.c.l.b16 %v1333
      %v1405 = vunpack.c.l.b16 %v1334
      %v1406 = vunpack.c.l.b16 %v1335
      %v1407 = vunpack.c.l.b16 %v1336
      %v1408 = vunpack.c.l.b16 %v1337
      %v1409 = vunpack.c.l.b16 %v1338
      %v1410 = vunpack.c.l.b16 %v1339
      %v1411 = vunpack.c.l.b16 %v1340
      %v1412 = vunpack.c.l.b16 %v1341
      %v1413 = vunpack.c.l.b16 %v1342
      %v1414 = vunpack.c.l.b16 %v1343
      %v1415 = vunpack.c.l.b16 %v1344
      %v1416 = vunpack.c.l.b16 %v1345
      %v1417 = vunpack.c.l.b16 %v1346
      %v1418 = vunpack.c.l.b16 %v1347
      %v1419 = vunpack.c.l.b16 %v1348
      %v1420 = vunpack.c.l.b16 %v1349
      %v1421 = vunpack.c.l.b16 %v1350
      %v1422 = vunpack.c.l.b16 %v1351
      %v1423 = vunpack.c.l.b16 %v1352
      %v1424 = vunpack.c.l.b16 %v1353
      %v1425 = vunpack.c.l.b16 %v1354
      %v1426 = vpack.c.b16 %v1395, %v1394
      %v1427 = vpack.c.b16 %v1397, %v1396
      %v1428 = vpack.c.b16 %v1399, %v1398
      %v1429 = vpack.c.b16 %v1401, %v1400
      %v1430 = vpack.c.b16 %v1403, %v1402
      %v1431 = vpack.c.b16 %v1405, %v1404
      %v1432 = vpack.c.b16 %v1407, %v1406
      %v1433 = vpack.c.b16 %v1409, %v1408
      %v1434 = vpack.c.b16 %v1411, %v1410
      %v1435 = vpack.c.b16 %v1413, %v1412
      %v1436 = vpack.c.b16 %v1415, %v1414
      %v1437 = vpack.c.b16 %v1417, %v1416
      %v1438 = vpack.c.b16 %v1419, %v1418
      %v1439 = vpack.c.b16 %v1421, %v1420
      %v1440 = vpack.c.b16 %v1423, %v1422
      %v1441 = vpack.c.b16 %v1425, %v1424
      %1458 = vmatprep.subr.bf16.mxu0 0
      %1459 = vmatpush1.bf16.msra.mxu0 %v1426
      %1460 = vmatprep.subr.bf16.mxu0 0
      %1461 = vmatpush1.bf16.msra.mxu0 %v1427
      %1462 = vmatprep.subr.bf16.mxu0 0
      %1463 = vmatpush1.bf16.msra.mxu0 %v1428
      %1464 = vmatprep.subr.bf16.mxu0 0
      %1465 = vmatpush1.bf16.msra.mxu0 %v1429
      %1466 = vmatprep.subr.bf16.mxu0 0
      %1467 = vmatpush1.bf16.msra.mxu0 %v1430
      %1468 = vmatprep.subr.bf16.mxu0 0
      %1469 = vmatpush1.bf16.msra.mxu0 %v1431
      %1470 = vmatprep.subr.bf16.mxu0 0
      %1471 = vmatpush1.bf16.msra.mxu0 %v1432
      %1472 = vmatprep.subr.bf16.mxu0 0
      %1473 = vmatpush1.bf16.msra.mxu0 %v1433
      %1474 = vmatprep.subr.bf16.mxu0 0
      %1475 = vmatpush1.bf16.msra.mxu0 %v1434
      %1476 = vmatprep.subr.bf16.mxu0 0
      %1477 = vmatpush1.bf16.msra.mxu0 %v1435
      %1478 = vmatprep.subr.bf16.mxu0 0
      %1479 = vmatpush1.bf16.msra.mxu0 %v1436
      %1480 = vmatprep.subr.bf16.mxu0 0
      %1481 = vmatpush1.bf16.msra.mxu0 %v1437
      %1482 = vmatprep.subr.bf16.mxu0 0
      %1483 = vmatpush1.bf16.msra.mxu0 %v1438
      %1484 = vmatprep.subr.bf16.mxu0 0
      %1485 = vmatpush1.bf16.msra.mxu0 %v1439
      %1486 = vmatprep.subr.bf16.mxu0 0
      %1487 = vmatpush1.bf16.msra.mxu0 %v1440
      %1488 = vmatprep.subr.bf16.mxu0 0
      %1489 = vmatpush1.bf16.msra.mxu0 %v1441
      %1490 = vmatprep.mubr.bf16.mxu0 %v1308
      %1491 = vmatmul.mubr.bf16.gmra.mrb[0].mxu0 %v1307
      %v1492 = vpop.f32.mrb[0].mxu0
      %v1493 = vadd.f32 %v1360, %v1492
      %v1494 = vpop.f32.mrb[0].mxu0
      %v1495 = vpop.f32.mrb[0].mxu0
      %v1496 = vadd.f32 %v1360, %v1495
      %v1497 = vpop.f32.mrb[0].mxu0
      %1498 = vmatprep.mubr.bf16.mxu0 %v1310
      %1499 = vmatmul.mubr.bf16.gmra.mrb[0].mxu0 %v1309
      %v1500 = vpop.f32.mrb[0].mxu0
      %v1501 = vadd.f32 %v1360, %v1500
      %v1502 = vpop.f32.mrb[0].mxu0
      %v1503 = vpop.f32.mrb[0].mxu0
      %v1504 = vadd.f32 %v1360, %v1503
      %v1505 = vpop.f32.mrb[0].mxu0
      %1506 = vmatprep.mubr.bf16.mxu0 %v1312
      %1507 = vmatmul.mubr.bf16.gmra.mrb[0].mxu0 %v1311
      %v1508 = vpop.f32.mrb[0].mxu0
      %v1509 = vadd.f32 %v1360, %v1508
      %v1510 = vpop.f32.mrb[0].mxu0
      %v1511 = vpop.f32.mrb[0].mxu0
      %v1512 = vadd.f32 %v1360, %v1511
      %v1513 = vpop.f32.mrb[0].mxu0
      %1514 = vmatprep.mubr.bf16.mxu0 %v1314
      %1515 = vmatmul.mubr.bf16.gmra.mrb[0].mxu0 %v1313
      %v1516 = vpop.f32.mrb[0].mxu0
      %v1517 = vadd.f32 %v1360, %v1516
      %v1518 = vpop.f32.mrb[0].mxu0
      %v1519 = vpop.f32.mrb[0].mxu0
      %v1520 = vadd.f32 %v1360, %v1519
      %v1521 = vpop.f32.mrb[0].mxu0
      %1522 = vmatprep.mubr.bf16.mxu0 %v1316
      %1523 = vmatmul.mubr.bf16.gmra.mrb[0].mxu0 %v1315
      %v1524 = vpop.f32.mrb[0].mxu0
      %v1525 = vadd.f32 %v1360, %v1524
      %v1526 = vpop.f32.mrb[0].mxu0
      %v1527 = vpop.f32.mrb[0].mxu0
      %v1528 = vadd.f32 %v1360, %v1527
      %v1529 = vpop.f32.mrb[0].mxu0
      %1530 = vmatprep.mubr.bf16.mxu0 %v1318
      %1531 = vmatmul.mubr.bf16.gmra.mrb[0].mxu0 %v1317
      %v1532 = vpop.f32.mrb[0].mxu0
      %v1533 = vadd.f32 %v1360, %v1532
      %v1534 = vpop.f32.mrb[0].mxu0
      %v1535 = vpop.f32.mrb[0].mxu0
      %v1536 = vadd.f32 %v1360, %v1535
      %v1537 = vpop.f32.mrb[0].mxu0
      %1538 = vmatprep.mubr.bf16.mxu0 %v1320
      %1539 = vmatmul.mubr.bf16.gmra.mrb[0].mxu0 %v1319
      %v1540 = vpop.f32.mrb[0].mxu0
      %v1541 = vadd.f32 %v1360, %v1540
      %v1542 = vpop.f32.mrb[0].mxu0
      %v1543 = vpop.f32.mrb[0].mxu0
      %v1544 = vadd.f32 %v1360, %v1543
      %v1545 = vpop.f32.mrb[0].mxu0
      %1546 = vmatprep.mubr.bf16.mxu0 %v1322
      %1547 = vmatmul.mubr.bf16.gmra.mrb[0].mxu0 %v1321
      %v1548 = vpop.f32.mrb[0].mxu0
      %v1549 = vadd.f32 %v1360, %v1548
      %v1550 = vpop.f32.mrb[0].mxu0
      %v1551 = vpop.f32.mrb[0].mxu0
      %v1552 = vadd.f32 %v1360, %v1551
      %v1553 = vpop.f32.mrb[0].mxu0
      %1554 = vdwg.mxu0
      %v1555 = vadd.f32 %v1030, %v1493
      %v1556 = vadd.f32 %v1031, %v1496
      %v1557 = vadd.f32 %v1032, %v1501
      %v1558 = vadd.f32 %v1033, %v1504
      %v1559 = vadd.f32 %v1034, %v1509
      %v1560 = vadd.f32 %v1035, %v1512
      %v1561 = vadd.f32 %v1036, %v1517
      %v1562 = vadd.f32 %v1037, %v1520
      %v1563 = vadd.f32 %v1038, %v1525
      %v1564 = vadd.f32 %v1039, %v1528
      %v1565 = vadd.f32 %v1040, %v1533
      %v1566 = vadd.f32 %v1041, %v1536
      %v1567 = vadd.f32 %v1042, %v1541
      %v1568 = vadd.f32 %v1043, %v1544
      %v1569 = vadd.f32 %v1044, %v1549
      %v1570 = vadd.f32 %v1045, %v1552
      %v1571 = vld [vmem:[%s553] sm:$0x1]
      %v1572 = vld [vmem:[%s556] sm:$0x1]
      %1573 = vadd.xlane.f32.xlu0 %v1555
      %v1574 = vpop.xlane.xlu0 %1573
      %1575 = vadd.xlane.f32.xlu0 %v1556
      %v1576 = vpop.xlane.xlu0 %1575
      %1577 = vadd.xlane.f32.xlu0 %v1557
      %v1578 = vpop.xlane.xlu0 %1577
      %1579 = vadd.xlane.f32.xlu0 %v1558
      %v1580 = vpop.xlane.xlu0 %1579
      %1581 = vadd.xlane.f32.xlu0 %v1559
      %v1582 = vpop.xlane.xlu0 %1581
      %1583 = vadd.xlane.f32.xlu0 %v1560
      %v1584 = vpop.xlane.xlu0 %1583
      %1585 = vadd.xlane.f32.xlu0 %v1561
      %v1586 = vpop.xlane.xlu0 %1585
      %1587 = vadd.xlane.f32.xlu0 %v1562
      %v1588 = vpop.xlane.xlu0 %1587
      %1589 = vadd.xlane.f32.xlu0 %v1563
      %v1590 = vpop.xlane.xlu0 %1589
      %1591 = vadd.xlane.f32.xlu0 %v1564
      %v1592 = vpop.xlane.xlu0 %1591
      %1593 = vadd.xlane.f32.xlu0 %v1565
      %v1594 = vpop.xlane.xlu0 %1593
      %1595 = vadd.xlane.f32.xlu0 %v1566
      %v1596 = vpop.xlane.xlu0 %1595
      %1597 = vadd.xlane.f32.xlu0 %v1567
      %v1598 = vpop.xlane.xlu0 %1597
      %1599 = vadd.xlane.f32.xlu0 %v1568
      %v1600 = vpop.xlane.xlu0 %1599
      %1601 = vadd.xlane.f32.xlu0 %v1569
      %v1602 = vpop.xlane.xlu0 %1601
      %1603 = vadd.xlane.f32.xlu0 %v1570
      %v1604 = vpop.xlane.xlu0 %1603
      %v1605 = vmul.f32 %v1574, 0.0078125
      %v1606 = vmul.f32 %v1576, 0.0078125
      %v1607 = vmul.f32 %v1578, 0.0078125
      %v1608 = vmul.f32 %v1580, 0.0078125
      %v1609 = vmul.f32 %v1582, 0.0078125
      %v1610 = vmul.f32 %v1584, 0.0078125
      %v1611 = vmul.f32 %v1586, 0.0078125
      %v1612 = vmul.f32 %v1588, 0.0078125
      %v1613 = vmul.f32 %v1590, 0.0078125
      %v1614 = vmul.f32 %v1592, 0.0078125
      %v1615 = vmul.f32 %v1594, 0.0078125
      %v1616 = vmul.f32 %v1596, 0.0078125
      %v1617 = vmul.f32 %v1598, 0.0078125
      %v1618 = vmul.f32 %v1600, 0.0078125
      %v1619 = vmul.f32 %v1602, 0.0078125
      %v1620 = vmul.f32 %v1604, 0.0078125
      %v1621 = vsub.f32 %v1555, %v1605
      %v1622 = vsub.f32 %v1556, %v1606
      %v1623 = vsub.f32 %v1557, %v1607
      %v1624 = vsub.f32 %v1558, %v1608
      %v1625 = vsub.f32 %v1559, %v1609
      %v1626 = vsub.f32 %v1560, %v1610
      %v1627 = vsub.f32 %v1561, %v1611
      %v1628 = vsub.f32 %v1562, %v1612
      %v1629 = vsub.f32 %v1563, %v1613
      %v1630 = vsub.f32 %v1564, %v1614
      %v1631 = vsub.f32 %v1565, %v1615
      %v1632 = vsub.f32 %v1566, %v1616
      %v1633 = vsub.f32 %v1567, %v1617
      %v1634 = vsub.f32 %v1568, %v1618
      %v1635 = vsub.f32 %v1569, %v1619
      %v1636 = vsub.f32 %v1570, %v1620
      %v1637 = vmul.f32 %v1621, %v1621
      %v1638 = vmul.f32 %v1622, %v1622
      %v1639 = vmul.f32 %v1623, %v1623
      %v1640 = vmul.f32 %v1624, %v1624
      %v1641 = vmul.f32 %v1625, %v1625
      %v1642 = vmul.f32 %v1626, %v1626
      %v1643 = vmul.f32 %v1627, %v1627
      %v1644 = vmul.f32 %v1628, %v1628
      %v1645 = vmul.f32 %v1629, %v1629
      %v1646 = vmul.f32 %v1630, %v1630
      %v1647 = vmul.f32 %v1631, %v1631
      %v1648 = vmul.f32 %v1632, %v1632
      %v1649 = vmul.f32 %v1633, %v1633
      %v1650 = vmul.f32 %v1634, %v1634
      %v1651 = vmul.f32 %v1635, %v1635
      %v1652 = vmul.f32 %v1636, %v1636
      %1653 = vadd.xlane.f32.xlu0 %v1637
      %v1654 = vpop.xlane.xlu0 %1653
      %1655 = vadd.xlane.f32.xlu0 %v1638
      %v1656 = vpop.xlane.xlu0 %1655
      %1657 = vadd.xlane.f32.xlu0 %v1639
      %v1658 = vpop.xlane.xlu0 %1657
      %1659 = vadd.xlane.f32.xlu0 %v1640
      %v1660 = vpop.xlane.xlu0 %1659
      %1661 = vadd.xlane.f32.xlu0 %v1641
      %v1662 = vpop.xlane.xlu0 %1661
      %1663 = vadd.xlane.f32.xlu0 %v1642
      %v1664 = vpop.xlane.xlu0 %1663
      %1665 = vadd.xlane.f32.xlu0 %v1643
      %v1666 = vpop.xlane.xlu0 %1665
      %1667 = vadd.xlane.f32.xlu0 %v1644
      %v1668 = vpop.xlane.xlu0 %1667
      %1669 = vadd.xlane.f32.xlu0 %v1645
      %v1670 = vpop.xlane.xlu0 %1669
      %1671 = vadd.xlane.f32.xlu0 %v1646
      %v1672 = vpop.xlane.xlu0 %1671
      %1673 = vadd.xlane.f32.xlu0 %v1647
      %v1674 = vpop.xlane.xlu0 %1673
      %1675 = vadd.xlane.f32.xlu0 %v1648
      %v1676 = vpop.xlane.xlu0 %1675
      %1677 = vadd.xlane.f32.xlu0 %v1649
      %v1678 = vpop.xlane.xlu0 %1677
      %1679 = vadd.xlane.f32.xlu0 %v1650
      %v1680 = vpop.xlane.xlu0 %1679
      %1681 = vadd.xlane.f32.xlu0 %v1651
      %v1682 = vpop.xlane.xlu0 %1681
      %1683 = vadd.xlane.f32.xlu0 %v1652
      %v1684 = vpop.xlane.xlu0 %1683
      %v1685 = vmul.f32 %v1654, 0.0078125
      %v1686 = vmul.f32 %v1656, 0.0078125
      %v1687 = vmul.f32 %v1658, 0.0078125
      %v1688 = vmul.f32 %v1660, 0.0078125
      %v1689 = vmul.f32 %v1662, 0.0078125
      %v1690 = vmul.f32 %v1664, 0.0078125
      %v1691 = vmul.f32 %v1666, 0.0078125
      %v1692 = vmul.f32 %v1668, 0.0078125
      %v1693 = vmul.f32 %v1670, 0.0078125
      %v1694 = vmul.f32 %v1672, 0.0078125
      %v1695 = vmul.f32 %v1674, 0.0078125
      %v1696 = vmul.f32 %v1676, 0.0078125
      %v1697 = vmul.f32 %v1678, 0.0078125
      %v1698 = vmul.f32 %v1680, 0.0078125
      %v1699 = vmul.f32 %v1682, 0.0078125
      %v1700 = vmul.f32 %v1684, 0.0078125
      %v1701 = vadd.f32 %v1685, 1e-05
      %v1702 = vadd.f32 %v1686, 1e-05
      %v1703 = vadd.f32 %v1687, 1e-05
      %v1704 = vadd.f32 %v1688, 1e-05
      %v1705 = vadd.f32 %v1689, 1e-05
      %v1706 = vadd.f32 %v1690, 1e-05
      %v1707 = vadd.f32 %v1691, 1e-05
      %v1708 = vadd.f32 %v1692, 1e-05
      %v1709 = vadd.f32 %v1693, 1e-05
      %v1710 = vadd.f32 %v1694, 1e-05
      %v1711 = vadd.f32 %v1695, 1e-05
      %v1712 = vadd.f32 %v1696, 1e-05
      %v1713 = vadd.f32 %v1697, 1e-05
      %v1714 = vadd.f32 %v1698, 1e-05
      %v1715 = vadd.f32 %v1699, 1e-05
      %v1716 = vadd.f32 %v1700, 1e-05
      %v1717 = vrsqrt.pop %v1701
      %v1718 = vrsqrt.pop %v1702
      %v1719 = vrsqrt.pop %v1703
      %v1720 = vrsqrt.pop %v1704
      %v1721 = vrsqrt.pop %v1705
      %v1722 = vrsqrt.pop %v1706
      %v1723 = vrsqrt.pop %v1707
      %v1724 = vrsqrt.pop %v1708
      %v1725 = vrsqrt.pop %v1709
      %v1726 = vrsqrt.pop %v1710
      %v1727 = vrsqrt.pop %v1711
      %v1728 = vrsqrt.pop %v1712
      %v1729 = vrsqrt.pop %v1713
      %v1730 = vrsqrt.pop %v1714
      %v1731 = vrsqrt.pop %v1715
      %v1732 = vrsqrt.pop %v1716
      %v1733 = vmul.f32 %v1621, %v1717
      %v1734 = vmul.f32 %v1622, %v1718
      %v1735 = vmul.f32 %v1623, %v1719
      %v1736 = vmul.f32 %v1624, %v1720
      %v1737 = vmul.f32 %v1625, %v1721
      %v1738 = vmul.f32 %v1626, %v1722
      %v1739 = vmul.f32 %v1627, %v1723
      %v1740 = vmul.f32 %v1628, %v1724
      %v1741 = vmul.f32 %v1629, %v1725
      %v1742 = vmul.f32 %v1630, %v1726
      %v1743 = vmul.f32 %v1631, %v1727
      %v1744 = vmul.f32 %v1632, %v1728
      %v1745 = vmul.f32 %v1633, %v1729
      %v1746 = vmul.f32 %v1634, %v1730
      %v1747 = vmul.f32 %v1635, %v1731
      %v1748 = vmul.f32 %v1636, %v1732
      %v1750 = vlaneseq
      %v1751 = vshrl.u32 %v1750, 7
      %v1752 = vsub.s32 0, %v1751
      %v1753 = vrot.slane %v1571, %v1752
      %v1755 = vmul.f32 %v1733, %v1753
      %v1756 = vmul.f32 %v1734, %v1753
      %v1757 = vmul.f32 %v1735, %v1753
      %v1758 = vmul.f32 %v1736, %v1753
      %v1759 = vmul.f32 %v1737, %v1753
      %v1760 = vmul.f32 %v1738, %v1753
      %v1761 = vmul.f32 %v1739, %v1753
      %v1762 = vmul.f32 %v1740, %v1753
      %v1763 = vmul.f32 %v1741, %v1753
      %v1764 = vmul.f32 %v1742, %v1753
      %v1765 = vmul.f32 %v1743, %v1753
      %v1766 = vmul.f32 %v1744, %v1753
      %v1767 = vmul.f32 %v1745, %v1753
      %v1768 = vmul.f32 %v1746, %v1753
      %v1769 = vmul.f32 %v1747, %v1753
      %v1770 = vmul.f32 %v1748, %v1753
      %v1772 = vlaneseq
      %v1773 = vshrl.u32 %v1772, 7
      %v1774 = vsub.s32 0, %v1773
      %v1775 = vrot.slane %v1572, %v1774
      %v1777 = vadd.f32 %v1755, %v1775
      %v1778 = vadd.f32 %v1756, %v1775
      %v1779 = vadd.f32 %v1757, %v1775
      %v1780 = vadd.f32 %v1758, %v1775
      %v1781 = vadd.f32 %v1759, %v1775
      %v1782 = vadd.f32 %v1760, %v1775
      %v1783 = vadd.f32 %v1761, %v1775
      %v1784 = vadd.f32 %v1762, %v1775
      %v1785 = vadd.f32 %v1763, %v1775
      %v1786 = vadd.f32 %v1764, %v1775
      %v1787 = vadd.f32 %v1765, %v1775
      %v1788 = vadd.f32 %v1766, %v1775
      %v1789 = vadd.f32 %v1767, %v1775
      %v1790 = vadd.f32 %v1768, %v1775
      %v1791 = vadd.f32 %v1769, %v1775
      %v1792 = vadd.f32 %v1770, %v1775
      %1793 = vst [vmem:[#allocation2] sm:$0xff] %v1777
      %1794 = vst [vmem:[#allocation2 + $0x8] sm:$0xff] %v1778
      %1795 = vst [vmem:[#allocation2 + $0x10] sm:$0xff] %v1779
      %1796 = vst [vmem:[#allocation2 + $0x18] sm:$0xff] %v1780
      %1797 = vst [vmem:[#allocation2 + $0x20] sm:$0xff] %v1781
      %1798 = vst [vmem:[#allocation2 + $0x28] sm:$0xff] %v1782
      %1799 = vst [vmem:[#allocation2 + $0x30] sm:$0xff] %v1783
      %1800 = vst [vmem:[#allocation2 + $0x38] sm:$0xff] %v1784
      %1801 = vst [vmem:[#allocation2 + $0x40] sm:$0xff] %v1785
      %1802 = vst [vmem:[#allocation2 + $0x48] sm:$0xff] %v1786
      %1803 = vst [vmem:[#allocation2 + $0x50] sm:$0xff] %v1787
      %1804 = vst [vmem:[#allocation2 + $0x58] sm:$0xff] %v1788
      %1805 = vst [vmem:[#allocation2 + $0x60] sm:$0xff] %v1789
      %1806 = vst [vmem:[#allocation2 + $0x68] sm:$0xff] %v1790
      %1807 = vst [vmem:[#allocation2 + $0x70] sm:$0xff] %v1791
      %1808 = vst [vmem:[#allocation2 + $0x78] sm:$0xff] %v1792
      %p1809 = scmp.eq.s32.totalorder %s27, 1
      // Predicated region
      $region69: #{_lambda_.4} parent=63 // pred_check
        %p1810 = pneg %p1809
      $region70: #{_lambda_.4} parent=63 // pred_check_branch
        %1812 = sbr.rel (%p1810) target = $region72
      $region71: #{_lambda_.4} parent=63 // pred_region
        %v1813 = vpack.c.bf16 %v1778, %v1777
        %v1814 = vpack.c.bf16 %v1780, %v1779
        %v1815 = vpack.c.bf16 %v1782, %v1781
        %v1816 = vpack.c.bf16 %v1784, %v1783
        %v1817 = vpack.c.bf16 %v1786, %v1785
        %v1818 = vpack.c.bf16 %v1788, %v1787
        %v1819 = vpack.c.bf16 %v1790, %v1789
        %v1820 = vpack.c.bf16 %v1792, %v1791
        %v1829 = vunpack.c.l.b16 %v1813
        %v1830 = vunpack.c.h.b16 %v1813
        %v1831 = vunpack.c.l.b16 %v1814
        %v1832 = vunpack.c.h.b16 %v1814
        %v1833 = vunpack.c.l.b16 %v1815
        %v1834 = vunpack.c.h.b16 %v1815
        %v1835 = vunpack.c.l.b16 %v1816
        %v1836 = vunpack.c.h.b16 %v1816
        %v1837 = vunpack.c.l.b16 %v1817
        %v1838 = vunpack.c.h.b16 %v1817
        %v1839 = vunpack.c.l.b16 %v1818
        %v1840 = vunpack.c.h.b16 %v1818
        %v1841 = vunpack.c.l.b16 %v1819
        %v1842 = vunpack.c.h.b16 %v1819
        %v1843 = vunpack.c.l.b16 %v1820
        %v1844 = vunpack.c.h.b16 %v1820
        %v1845 = vpack.c.b16 %v1829, %v1829
        %v1846 = vpack.c.b16 %v1830, %v1830
        %v1847 = vpack.c.b16 %v1831, %v1831
        %v1848 = vpack.c.b16 %v1832, %v1832
        %v1849 = vpack.c.b16 %v1833, %v1833
        %v1850 = vpack.c.b16 %v1834, %v1834
        %v1851 = vpack.c.b16 %v1835, %v1835
        %v1852 = vpack.c.b16 %v1836, %v1836
        %v1853 = vpack.c.b16 %v1837, %v1837
        %v1854 = vpack.c.b16 %v1838, %v1838
        %v1855 = vpack.c.b16 %v1839, %v1839
        %v1856 = vpack.c.b16 %v1840, %v1840
        %v1857 = vpack.c.b16 %v1841, %v1841
        %v1858 = vpack.c.b16 %v1842, %v1842
        %v1859 = vpack.c.b16 %v1843, %v1843
        %v1860 = vpack.c.b16 %v1844, %v1844
        %1877 = vst [vmem:[%s561] sm:$0xf] %v1845
        %1878 = vst [vmem:[%s561 + $0x4] sm:$0xf] %v1846
        %1879 = vst [vmem:[%s561 + $0x8] sm:$0xf] %v1847
        %1880 = vst [vmem:[%s561 + $0xc] sm:$0xf] %v1848
        %1881 = vst [vmem:[%s561 + $0x10] sm:$0xf] %v1849
        %1882 = vst [vmem:[%s561 + $0x14] sm:$0xf] %v1850
        %1883 = vst [vmem:[%s561 + $0x18] sm:$0xf] %v1851
        %1884 = vst [vmem:[%s561 + $0x1c] sm:$0xf] %v1852
        %1885 = vst [vmem:[%s561 + $0x20] sm:$0xf] %v1853
        %1886 = vst [vmem:[%s561 + $0x24] sm:$0xf] %v1854
        %1887 = vst [vmem:[%s561 + $0x28] sm:$0xf] %v1855
        %1888 = vst [vmem:[%s561 + $0x2c] sm:$0xf] %v1856
        %1889 = vst [vmem:[%s561 + $0x30] sm:$0xf] %v1857
        %1890 = vst [vmem:[%s561 + $0x34] sm:$0xf] %v1858
        %1891 = vst [vmem:[%s561 + $0x38] sm:$0xf] %v1859
        %1892 = vst [vmem:[%s561 + $0x3c] sm:$0xf] %v1860
      $region72: #{_lambda_.4} parent=63 // pred_fallthru
        _
      %s1893 = smul.u32 16, %s26
      %p1894 = scmp.lt.s32.totalorder %s1893, 31
      %s1895 = scalar_select %p1894, %s1893, 31
      %s1896 = smul.addr %s1895, 4
      %s1897 = scalar_lea.vmem %s11, %s1896
      // Predicated region
      $region73: #{_lambda_.4} parent=63 // pred_check
        %p1898 = pneg %p338
      $region74: #{_lambda_.4} parent=63 // pred_check_branch
        %1900 = sbr.rel (%p1898) target = $region76
      $region75: #{_lambda_.4} parent=63 // pred_region
        %s1901 = smul.u32 16, %s26
      $region76: #{_lambda_.4} parent=63 // pred_fallthru
        _
    $region64: #{_lambda_.4} parent=5 // pred_fallthru
      _
    %p1902 = scmp.le.s32.totalorder 2, %s17
    // Predicated region
    $region77: #{_lambda_.4} parent=5 // pred_check
      %p1903 = pneg %p1902
    $region78: #{_lambda_.4} parent=5 // pred_check_branch
      %1905 = sbr.rel (%p1903) target = $region80
    $region79: #{_lambda_.4} parent=5 // pred_region
      %s1906 = ssub.s32 %s17, 2
      // Predicated region
      $region81: #{_lambda_.4} parent=79 // pred_check
        %p1907 = pneg %p344
      $region82: #{_lambda_.4} parent=79 // pred_check_branch
        %1909 = sbr.rel (%p1907) target = $region84
      $region83: #{_lambda_.4} parent=79 // pred_region
        %s1910 = smul.u32 16, %s28
        %p1911 = scmp.lt.s32.totalorder %s1910, 31
        %s1912 = scalar_select %p1911, %s1910, 31
        %s1913 = smul.addr %s1912, 4
        %s1914 = scalar_lea.vmem %s11, %s1913
      $region84: #{_lambda_.4} parent=79 // pred_fallthru
        _
    $region80: #{_lambda_.4} parent=5 // pred_fallthru
      _
  $region6: #{_lambda_.4} parent=0 // loop_footer
    %s21 = sadd.s32 1, %s17
  $region7: #{_lambda_.4} parent=0 // loop_footer_branch
    %16 = sbr.rel target = $region3
  $region8: #{_lambda_.4} parent=0 // loop_exit
    _

</llo_original>
